<compile_context>
chip_gen: v6e
topology: v6e:2x2x1
jax: 0.10.0
libtpu: 0.0.40
codegen_flags: <defaults>
</compile_context>

<pallas_src>
import jax
import jax.numpy as jnp
from jax.experimental import pallas as pl
from jax.experimental.pallas import tpu as pltpu


def _graph_conv_kernel(x_ref, gso_t_ref, w_ref, b_ref, o_ref):
    # x_ref:     (C_in, tb, Np)   VMEM input block
    # gso_t_ref: (Np, Np)         VMEM, resident (gso_t[m, h] = gso[h, m])
    # w_ref:     (C_in, C_out)    SMEM scalars
    # b_ref:     (C_out,)         SMEM scalars
    # o_ref:     (C_out, tb, Np)  VMEM output block
    c_in, tb, np_ = x_ref.shape
    c_out = o_ref.shape[0]

    # One fused MXU matmul for all input channels:
    #   fm_all[ci*tb + t, h] = sum_m x[ci, t, m] * gso[h, m]
    x_all = x_ref[...].reshape(c_in * tb, np_)                     # layout-free merge
    fm_all = jnp.dot(x_all, gso_t_ref[...],
                     preferred_element_type=jnp.float32)           # (C_in*tb, Np)
    fm = fm_all.reshape(c_in, tb, np_)                             # layout-free split

    # C_out-outer loop: one vreg-resident (tb, Np) accumulator per output
    # channel, scalar-splat MACs over the tiny C_in contraction, then a single
    # dense slab store per channel.
    for co in range(c_out):
        acc = fm[0] * w_ref[0, co]
        for ci in range(1, c_in):
            acc = acc + fm[ci] * w_ref[ci, co]
        o_ref[co] = (acc + b_ref[co]).astype(o_ref.dtype)


def graph_conv_forward(x, gso, w, b=None, *, tb=64,
                       vmem_limit_bytes=32 * 1024 * 1024):
    """x: (B, C_in, T, N), gso: (N, N), w: (C_in, C_out), b: (C_out,) or None.

    Returns (B, T, N, C_out), matching the PyTorch GraphConv output.
    Raise `tb` (and `vmem_limit_bytes`) for large B*T on v6e; keep the VMEM
    budget under ~48 MiB on v7x."""
    B, C_in, T, N = x.shape
    C_out = w.shape[1]
    assert gso.shape == (N, N)
    BT = B * T

    # --- wrapper-side re-layouts (plain XLA) --------------------------------
    # (B, C_in, T, N) -> (C_in, B, T, N) -> (C_in, BT, N): N stays on lanes.
    x3 = jnp.transpose(x, (1, 0, 2, 3)).reshape(C_in, BT, N)
    gso_t = jnp.transpose(gso)                                     # (N, N)

    # Zero-pad N to a multiple of 128 (lane-dense loads/stores, clean MXU tiles).
    Np = ((N + 127) // 128) * 128
    if Np != N:
        x3 = jnp.pad(x3, ((0, 0), (0, 0), (0, Np - N)))
        gso_t = jnp.pad(gso_t, ((0, Np - N), (0, Np - N)))

    bias = b if b is not None else jnp.zeros((C_out,), dtype=w.dtype)

    # --- tile size along the (b, t) axis -------------------------------------
    tb = max(8, (int(tb) // 8) * 8)                                # multiple of 8
    if BT > 8:
        # keep >= 2 grid steps when possible (v7x megacore uses both cores)
        tb = min(tb, ((pl.cdiv(BT, 2) + 7) // 8) * 8)
    grid_m = pl.cdiv(BT, tb)
    bt_pad = grid_m * tb
    if bt_pad != BT:
        x3 = jnp.pad(x3, ((0, 0), (0, bt_pad - BT), (0, 0)))

    out_t = pl.pallas_call(
        _graph_conv_kernel,
        out_shape=jax.ShapeDtypeStruct((C_out, bt_pad, Np), x.dtype),
        grid_spec=pltpu.PrefetchScalarGridSpec(
            num_scalar_prefetch=0,
            grid=(grid_m,),
            in_specs=[
                pl.BlockSpec((C_in, tb, Np), lambda i: (0, i, 0)),     # x block
                pl.BlockSpec((Np, Np), lambda i: (0, 0)),              # gso^T (resident)
                pl.BlockSpec(memory_space=pltpu.MemorySpace.SMEM),     # weight scalars
                pl.BlockSpec(memory_space=pltpu.MemorySpace.SMEM),     # bias scalars
            ],
            out_specs=pl.BlockSpec((C_out, tb, Np), lambda i: (0, i, 0)),
        ),
        compiler_params=pltpu.CompilerParams(
            dimension_semantics=("parallel",),
            vmem_limit_bytes=vmem_limit_bytes),
    )(x3, gso_t, w, bias)

    # (C_out, bt_pad, Np) -> (B, T, N, C_out)
    # TODO(synk): if the consumer can take (C_out, B, T, N) directly, drop this
    # transpose — it re-streams the whole (8x-larger-than-input) output through HBM.
    out = out_t[:, :BT, :N].reshape(C_out, B, T, N)
    return jnp.transpose(out, (1, 2, 3, 0))


if __name__ == "__main__":
    key = jax.random.PRNGKey(0)
    kx, kg, kw, kb = jax.random.split(key, 4)

    B, C_in, T = 2, 4, 8
    N = 307
    C_out = 32

    x = jax.random.normal(kx, (B, C_in, T, N), dtype=jnp.float32)
    gso = jax.random.normal(kg, (N, N), dtype=jnp.float32) / jnp.sqrt(float(N))
    w = jax.random.normal(kw, (C_in, C_out), dtype=jnp.float32)
    b = 0.1 * jax.random.normal(kb, (C_out,), dtype=jnp.float32)

    out = graph_conv_forward(x, gso, w, b)
    jax.block_until_ready(out)

    # pure-JAX reference (mirrors the PyTorch forward exactly)
    xp = jnp.transpose(x, (0, 2, 3, 1))                       # (B, T, N, C_in)
    first = jnp.einsum('hi,btij->bthj', gso, xp)
    second = jnp.einsum('bthi,ij->bthj', first, w)
    ref = second + b

    assert out.shape == ref.shape, (out.shape, ref.shape)
    assert jnp.allclose(out, ref, atol=1e-2, rtol=1e-2), "mismatch vs reference"

    print("KERNEL_OK")
</pallas_src>

<mosaic_0001>
module attributes {stable_mosaic.version = 11 : i64} {
  func.func @_graph_conv_kernel(%arg0: i32, %arg1: memref<4x8x384xf32, #tpu.memory_space<vmem>>, %arg2: memref<384x384xf32, #tpu.memory_space<vmem>>, %arg3: memref<4x32xf32, #tpu.memory_space<smem>>, %arg4: memref<32xf32, #tpu.memory_space<smem>>, %arg5: memref<32x8x384xf32, #tpu.memory_space<vmem>>) attributes {dimension_semantics = [#tpu.dimension_semantics<parallel>], iteration_bounds = array<i64: 2>, scalar_prefetch = 0 : i64, scratch_operands = 0 : i64, tpu.core_type = #tpu.core_type<tc>, window_params = [{transform_indices = @transform_0, window_bounds = array<i64: 4, 8, 384>}, {pipeline_mode = #tpu.pipeline_mode<synchronous>, transform_indices = @transform_1, window_bounds = array<i64: 384, 384>}, {transform_indices = @transform_2, window_bounds = array<i64: 4, 32>}, {transform_indices = @transform_3, window_bounds = array<i64: 32>}, {transform_indices = @transform_4, window_bounds = array<i64: 32, 8, 384>}]} {
    %c0 = arith.constant 0 : index
    %c0_0 = arith.constant 0 : index
    %c0_1 = arith.constant 0 : index
    %0 = vector.load %arg1[%c0, %c0_0, %c0_1] : memref<4x8x384xf32, #tpu.memory_space<vmem>>, vector<4x8x384xf32>
    %1 = vector.shape_cast %0 : vector<4x8x384xf32> to vector<32x384xf32>
    %c0_2 = arith.constant 0 : index
    %c0_3 = arith.constant 0 : index
    %2 = vector.load %arg2[%c0_2, %c0_3] : memref<384x384xf32, #tpu.memory_space<vmem>>, vector<384x384xf32>
    %cst = arith.constant dense<0.000000e+00> : vector<32x384xf32>
    %3 = tpu.matmul %1, %2, %cst {dimension_numbers = #tpu.dot_dimension_numbers<[1], [0], [0], [1], [0, 0, 1, 1], [], []>} : vector<32x384xf32>, vector<384x384xf32>, vector<32x384xf32> -> vector<32x384xf32>
    %4 = vector.shape_cast %3 : vector<32x384xf32> to vector<4x8x384xf32>
    %5 = vector.extract_strided_slice %4 {offsets = [0, 0, 0], sizes = [1, 8, 384], strides = [1, 1, 1]} : vector<4x8x384xf32> to vector<1x8x384xf32>
    %6 = vector.shape_cast %5 : vector<1x8x384xf32> to vector<8x384xf32>
    %c0_4 = arith.constant 0 : index
    %c0_5 = arith.constant 0 : index
    %7 = memref.load %arg3[%c0_4, %c0_5] : memref<4x32xf32, #tpu.memory_space<smem>>
    %8 = vector.broadcast %7 : f32 to vector<8x384xf32>
    %9 = arith.mulf %6, %8 : vector<8x384xf32>
    %10 = vector.extract_strided_slice %4 {offsets = [1, 0, 0], sizes = [1, 8, 384], strides = [1, 1, 1]} : vector<4x8x384xf32> to vector<1x8x384xf32>
    %11 = vector.shape_cast %10 : vector<1x8x384xf32> to vector<8x384xf32>
    %c1 = arith.constant 1 : index
    %c0_6 = arith.constant 0 : index
    %12 = memref.load %arg3[%c1, %c0_6] : memref<4x32xf32, #tpu.memory_space<smem>>
    %13 = vector.broadcast %12 : f32 to vector<8x384xf32>
    %14 = arith.mulf %11, %13 : vector<8x384xf32>
    %15 = arith.addf %9, %14 : vector<8x384xf32>
    %16 = vector.extract_strided_slice %4 {offsets = [2, 0, 0], sizes = [1, 8, 384], strides = [1, 1, 1]} : vector<4x8x384xf32> to vector<1x8x384xf32>
    %17 = vector.shape_cast %16 : vector<1x8x384xf32> to vector<8x384xf32>
    %c2 = arith.constant 2 : index
    %c0_7 = arith.constant 0 : index
    %18 = memref.load %arg3[%c2, %c0_7] : memref<4x32xf32, #tpu.memory_space<smem>>
    %19 = vector.broadcast %18 : f32 to vector<8x384xf32>
    %20 = arith.mulf %17, %19 : vector<8x384xf32>
    %21 = arith.addf %15, %20 : vector<8x384xf32>
    %22 = vector.extract_strided_slice %4 {offsets = [3, 0, 0], sizes = [1, 8, 384], strides = [1, 1, 1]} : vector<4x8x384xf32> to vector<1x8x384xf32>
    %23 = vector.shape_cast %22 : vector<1x8x384xf32> to vector<8x384xf32>
    %c3 = arith.constant 3 : index
    %c0_8 = arith.constant 0 : index
    %24 = memref.load %arg3[%c3, %c0_8] : memref<4x32xf32, #tpu.memory_space<smem>>
    %25 = vector.broadcast %24 : f32 to vector<8x384xf32>
    %26 = arith.mulf %23, %25 : vector<8x384xf32>
    %27 = arith.addf %21, %26 : vector<8x384xf32>
    %c0_9 = arith.constant 0 : index
    %28 = memref.load %arg4[%c0_9] : memref<32xf32, #tpu.memory_space<smem>>
    %29 = vector.broadcast %28 : f32 to vector<8x384xf32>
    %30 = arith.addf %27, %29 : vector<8x384xf32>
    %c0_10 = arith.constant 0 : index
    %c0_11 = arith.constant 0 : index
    %c0_12 = arith.constant 0 : index
    %31 = vector.load %arg5[%c0_10, %c0_11, %c0_12] : memref<32x8x384xf32, #tpu.memory_space<vmem>>, vector<1x8x384xf32>
    %32 = vector.shape_cast %31 : vector<1x8x384xf32> to vector<8x384xf32>
    %33 = vector.shape_cast %30 : vector<8x384xf32> to vector<1x8x384xf32>
    tpu.vector_store %arg5[%c0_10, %c0_11, %c0_12], %33 {strides = array<i32>} : memref<32x8x384xf32, #tpu.memory_space<vmem>>, vector<1x8x384xf32>,
    %34 = vector.extract_strided_slice %4 {offsets = [0, 0, 0], sizes = [1, 8, 384], strides = [1, 1, 1]} : vector<4x8x384xf32> to vector<1x8x384xf32>
    %35 = vector.shape_cast %34 : vector<1x8x384xf32> to vector<8x384xf32>
    %c0_13 = arith.constant 0 : index
    %c1_14 = arith.constant 1 : index
    %36 = memref.load %arg3[%c0_13, %c1_14] : memref<4x32xf32, #tpu.memory_space<smem>>
    %37 = vector.broadcast %36 : f32 to vector<8x384xf32>
    %38 = arith.mulf %35, %37 : vector<8x384xf32>
    %39 = vector.extract_strided_slice %4 {offsets = [1, 0, 0], sizes = [1, 8, 384], strides = [1, 1, 1]} : vector<4x8x384xf32> to vector<1x8x384xf32>
    %40 = vector.shape_cast %39 : vector<1x8x384xf32> to vector<8x384xf32>
    %c1_15 = arith.constant 1 : index
    %c1_16 = arith.constant 1 : index
    %41 = memref.load %arg3[%c1_15, %c1_16] : memref<4x32xf32, #tpu.memory_space<smem>>
    %42 = vector.broadcast %41 : f32 to vector<8x384xf32>
    %43 = arith.mulf %40, %42 : vector<8x384xf32>
    %44 = arith.addf %38, %43 : vector<8x384xf32>
    %45 = vector.extract_strided_slice %4 {offsets = [2, 0, 0], sizes = [1, 8, 384], strides = [1, 1, 1]} : vector<4x8x384xf32> to vector<1x8x384xf32>
    %46 = vector.shape_cast %45 : vector<1x8x384xf32> to vector<8x384xf32>
    %c2_17 = arith.constant 2 : index
    %c1_18 = arith.constant 1 : index
    %47 = memref.load %arg3[%c2_17, %c1_18] : memref<4x32xf32, #tpu.memory_space<smem>>
    %48 = vector.broadcast %47 : f32 to vector<8x384xf32>
    %49 = arith.mulf %46, %48 : vector<8x384xf32>
    %50 = arith.addf %44, %49 : vector<8x384xf32>
    %51 = vector.extract_strided_slice %4 {offsets = [3, 0, 0], sizes = [1, 8, 384], strides = [1, 1, 1]} : vector<4x8x384xf32> to vector<1x8x384xf32>
    %52 = vector.shape_cast %51 : vector<1x8x384xf32> to vector<8x384xf32>
    %c3_19 = arith.constant 3 : index
    %c1_20 = arith.constant 1 : index
    %53 = memref.load %arg3[%c3_19, %c1_20] : memref<4x32xf32, #tpu.memory_space<smem>>
    %54 = vector.broadcast %53 : f32 to vector<8x384xf32>
    %55 = arith.mulf %52, %54 : vector<8x384xf32>
    %56 = arith.addf %50, %55 : vector<8x384xf32>
    %c1_21 = arith.constant 1 : index
    %57 = memref.load %arg4[%c1_21] : memref<32xf32, #tpu.memory_space<smem>>
    %58 = vector.broadcast %57 : f32 to vector<8x384xf32>
    %59 = arith.addf %56, %58 : vector<8x384xf32>
    %c1_22 = arith.constant 1 : index
    %c0_23 = arith.constant 0 : index
    %c0_24 = arith.constant 0 : index
    %60 = vector.load %arg5[%c1_22, %c0_23, %c0_24] : memref<32x8x384xf32, #tpu.memory_space<vmem>>, vector<1x8x384xf32>
    %61 = vector.shape_cast %60 : vector<1x8x384xf32> to vector<8x384xf32>
    %62 = vector.shape_cast %59 : vector<8x384xf32> to vector<1x8x384xf32>
    tpu.vector_store %arg5[%c1_22, %c0_23, %c0_24], %62 {strides = array<i32>} : memref<32x8x384xf32, #tpu.memory_space<vmem>>, vector<1x8x384xf32>,
    %63 = vector.extract_strided_slice %4 {offsets = [0, 0, 0], sizes = [1, 8, 384], strides = [1, 1, 1]} : vector<4x8x384xf32> to vector<1x8x384xf32>
    %64 = vector.shape_cast %63 : vector<1x8x384xf32> to vector<8x384xf32>
    %c0_25 = arith.constant 0 : index
    %c2_26 = arith.constant 2 : index
    %65 = memref.load %arg3[%c0_25, %c2_26] : memref<4x32xf32, #tpu.memory_space<smem>>
    %66 = vector.broadcast %65 : f32 to vector<8x384xf32>
    %67 = arith.mulf %64, %66 : vector<8x384xf32>
    %68 = vector.extract_strided_slice %4 {offsets = [1, 0, 0], sizes = [1, 8, 384], strides = [1, 1, 1]} : vector<4x8x384xf32> to vector<1x8x384xf32>
    %69 = vector.shape_cast %68 : vector<1x8x384xf32> to vector<8x384xf32>
    %c1_27 = arith.constant 1 : index
    %c2_28 = arith.constant 2 : index
    %70 = memref.load %arg3[%c1_27, %c2_28] : memref<4x32xf32, #tpu.memory_space<smem>>
    %71 = vector.broadcast %70 : f32 to vector<8x384xf32>
    %72 = arith.mulf %69, %71 : vector<8x384xf32>
    %73 = arith.addf %67, %72 : vector<8x384xf32>
    %74 = vector.extract_strided_slice %4 {offsets = [2, 0, 0], sizes = [1, 8, 384], strides = [1, 1, 1]} : vector<4x8x384xf32> to vector<1x8x384xf32>
    %75 = vector.shape_cast %74 : vector<1x8x384xf32> to vector<8x384xf32>
    %c2_29 = arith.constant 2 : index
    %c2_30 = arith.constant 2 : index
    %76 = memref.load %arg3[%c2_29, %c2_30] : memref<4x32xf32, #tpu.memory_space<smem>>
    %77 = vector.broadcast %76 : f32 to vector<8x384xf32>
    %78 = arith.mulf %75, %77 : vector<8x384xf32>
    %79 = arith.addf %73, %78 : vector<8x384xf32>
    %80 = vector.extract_strided_slice %4 {offsets = [3, 0, 0], sizes = [1, 8, 384], strides = [1, 1, 1]} : vector<4x8x384xf32> to vector<1x8x384xf32>
    %81 = vector.shape_cast %80 : vector<1x8x384xf32> to vector<8x384xf32>
    %c3_31 = arith.constant 3 : index
    %c2_32 = arith.constant 2 : index
    %82 = memref.load %arg3[%c3_31, %c2_32] : memref<4x32xf32, #tpu.memory_space<smem>>
    %83 = vector.broadcast %82 : f32 to vector<8x384xf32>
    %84 = arith.mulf %81, %83 : vector<8x384xf32>
    %85 = arith.addf %79, %84 : vector<8x384xf32>
    %c2_33 = arith.constant 2 : index
    %86 = memref.load %arg4[%c2_33] : memref<32xf32, #tpu.memory_space<smem>>
    %87 = vector.broadcast %86 : f32 to vector<8x384xf32>
    %88 = arith.addf %85, %87 : vector<8x384xf32>
    %c2_34 = arith.constant 2 : index
    %c0_35 = arith.constant 0 : index
    %c0_36 = arith.constant 0 : index
    %89 = vector.load %arg5[%c2_34, %c0_35, %c0_36] : memref<32x8x384xf32, #tpu.memory_space<vmem>>, vector<1x8x384xf32>
    %90 = vector.shape_cast %89 : vector<1x8x384xf32> to vector<8x384xf32>
    %91 = vector.shape_cast %88 : vector<8x384xf32> to vector<1x8x384xf32>
    tpu.vector_store %arg5[%c2_34, %c0_35, %c0_36], %91 {strides = array<i32>} : memref<32x8x384xf32, #tpu.memory_space<vmem>>, vector<1x8x384xf32>,
    %92 = vector.extract_strided_slice %4 {offsets = [0, 0, 0], sizes = [1, 8, 384], strides = [1, 1, 1]} : vector<4x8x384xf32> to vector<1x8x384xf32>
    %93 = vector.shape_cast %92 : vector<1x8x384xf32> to vector<8x384xf32>
    %c0_37 = arith.constant 0 : index
    %c3_38 = arith.constant 3 : index
    %94 = memref.load %arg3[%c0_37, %c3_38] : memref<4x32xf32, #tpu.memory_space<smem>>
    %95 = vector.broadcast %94 : f32 to vector<8x384xf32>
    %96 = arith.mulf %93, %95 : vector<8x384xf32>
    %97 = vector.extract_strided_slice %4 {offsets = [1, 0, 0], sizes = [1, 8, 384], strides = [1, 1, 1]} : vector<4x8x384xf32> to vector<1x8x384xf32>
    %98 = vector.shape_cast %97 : vector<1x8x384xf32> to vector<8x384xf32>
    %c1_39 = arith.constant 1 : index
    %c3_40 = arith.constant 3 : index
    %99 = memref.load %arg3[%c1_39, %c3_40] : memref<4x32xf32, #tpu.memory_space<smem>>
    %100 = vector.broadcast %99 : f32 to vector<8x384xf32>
    %101 = arith.mulf %98, %100 : vector<8x384xf32>
    %102 = arith.addf %96, %101 : vector<8x384xf32>
    %103 = vector.extract_strided_slice %4 {offsets = [2, 0, 0], sizes = [1, 8, 384], strides = [1, 1, 1]} : vector<4x8x384xf32> to vector<1x8x384xf32>
    %104 = vector.shape_cast %103 : vector<1x8x384xf32> to vector<8x384xf32>
    %c2_41 = arith.constant 2 : index
    %c3_42 = arith.constant 3 : index
    %105 = memref.load %arg3[%c2_41, %c3_42] : memref<4x32xf32, #tpu.memory_space<smem>>
    %106 = vector.broadcast %105 : f32 to vector<8x384xf32>
    %107 = arith.mulf %104, %106 : vector<8x384xf32>
    %108 = arith.addf %102, %107 : vector<8x384xf32>
    %109 = vector.extract_strided_slice %4 {offsets = [3, 0, 0], sizes = [1, 8, 384], strides = [1, 1, 1]} : vector<4x8x384xf32> to vector<1x8x384xf32>
    %110 = vector.shape_cast %109 : vector<1x8x384xf32> to vector<8x384xf32>
    %c3_43 = arith.constant 3 : index
    %c3_44 = arith.constant 3 : index
    %111 = memref.load %arg3[%c3_43, %c3_44] : memref<4x32xf32, #tpu.memory_space<smem>>
    %112 = vector.broadcast %111 : f32 to vector<8x384xf32>
    %113 = arith.mulf %110, %112 : vector<8x384xf32>
    %114 = arith.addf %108, %113 : vector<8x384xf32>
    %c3_45 = arith.constant 3 : index
    %115 = memref.load %arg4[%c3_45] : memref<32xf32, #tpu.memory_space<smem>>
    %116 = vector.broadcast %115 : f32 to vector<8x384xf32>
    %117 = arith.addf %114, %116 : vector<8x384xf32>
    %c3_46 = arith.constant 3 : index
    %c0_47 = arith.constant 0 : index
    %c0_48 = arith.constant 0 : index
    %118 = vector.load %arg5[%c3_46, %c0_47, %c0_48] : memref<32x8x384xf32, #tpu.memory_space<vmem>>, vector<1x8x384xf32>
    %119 = vector.shape_cast %118 : vector<1x8x384xf32> to vector<8x384xf32>
    %120 = vector.shape_cast %117 : vector<8x384xf32> to vector<1x8x384xf32>
    tpu.vector_store %arg5[%c3_46, %c0_47, %c0_48], %120 {strides = array<i32>} : memref<32x8x384xf32, #tpu.memory_space<vmem>>, vector<1x8x384xf32>,
    %121 = vector.extract_strided_slice %4 {offsets = [0, 0, 0], sizes = [1, 8, 384], strides = [1, 1, 1]} : vector<4x8x384xf32> to vector<1x8x384xf32>
    %122 = vector.shape_cast %121 : vector<1x8x384xf32> to vector<8x384xf32>
    %c0_49 = arith.constant 0 : index
    %c4 = arith.constant 4 : index
    %123 = memref.load %arg3[%c0_49, %c4] : memref<4x32xf32, #tpu.memory_space<smem>>
    %124 = vector.broadcast %123 : f32 to vector<8x384xf32>
    %125 = arith.mulf %122, %124 : vector<8x384xf32>
    %126 = vector.extract_strided_slice %4 {offsets = [1, 0, 0], sizes = [1, 8, 384], strides = [1, 1, 1]} : vector<4x8x384xf32> to vector<1x8x384xf32>
    %127 = vector.shape_cast %126 : vector<1x8x384xf32> to vector<8x384xf32>
    %c1_50 = arith.constant 1 : index
    %c4_51 = arith.constant 4 : index
    %128 = memref.load %arg3[%c1_50, %c4_51] : memref<4x32xf32, #tpu.memory_space<smem>>
    %129 = vector.broadcast %128 : f32 to vector<8x384xf32>
    %130 = arith.mulf %127, %129 : vector<8x384xf32>
    %131 = arith.addf %125, %130 : vector<8x384xf32>
    %132 = vector.extract_strided_slice %4 {offsets = [2, 0, 0], sizes = [1, 8, 384], strides = [1, 1, 1]} : vector<4x8x384xf32> to vector<1x8x384xf32>
    %133 = vector.shape_cast %132 : vector<1x8x384xf32> to vector<8x384xf32>
    %c2_52 = arith.constant 2 : index
    %c4_53 = arith.constant 4 : index
    %134 = memref.load %arg3[%c2_52, %c4_53] : memref<4x32xf32, #tpu.memory_space<smem>>
    %135 = vector.broadcast %134 : f32 to vector<8x384xf32>
    %136 = arith.mulf %133, %135 : vector<8x384xf32>
    %137 = arith.addf %131, %136 : vector<8x384xf32>
    %138 = vector.extract_strided_slice %4 {offsets = [3, 0, 0], sizes = [1, 8, 384], strides = [1, 1, 1]} : vector<4x8x384xf32> to vector<1x8x384xf32>
    %139 = vector.shape_cast %138 : vector<1x8x384xf32> to vector<8x384xf32>
    %c3_54 = arith.constant 3 : index
    %c4_55 = arith.constant 4 : index
    %140 = memref.load %arg3[%c3_54, %c4_55] : memref<4x32xf32, #tpu.memory_space<smem>>
    %141 = vector.broadcast %140 : f32 to vector<8x384xf32>
    %142 = arith.mulf %139, %141 : vector<8x384xf32>
    %143 = arith.addf %137, %142 : vector<8x384xf32>
    %c4_56 = arith.constant 4 : index
    %144 = memref.load %arg4[%c4_56] : memref<32xf32, #tpu.memory_space<smem>>
    %145 = vector.broadcast %144 : f32 to vector<8x384xf32>
    %146 = arith.addf %143, %145 : vector<8x384xf32>
    %c4_57 = arith.constant 4 : index
    %c0_58 = arith.constant 0 : index
    %c0_59 = arith.constant 0 : index
    %147 = vector.load %arg5[%c4_57, %c0_58, %c0_59] : memref<32x8x384xf32, #tpu.memory_space<vmem>>, vector<1x8x384xf32>
    %148 = vector.shape_cast %147 : vector<1x8x384xf32> to vector<8x384xf32>
    %149 = vector.shape_cast %146 : vector<8x384xf32> to vector<1x8x384xf32>
    tpu.vector_store %arg5[%c4_57, %c0_58, %c0_59], %149 {strides = array<i32>} : memref<32x8x384xf32, #tpu.memory_space<vmem>>, vector<1x8x384xf32>,
    %150 = vector.extract_strided_slice %4 {offsets = [0, 0, 0], sizes = [1, 8, 384], strides = [1, 1, 1]} : vector<4x8x384xf32> to vector<1x8x384xf32>
    %151 = vector.shape_cast %150 : vector<1x8x384xf32> to vector<8x384xf32>
    %c0_60 = arith.constant 0 : index
    %c5 = arith.constant 5 : index
    %152 = memref.load %arg3[%c0_60, %c5] : memref<4x32xf32, #tpu.memory_space<smem>>
    %153 = vector.broadcast %152 : f32 to vector<8x384xf32>
    %154 = arith.mulf %151, %153 : vector<8x384xf32>
    %155 = vector.extract_strided_slice %4 {offsets = [1, 0, 0], sizes = [1, 8, 384], strides = [1, 1, 1]} : vector<4x8x384xf32> to vector<1x8x384xf32>
    %156 = vector.shape_cast %155 : vector<1x8x384xf32> to vector<8x384xf32>
    %c1_61 = arith.constant 1 : index
    %c5_62 = arith.constant 5 : index
    %157 = memref.load %arg3[%c1_61, %c5_62] : memref<4x32xf32, #tpu.memory_space<smem>>
    %158 = vector.broadcast %157 : f32 to vector<8x384xf32>
    %159 = arith.mulf %156, %158 : vector<8x384xf32>
    %160 = arith.addf %154, %159 : vector<8x384xf32>
    %161 = vector.extract_strided_slice %4 {offsets = [2, 0, 0], sizes = [1, 8, 384], strides = [1, 1, 1]} : vector<4x8x384xf32> to vector<1x8x384xf32>
    %162 = vector.shape_cast %161 : vector<1x8x384xf32> to vector<8x384xf32>
    %c2_63 = arith.constant 2 : index
    %c5_64 = arith.constant 5 : index
    %163 = memref.load %arg3[%c2_63, %c5_64] : memref<4x32xf32, #tpu.memory_space<smem>>
    %164 = vector.broadcast %163 : f32 to vector<8x384xf32>
    %165 = arith.mulf %162, %164 : vector<8x384xf32>
    %166 = arith.addf %160, %165 : vector<8x384xf32>
    %167 = vector.extract_strided_slice %4 {offsets = [3, 0, 0], sizes = [1, 8, 384], strides = [1, 1, 1]} : vector<4x8x384xf32> to vector<1x8x384xf32>
    %168 = vector.shape_cast %167 : vector<1x8x384xf32> to vector<8x384xf32>
    %c3_65 = arith.constant 3 : index
    %c5_66 = arith.constant 5 : index
    %169 = memref.load %arg3[%c3_65, %c5_66] : memref<4x32xf32, #tpu.memory_space<smem>>
    %170 = vector.broadcast %169 : f32 to vector<8x384xf32>
    %171 = arith.mulf %168, %170 : vector<8x384xf32>
    %172 = arith.addf %166, %171 : vector<8x384xf32>
    %c5_67 = arith.constant 5 : index
    %173 = memref.load %arg4[%c5_67] : memref<32xf32, #tpu.memory_space<smem>>
    %174 = vector.broadcast %173 : f32 to vector<8x384xf32>
    %175 = arith.addf %172, %174 : vector<8x384xf32>
    %c5_68 = arith.constant 5 : index
    %c0_69 = arith.constant 0 : index
    %c0_70 = arith.constant 0 : index
    %176 = vector.load %arg5[%c5_68, %c0_69, %c0_70] : memref<32x8x384xf32, #tpu.memory_space<vmem>>, vector<1x8x384xf32>
    %177 = vector.shape_cast %176 : vector<1x8x384xf32> to vector<8x384xf32>
    %178 = vector.shape_cast %175 : vector<8x384xf32> to vector<1x8x384xf32>
    tpu.vector_store %arg5[%c5_68, %c0_69, %c0_70], %178 {strides = array<i32>} : memref<32x8x384xf32, #tpu.memory_space<vmem>>, vector<1x8x384xf32>,
    %179 = vector.extract_strided_slice %4 {offsets = [0, 0, 0], sizes = [1, 8, 384], strides = [1, 1, 1]} : vector<4x8x384xf32> to vector<1x8x384xf32>
    %180 = vector.shape_cast %179 : vector<1x8x384xf32> to vector<8x384xf32>
    %c0_71 = arith.constant 0 : index
    %c6 = arith.constant 6 : index
    %181 = memref.load %arg3[%c0_71, %c6] : memref<4x32xf32, #tpu.memory_space<smem>>
    %182 = vector.broadcast %181 : f32 to vector<8x384xf32>
    %183 = arith.mulf %180, %182 : vector<8x384xf32>
    %184 = vector.extract_strided_slice %4 {offsets = [1, 0, 0], sizes = [1, 8, 384], strides = [1, 1, 1]} : vector<4x8x384xf32> to vector<1x8x384xf32>
    %185 = vector.shape_cast %184 : vector<1x8x384xf32> to vector<8x384xf32>
    %c1_72 = arith.constant 1 : index
    %c6_73 = arith.constant 6 : index
    %186 = memref.load %arg3[%c1_72, %c6_73] : memref<4x32xf32, #tpu.memory_space<smem>>
    %187 = vector.broadcast %186 : f32 to vector<8x384xf32>
    %188 = arith.mulf %185, %187 : vector<8x384xf32>
    %189 = arith.addf %183, %188 : vector<8x384xf32>
    %190 = vector.extract_strided_slice %4 {offsets = [2, 0, 0], sizes = [1, 8, 384], strides = [1, 1, 1]} : vector<4x8x384xf32> to vector<1x8x384xf32>
    %191 = vector.shape_cast %190 : vector<1x8x384xf32> to vector<8x384xf32>
    %c2_74 = arith.constant 2 : index
    %c6_75 = arith.constant 6 : index
    %192 = memref.load %arg3[%c2_74, %c6_75] : memref<4x32xf32, #tpu.memory_space<smem>>
    %193 = vector.broadcast %192 : f32 to vector<8x384xf32>
    %194 = arith.mulf %191, %193 : vector<8x384xf32>
    %195 = arith.addf %189, %194 : vector<8x384xf32>
    %196 = vector.extract_strided_slice %4 {offsets = [3, 0, 0], sizes = [1, 8, 384], strides = [1, 1, 1]} : vector<4x8x384xf32> to vector<1x8x384xf32>
    %197 = vector.shape_cast %196 : vector<1x8x384xf32> to vector<8x384xf32>
    %c3_76 = arith.constant 3 : index
    %c6_77 = arith.constant 6 : index
    %198 = memref.load %arg3[%c3_76, %c6_77] : memref<4x32xf32, #tpu.memory_space<smem>>
    %199 = vector.broadcast %198 : f32 to vector<8x384xf32>
    %200 = arith.mulf %197, %199 : vector<8x384xf32>
    %201 = arith.addf %195, %200 : vector<8x384xf32>
    %c6_78 = arith.constant 6 : index
    %202 = memref.load %arg4[%c6_78] : memref<32xf32, #tpu.memory_space<smem>>
    %203 = vector.broadcast %202 : f32 to vector<8x384xf32>
    %204 = arith.addf %201, %203 : vector<8x384xf32>
    %c6_79 = arith.constant 6 : index
    %c0_80 = arith.constant 0 : index
    %c0_81 = arith.constant 0 : index
    %205 = vector.load %arg5[%c6_79, %c0_80, %c0_81] : memref<32x8x384xf32, #tpu.memory_space<vmem>>, vector<1x8x384xf32>
    %206 = vector.shape_cast %205 : vector<1x8x384xf32> to vector<8x384xf32>
    %207 = vector.shape_cast %204 : vector<8x384xf32> to vector<1x8x384xf32>
    tpu.vector_store %arg5[%c6_79, %c0_80, %c0_81], %207 {strides = array<i32>} : memref<32x8x384xf32, #tpu.memory_space<vmem>>, vector<1x8x384xf32>,
    %208 = vector.extract_strided_slice %4 {offsets = [0, 0, 0], sizes = [1, 8, 384], strides = [1, 1, 1]} : vector<4x8x384xf32> to vector<1x8x384xf32>
    %209 = vector.shape_cast %208 : vector<1x8x384xf32> to vector<8x384xf32>
    %c0_82 = arith.constant 0 : index
    %c7 = arith.constant 7 : index
    %210 = memref.load %arg3[%c0_82, %c7] : memref<4x32xf32, #tpu.memory_space<smem>>
    %211 = vector.broadcast %210 : f32 to vector<8x384xf32>
    %212 = arith.mulf %209, %211 : vector<8x384xf32>
    %213 = vector.extract_strided_slice %4 {offsets = [1, 0, 0], sizes = [1, 8, 384], strides = [1, 1, 1]} : vector<4x8x384xf32> to vector<1x8x384xf32>
    %214 = vector.shape_cast %213 : vector<1x8x384xf32> to vector<8x384xf32>
    %c1_83 = arith.constant 1 : index
    %c7_84 = arith.constant 7 : index
    %215 = memref.load %arg3[%c1_83, %c7_84] : memref<4x32xf32, #tpu.memory_space<smem>>
    %216 = vector.broadcast %215 : f32 to vector<8x384xf32>
    %217 = arith.mulf %214, %216 : vector<8x384xf32>
    %218 = arith.addf %212, %217 : vector<8x384xf32>
    %219 = vector.extract_strided_slice %4 {offsets = [2, 0, 0], sizes = [1, 8, 384], strides = [1, 1, 1]} : vector<4x8x384xf32> to vector<1x8x384xf32>
    %220 = vector.shape_cast %219 : vector<1x8x384xf32> to vector<8x384xf32>
    %c2_85 = arith.constant 2 : index
    %c7_86 = arith.constant 7 : index
    %221 = memref.load %arg3[%c2_85, %c7_86] : memref<4x32xf32, #tpu.memory_space<smem>>
    %222 = vector.broadcast %221 : f32 to vector<8x384xf32>
    %223 = arith.mulf %220, %222 : vector<8x384xf32>
    %224 = arith.addf %218, %223 : vector<8x384xf32>
    %225 = vector.extract_strided_slice %4 {offsets = [3, 0, 0], sizes = [1, 8, 384], strides = [1, 1, 1]} : vector<4x8x384xf32> to vector<1x8x384xf32>
    %226 = vector.shape_cast %225 : vector<1x8x384xf32> to vector<8x384xf32>
    %c3_87 = arith.constant 3 : index
    %c7_88 = arith.constant 7 : index
    %227 = memref.load %arg3[%c3_87, %c7_88] : memref<4x32xf32, #tpu.memory_space<smem>>
    %228 = vector.broadcast %227 : f32 to vector<8x384xf32>
    %229 = arith.mulf %226, %228 : vector<8x384xf32>
    %230 = arith.addf %224, %229 : vector<8x384xf32>
    %c7_89 = arith.constant 7 : index
    %231 = memref.load %arg4[%c7_89] : memref<32xf32, #tpu.memory_space<smem>>
    %232 = vector.broadcast %231 : f32 to vector<8x384xf32>
    %233 = arith.addf %230, %232 : vector<8x384xf32>
    %c7_90 = arith.constant 7 : index
    %c0_91 = arith.constant 0 : index
    %c0_92 = arith.constant 0 : index
    %234 = vector.load %arg5[%c7_90, %c0_91, %c0_92] : memref<32x8x384xf32, #tpu.memory_space<vmem>>, vector<1x8x384xf32>
    %235 = vector.shape_cast %234 : vector<1x8x384xf32> to vector<8x384xf32>
    %236 = vector.shape_cast %233 : vector<8x384xf32> to vector<1x8x384xf32>
    tpu.vector_store %arg5[%c7_90, %c0_91, %c0_92], %236 {strides = array<i32>} : memref<32x8x384xf32, #tpu.memory_space<vmem>>, vector<1x8x384xf32>,
    %237 = vector.extract_strided_slice %4 {offsets = [0, 0, 0], sizes = [1, 8, 384], strides = [1, 1, 1]} : vector<4x8x384xf32> to vector<1x8x384xf32>
    %238 = vector.shape_cast %237 : vector<1x8x384xf32> to vector<8x384xf32>
    %c0_93 = arith.constant 0 : index
    %c8 = arith.constant 8 : index
    %239 = memref.load %arg3[%c0_93, %c8] : memref<4x32xf32, #tpu.memory_space<smem>>
    %240 = vector.broadcast %239 : f32 to vector<8x384xf32>
    %241 = arith.mulf %238, %240 : vector<8x384xf32>
    %242 = vector.extract_strided_slice %4 {offsets = [1, 0, 0], sizes = [1, 8, 384], strides = [1, 1, 1]} : vector<4x8x384xf32> to vector<1x8x384xf32>
    %243 = vector.shape_cast %242 : vector<1x8x384xf32> to vector<8x384xf32>
    %c1_94 = arith.constant 1 : index
    %c8_95 = arith.constant 8 : index
    %244 = memref.load %arg3[%c1_94, %c8_95] : memref<4x32xf32, #tpu.memory_space<smem>>
    %245 = vector.broadcast %244 : f32 to vector<8x384xf32>
    %246 = arith.mulf %243, %245 : vector<8x384xf32>
    %247 = arith.addf %241, %246 : vector<8x384xf32>
    %248 = vector.extract_strided_slice %4 {offsets = [2, 0, 0], sizes = [1, 8, 384], strides = [1, 1, 1]} : vector<4x8x384xf32> to vector<1x8x384xf32>
    %249 = vector.shape_cast %248 : vector<1x8x384xf32> to vector<8x384xf32>
    %c2_96 = arith.constant 2 : index
    %c8_97 = arith.constant 8 : index
    %250 = memref.load %arg3[%c2_96, %c8_97] : memref<4x32xf32, #tpu.memory_space<smem>>
    %251 = vector.broadcast %250 : f32 to vector<8x384xf32>
    %252 = arith.mulf %249, %251 : vector<8x384xf32>
    %253 = arith.addf %247, %252 : vector<8x384xf32>
    %254 = vector.extract_strided_slice %4 {offsets = [3, 0, 0], sizes = [1, 8, 384], strides = [1, 1, 1]} : vector<4x8x384xf32> to vector<1x8x384xf32>
    %255 = vector.shape_cast %254 : vector<1x8x384xf32> to vector<8x384xf32>
    %c3_98 = arith.constant 3 : index
    %c8_99 = arith.constant 8 : index
    %256 = memref.load %arg3[%c3_98, %c8_99] : memref<4x32xf32, #tpu.memory_space<smem>>
    %257 = vector.broadcast %256 : f32 to vector<8x384xf32>
    %258 = arith.mulf %255, %257 : vector<8x384xf32>
    %259 = arith.addf %253, %258 : vector<8x384xf32>
    %c8_100 = arith.constant 8 : index
    %260 = memref.load %arg4[%c8_100] : memref<32xf32, #tpu.memory_space<smem>>
    %261 = vector.broadcast %260 : f32 to vector<8x384xf32>
    %262 = arith.addf %259, %261 : vector<8x384xf32>
    %c8_101 = arith.constant 8 : index
    %c0_102 = arith.constant 0 : index
    %c0_103 = arith.constant 0 : index
    %263 = vector.load %arg5[%c8_101, %c0_102, %c0_103] : memref<32x8x384xf32, #tpu.memory_space<vmem>>, vector<1x8x384xf32>
    %264 = vector.shape_cast %263 : vector<1x8x384xf32> to vector<8x384xf32>
    %265 = vector.shape_cast %262 : vector<8x384xf32> to vector<1x8x384xf32>
    tpu.vector_store %arg5[%c8_101, %c0_102, %c0_103], %265 {strides = array<i32>} : memref<32x8x384xf32, #tpu.memory_space<vmem>>, vector<1x8x384xf32>,
    %266 = vector.extract_strided_slice %4 {offsets = [0, 0, 0], sizes = [1, 8, 384], strides = [1, 1, 1]} : vector<4x8x384xf32> to vector<1x8x384xf32>
    %267 = vector.shape_cast %266 : vector<1x8x384xf32> to vector<8x384xf32>
    %c0_104 = arith.constant 0 : index
    %c9 = arith.constant 9 : index
    %268 = memref.load %arg3[%c0_104, %c9] : memref<4x32xf32, #tpu.memory_space<smem>>
    %269 = vector.broadcast %268 : f32 to vector<8x384xf32>
    %270 = arith.mulf %267, %269 : vector<8x384xf32>
    %271 = vector.extract_strided_slice %4 {offsets = [1, 0, 0], sizes = [1, 8, 384], strides = [1, 1, 1]} : vector<4x8x384xf32> to vector<1x8x384xf32>
    %272 = vector.shape_cast %271 : vector<1x8x384xf32> to vector<8x384xf32>
    %c1_105 = arith.constant 1 : index
    %c9_106 = arith.constant 9 : index
    %273 = memref.load %arg3[%c1_105, %c9_106] : memref<4x32xf32, #tpu.memory_space<smem>>
    %274 = vector.broadcast %273 : f32 to vector<8x384xf32>
    %275 = arith.mulf %272, %274 : vector<8x384xf32>
    %276 = arith.addf %270, %275 : vector<8x384xf32>
    %277 = vector.extract_strided_slice %4 {offsets = [2, 0, 0], sizes = [1, 8, 384], strides = [1, 1, 1]} : vector<4x8x384xf32> to vector<1x8x384xf32>
    %278 = vector.shape_cast %277 : vector<1x8x384xf32> to vector<8x384xf32>
    %c2_107 = arith.constant 2 : index
    %c9_108 = arith.constant 9 : index
    %279 = memref.load %arg3[%c2_107, %c9_108] : memref<4x32xf32, #tpu.memory_space<smem>>
    %280 = vector.broadcast %279 : f32 to vector<8x384xf32>
    %281 = arith.mulf %278, %280 : vector<8x384xf32>
    %282 = arith.addf %276, %281 : vector<8x384xf32>
    %283 = vector.extract_strided_slice %4 {offsets = [3, 0, 0], sizes = [1, 8, 384], strides = [1, 1, 1]} : vector<4x8x384xf32> to vector<1x8x384xf32>
    %284 = vector.shape_cast %283 : vector<1x8x384xf32> to vector<8x384xf32>
    %c3_109 = arith.constant 3 : index
    %c9_110 = arith.constant 9 : index
    %285 = memref.load %arg3[%c3_109, %c9_110] : memref<4x32xf32, #tpu.memory_space<smem>>
    %286 = vector.broadcast %285 : f32 to vector<8x384xf32>
    %287 = arith.mulf %284, %286 : vector<8x384xf32>
    %288 = arith.addf %282, %287 : vector<8x384xf32>
    %c9_111 = arith.constant 9 : index
    %289 = memref.load %arg4[%c9_111] : memref<32xf32, #tpu.memory_space<smem>>
    %290 = vector.broadcast %289 : f32 to vector<8x384xf32>
    %291 = arith.addf %288, %290 : vector<8x384xf32>
    %c9_112 = arith.constant 9 : index
    %c0_113 = arith.constant 0 : index
    %c0_114 = arith.constant 0 : index
    %292 = vector.load %arg5[%c9_112, %c0_113, %c0_114] : memref<32x8x384xf32, #tpu.memory_space<vmem>>, vector<1x8x384xf32>
    %293 = vector.shape_cast %292 : vector<1x8x384xf32> to vector<8x384xf32>
    %294 = vector.shape_cast %291 : vector<8x384xf32> to vector<1x8x384xf32>
    tpu.vector_store %arg5[%c9_112, %c0_113, %c0_114], %294 {strides = array<i32>} : memref<32x8x384xf32, #tpu.memory_space<vmem>>, vector<1x8x384xf32>,
    %295 = vector.extract_strided_slice %4 {offsets = [0, 0, 0], sizes = [1, 8, 384], strides = [1, 1, 1]} : vector<4x8x384xf32> to vector<1x8x384xf32>
    %296 = vector.shape_cast %295 : vector<1x8x384xf32> to vector<8x384xf32>
    %c0_115 = arith.constant 0 : index
    %c10 = arith.constant 10 : index
    %297 = memref.load %arg3[%c0_115, %c10] : memref<4x32xf32, #tpu.memory_space<smem>>
    %298 = vector.broadcast %297 : f32 to vector<8x384xf32>
    %299 = arith.mulf %296, %298 : vector<8x384xf32>
    %300 = vector.extract_strided_slice %4 {offsets = [1, 0, 0], sizes = [1, 8, 384], strides = [1, 1, 1]} : vector<4x8x384xf32> to vector<1x8x384xf32>
    %301 = vector.shape_cast %300 : vector<1x8x384xf32> to vector<8x384xf32>
    %c1_116 = arith.constant 1 : index
    %c10_117 = arith.constant 10 : index
    %302 = memref.load %arg3[%c1_116, %c10_117] : memref<4x32xf32, #tpu.memory_space<smem>>
    %303 = vector.broadcast %302 : f32 to vector<8x384xf32>
    %304 = arith.mulf %301, %303 : vector<8x384xf32>
    %305 = arith.addf %299, %304 : vector<8x384xf32>
    %306 = vector.extract_strided_slice %4 {offsets = [2, 0, 0], sizes = [1, 8, 384], strides = [1, 1, 1]} : vector<4x8x384xf32> to vector<1x8x384xf32>
    %307 = vector.shape_cast %306 : vector<1x8x384xf32> to vector<8x384xf32>
    %c2_118 = arith.constant 2 : index
    %c10_119 = arith.constant 10 : index
    %308 = memref.load %arg3[%c2_118, %c10_119] : memref<4x32xf32, #tpu.memory_space<smem>>
    %309 = vector.broadcast %308 : f32 to vector<8x384xf32>
    %310 = arith.mulf %307, %309 : vector<8x384xf32>
    %311 = arith.addf %305, %310 : vector<8x384xf32>
    %312 = vector.extract_strided_slice %4 {offsets = [3, 0, 0], sizes = [1, 8, 384], strides = [1, 1, 1]} : vector<4x8x384xf32> to vector<1x8x384xf32>
    %313 = vector.shape_cast %312 : vector<1x8x384xf32> to vector<8x384xf32>
    %c3_120 = arith.constant 3 : index
    %c10_121 = arith.constant 10 : index
    %314 = memref.load %arg3[%c3_120, %c10_121] : memref<4x32xf32, #tpu.memory_space<smem>>
    %315 = vector.broadcast %314 : f32 to vector<8x384xf32>
    %316 = arith.mulf %313, %315 : vector<8x384xf32>
    %317 = arith.addf %311, %316 : vector<8x384xf32>
    %c10_122 = arith.constant 10 : index
    %318 = memref.load %arg4[%c10_122] : memref<32xf32, #tpu.memory_space<smem>>
    %319 = vector.broadcast %318 : f32 to vector<8x384xf32>
    %320 = arith.addf %317, %319 : vector<8x384xf32>
    %c10_123 = arith.constant 10 : index
    %c0_124 = arith.constant 0 : index
    %c0_125 = arith.constant 0 : index
    %321 = vector.load %arg5[%c10_123, %c0_124, %c0_125] : memref<32x8x384xf32, #tpu.memory_space<vmem>>, vector<1x8x384xf32>
    %322 = vector.shape_cast %321 : vector<1x8x384xf32> to vector<8x384xf32>
    %323 = vector.shape_cast %320 : vector<8x384xf32> to vector<1x8x384xf32>
    tpu.vector_store %arg5[%c10_123, %c0_124, %c0_125], %323 {strides = array<i32>} : memref<32x8x384xf32, #tpu.memory_space<vmem>>, vector<1x8x384xf32>,
    %324 = vector.extract_strided_slice %4 {offsets = [0, 0, 0], sizes = [1, 8, 384], strides = [1, 1, 1]} : vector<4x8x384xf32> to vector<1x8x384xf32>
    %325 = vector.shape_cast %324 : vector<1x8x384xf32> to vector<8x384xf32>
    %c0_126 = arith.constant 0 : index
    %c11 = arith.constant 11 : index
    %326 = memref.load %arg3[%c0_126, %c11] : memref<4x32xf32, #tpu.memory_space<smem>>
    %327 = vector.broadcast %326 : f32 to vector<8x384xf32>
    %328 = arith.mulf %325, %327 : vector<8x384xf32>
    %329 = vector.extract_strided_slice %4 {offsets = [1, 0, 0], sizes = [1, 8, 384], strides = [1, 1, 1]} : vector<4x8x384xf32> to vector<1x8x384xf32>
    %330 = vector.shape_cast %329 : vector<1x8x384xf32> to vector<8x384xf32>
    %c1_127 = arith.constant 1 : index
    %c11_128 = arith.constant 11 : index
    %331 = memref.load %arg3[%c1_127, %c11_128] : memref<4x32xf32, #tpu.memory_space<smem>>
    %332 = vector.broadcast %331 : f32 to vector<8x384xf32>
    %333 = arith.mulf %330, %332 : vector<8x384xf32>
    %334 = arith.addf %328, %333 : vector<8x384xf32>
    %335 = vector.extract_strided_slice %4 {offsets = [2, 0, 0], sizes = [1, 8, 384], strides = [1, 1, 1]} : vector<4x8x384xf32> to vector<1x8x384xf32>
    %336 = vector.shape_cast %335 : vector<1x8x384xf32> to vector<8x384xf32>
    %c2_129 = arith.constant 2 : index
    %c11_130 = arith.constant 11 : index
    %337 = memref.load %arg3[%c2_129, %c11_130] : memref<4x32xf32, #tpu.memory_space<smem>>
    %338 = vector.broadcast %337 : f32 to vector<8x384xf32>
    %339 = arith.mulf %336, %338 : vector<8x384xf32>
    %340 = arith.addf %334, %339 : vector<8x384xf32>
    %341 = vector.extract_strided_slice %4 {offsets = [3, 0, 0], sizes = [1, 8, 384], strides = [1, 1, 1]} : vector<4x8x384xf32> to vector<1x8x384xf32>
    %342 = vector.shape_cast %341 : vector<1x8x384xf32> to vector<8x384xf32>
    %c3_131 = arith.constant 3 : index
    %c11_132 = arith.constant 11 : index
    %343 = memref.load %arg3[%c3_131, %c11_132] : memref<4x32xf32, #tpu.memory_space<smem>>
    %344 = vector.broadcast %343 : f32 to vector<8x384xf32>
    %345 = arith.mulf %342, %344 : vector<8x384xf32>
    %346 = arith.addf %340, %345 : vector<8x384xf32>
    %c11_133 = arith.constant 11 : index
    %347 = memref.load %arg4[%c11_133] : memref<32xf32, #tpu.memory_space<smem>>
    %348 = vector.broadcast %347 : f32 to vector<8x384xf32>
    %349 = arith.addf %346, %348 : vector<8x384xf32>
    %c11_134 = arith.constant 11 : index
    %c0_135 = arith.constant 0 : index
    %c0_136 = arith.constant 0 : index
    %350 = vector.load %arg5[%c11_134, %c0_135, %c0_136] : memref<32x8x384xf32, #tpu.memory_space<vmem>>, vector<1x8x384xf32>
    %351 = vector.shape_cast %350 : vector<1x8x384xf32> to vector<8x384xf32>
    %352 = vector.shape_cast %349 : vector<8x384xf32> to vector<1x8x384xf32>
    tpu.vector_store %arg5[%c11_134, %c0_135, %c0_136], %352 {strides = array<i32>} : memref<32x8x384xf32, #tpu.memory_space<vmem>>, vector<1x8x384xf32>,
    %353 = vector.extract_strided_slice %4 {offsets = [0, 0, 0], sizes = [1, 8, 384], strides = [1, 1, 1]} : vector<4x8x384xf32> to vector<1x8x384xf32>
    %354 = vector.shape_cast %353 : vector<1x8x384xf32> to vector<8x384xf32>
    %c0_137 = arith.constant 0 : index
    %c12 = arith.constant 12 : index
    %355 = memref.load %arg3[%c0_137, %c12] : memref<4x32xf32, #tpu.memory_space<smem>>
    %356 = vector.broadcast %355 : f32 to vector<8x384xf32>
    %357 = arith.mulf %354, %356 : vector<8x384xf32>
    %358 = vector.extract_strided_slice %4 {offsets = [1, 0, 0], sizes = [1, 8, 384], strides = [1, 1, 1]} : vector<4x8x384xf32> to vector<1x8x384xf32>
    %359 = vector.shape_cast %358 : vector<1x8x384xf32> to vector<8x384xf32>
    %c1_138 = arith.constant 1 : index
    %c12_139 = arith.constant 12 : index
    %360 = memref.load %arg3[%c1_138, %c12_139] : memref<4x32xf32, #tpu.memory_space<smem>>
    %361 = vector.broadcast %360 : f32 to vector<8x384xf32>
    %362 = arith.mulf %359, %361 : vector<8x384xf32>
    %363 = arith.addf %357, %362 : vector<8x384xf32>
    %364 = vector.extract_strided_slice %4 {offsets = [2, 0, 0], sizes = [1, 8, 384], strides = [1, 1, 1]} : vector<4x8x384xf32> to vector<1x8x384xf32>
    %365 = vector.shape_cast %364 : vector<1x8x384xf32> to vector<8x384xf32>
    %c2_140 = arith.constant 2 : index
    %c12_141 = arith.constant 12 : index
    %366 = memref.load %arg3[%c2_140, %c12_141] : memref<4x32xf32, #tpu.memory_space<smem>>
    %367 = vector.broadcast %366 : f32 to vector<8x384xf32>
    %368 = arith.mulf %365, %367 : vector<8x384xf32>
    %369 = arith.addf %363, %368 : vector<8x384xf32>
    %370 = vector.extract_strided_slice %4 {offsets = [3, 0, 0], sizes = [1, 8, 384], strides = [1, 1, 1]} : vector<4x8x384xf32> to vector<1x8x384xf32>
    %371 = vector.shape_cast %370 : vector<1x8x384xf32> to vector<8x384xf32>
    %c3_142 = arith.constant 3 : index
    %c12_143 = arith.constant 12 : index
    %372 = memref.load %arg3[%c3_142, %c12_143] : memref<4x32xf32, #tpu.memory_space<smem>>
    %373 = vector.broadcast %372 : f32 to vector<8x384xf32>
    %374 = arith.mulf %371, %373 : vector<8x384xf32>
    %375 = arith.addf %369, %374 : vector<8x384xf32>
    %c12_144 = arith.constant 12 : index
    %376 = memref.load %arg4[%c12_144] : memref<32xf32, #tpu.memory_space<smem>>
    %377 = vector.broadcast %376 : f32 to vector<8x384xf32>
    %378 = arith.addf %375, %377 : vector<8x384xf32>
    %c12_145 = arith.constant 12 : index
    %c0_146 = arith.constant 0 : index
    %c0_147 = arith.constant 0 : index
    %379 = vector.load %arg5[%c12_145, %c0_146, %c0_147] : memref<32x8x384xf32, #tpu.memory_space<vmem>>, vector<1x8x384xf32>
    %380 = vector.shape_cast %379 : vector<1x8x384xf32> to vector<8x384xf32>
    %381 = vector.shape_cast %378 : vector<8x384xf32> to vector<1x8x384xf32>
    tpu.vector_store %arg5[%c12_145, %c0_146, %c0_147], %381 {strides = array<i32>} : memref<32x8x384xf32, #tpu.memory_space<vmem>>, vector<1x8x384xf32>,
    %382 = vector.extract_strided_slice %4 {offsets = [0, 0, 0], sizes = [1, 8, 384], strides = [1, 1, 1]} : vector<4x8x384xf32> to vector<1x8x384xf32>
    %383 = vector.shape_cast %382 : vector<1x8x384xf32> to vector<8x384xf32>
    %c0_148 = arith.constant 0 : index
    %c13 = arith.constant 13 : index
    %384 = memref.load %arg3[%c0_148, %c13] : memref<4x32xf32, #tpu.memory_space<smem>>
    %385 = vector.broadcast %384 : f32 to vector<8x384xf32>
    %386 = arith.mulf %383, %385 : vector<8x384xf32>
    %387 = vector.extract_strided_slice %4 {offsets = [1, 0, 0], sizes = [1, 8, 384], strides = [1, 1, 1]} : vector<4x8x384xf32> to vector<1x8x384xf32>
    %388 = vector.shape_cast %387 : vector<1x8x384xf32> to vector<8x384xf32>
    %c1_149 = arith.constant 1 : index
    %c13_150 = arith.constant 13 : index
    %389 = memref.load %arg3[%c1_149, %c13_150] : memref<4x32xf32, #tpu.memory_space<smem>>
    %390 = vector.broadcast %389 : f32 to vector<8x384xf32>
    %391 = arith.mulf %388, %390 : vector<8x384xf32>
    %392 = arith.addf %386, %391 : vector<8x384xf32>
    %393 = vector.extract_strided_slice %4 {offsets = [2, 0, 0], sizes = [1, 8, 384], strides = [1, 1, 1]} : vector<4x8x384xf32> to vector<1x8x384xf32>
    %394 = vector.shape_cast %393 : vector<1x8x384xf32> to vector<8x384xf32>
    %c2_151 = arith.constant 2 : index
    %c13_152 = arith.constant 13 : index
    %395 = memref.load %arg3[%c2_151, %c13_152] : memref<4x32xf32, #tpu.memory_space<smem>>
    %396 = vector.broadcast %395 : f32 to vector<8x384xf32>
    %397 = arith.mulf %394, %396 : vector<8x384xf32>
    %398 = arith.addf %392, %397 : vector<8x384xf32>
    %399 = vector.extract_strided_slice %4 {offsets = [3, 0, 0], sizes = [1, 8, 384], strides = [1, 1, 1]} : vector<4x8x384xf32> to vector<1x8x384xf32>
    %400 = vector.shape_cast %399 : vector<1x8x384xf32> to vector<8x384xf32>
    %c3_153 = arith.constant 3 : index
    %c13_154 = arith.constant 13 : index
    %401 = memref.load %arg3[%c3_153, %c13_154] : memref<4x32xf32, #tpu.memory_space<smem>>
    %402 = vector.broadcast %401 : f32 to vector<8x384xf32>
    %403 = arith.mulf %400, %402 : vector<8x384xf32>
    %404 = arith.addf %398, %403 : vector<8x384xf32>
    %c13_155 = arith.constant 13 : index
    %405 = memref.load %arg4[%c13_155] : memref<32xf32, #tpu.memory_space<smem>>
    %406 = vector.broadcast %405 : f32 to vector<8x384xf32>
    %407 = arith.addf %404, %406 : vector<8x384xf32>
    %c13_156 = arith.constant 13 : index
    %c0_157 = arith.constant 0 : index
    %c0_158 = arith.constant 0 : index
    %408 = vector.load %arg5[%c13_156, %c0_157, %c0_158] : memref<32x8x384xf32, #tpu.memory_space<vmem>>, vector<1x8x384xf32>
    %409 = vector.shape_cast %408 : vector<1x8x384xf32> to vector<8x384xf32>
    %410 = vector.shape_cast %407 : vector<8x384xf32> to vector<1x8x384xf32>
    tpu.vector_store %arg5[%c13_156, %c0_157, %c0_158], %410 {strides = array<i32>} : memref<32x8x384xf32, #tpu.memory_space<vmem>>, vector<1x8x384xf32>,
    %411 = vector.extract_strided_slice %4 {offsets = [0, 0, 0], sizes = [1, 8, 384], strides = [1, 1, 1]} : vector<4x8x384xf32> to vector<1x8x384xf32>
    %412 = vector.shape_cast %411 : vector<1x8x384xf32> to vector<8x384xf32>
    %c0_159 = arith.constant 0 : index
    %c14 = arith.constant 14 : index
    %413 = memref.load %arg3[%c0_159, %c14] : memref<4x32xf32, #tpu.memory_space<smem>>
    %414 = vector.broadcast %413 : f32 to vector<8x384xf32>
    %415 = arith.mulf %412, %414 : vector<8x384xf32>
    %416 = vector.extract_strided_slice %4 {offsets = [1, 0, 0], sizes = [1, 8, 384], strides = [1, 1, 1]} : vector<4x8x384xf32> to vector<1x8x384xf32>
    %417 = vector.shape_cast %416 : vector<1x8x384xf32> to vector<8x384xf32>
    %c1_160 = arith.constant 1 : index
    %c14_161 = arith.constant 14 : index
    %418 = memref.load %arg3[%c1_160, %c14_161] : memref<4x32xf32, #tpu.memory_space<smem>>
    %419 = vector.broadcast %418 : f32 to vector<8x384xf32>
    %420 = arith.mulf %417, %419 : vector<8x384xf32>
    %421 = arith.addf %415, %420 : vector<8x384xf32>
    %422 = vector.extract_strided_slice %4 {offsets = [2, 0, 0], sizes = [1, 8, 384], strides = [1, 1, 1]} : vector<4x8x384xf32> to vector<1x8x384xf32>
    %423 = vector.shape_cast %422 : vector<1x8x384xf32> to vector<8x384xf32>
    %c2_162 = arith.constant 2 : index
    %c14_163 = arith.constant 14 : index
    %424 = memref.load %arg3[%c2_162, %c14_163] : memref<4x32xf32, #tpu.memory_space<smem>>
    %425 = vector.broadcast %424 : f32 to vector<8x384xf32>
    %426 = arith.mulf %423, %425 : vector<8x384xf32>
    %427 = arith.addf %421, %426 : vector<8x384xf32>
    %428 = vector.extract_strided_slice %4 {offsets = [3, 0, 0], sizes = [1, 8, 384], strides = [1, 1, 1]} : vector<4x8x384xf32> to vector<1x8x384xf32>
    %429 = vector.shape_cast %428 : vector<1x8x384xf32> to vector<8x384xf32>
    %c3_164 = arith.constant 3 : index
    %c14_165 = arith.constant 14 : index
    %430 = memref.load %arg3[%c3_164, %c14_165] : memref<4x32xf32, #tpu.memory_space<smem>>
    %431 = vector.broadcast %430 : f32 to vector<8x384xf32>
    %432 = arith.mulf %429, %431 : vector<8x384xf32>
    %433 = arith.addf %427, %432 : vector<8x384xf32>
    %c14_166 = arith.constant 14 : index
    %434 = memref.load %arg4[%c14_166] : memref<32xf32, #tpu.memory_space<smem>>
    %435 = vector.broadcast %434 : f32 to vector<8x384xf32>
    %436 = arith.addf %433, %435 : vector<8x384xf32>
    %c14_167 = arith.constant 14 : index
    %c0_168 = arith.constant 0 : index
    %c0_169 = arith.constant 0 : index
    %437 = vector.load %arg5[%c14_167, %c0_168, %c0_169] : memref<32x8x384xf32, #tpu.memory_space<vmem>>, vector<1x8x384xf32>
    %438 = vector.shape_cast %437 : vector<1x8x384xf32> to vector<8x384xf32>
    %439 = vector.shape_cast %436 : vector<8x384xf32> to vector<1x8x384xf32>
    tpu.vector_store %arg5[%c14_167, %c0_168, %c0_169], %439 {strides = array<i32>} : memref<32x8x384xf32, #tpu.memory_space<vmem>>, vector<1x8x384xf32>,
    %440 = vector.extract_strided_slice %4 {offsets = [0, 0, 0], sizes = [1, 8, 384], strides = [1, 1, 1]} : vector<4x8x384xf32> to vector<1x8x384xf32>
    %441 = vector.shape_cast %440 : vector<1x8x384xf32> to vector<8x384xf32>
    %c0_170 = arith.constant 0 : index
    %c15 = arith.constant 15 : index
    %442 = memref.load %arg3[%c0_170, %c15] : memref<4x32xf32, #tpu.memory_space<smem>>
    %443 = vector.broadcast %442 : f32 to vector<8x384xf32>
    %444 = arith.mulf %441, %443 : vector<8x384xf32>
    %445 = vector.extract_strided_slice %4 {offsets = [1, 0, 0], sizes = [1, 8, 384], strides = [1, 1, 1]} : vector<4x8x384xf32> to vector<1x8x384xf32>
    %446 = vector.shape_cast %445 : vector<1x8x384xf32> to vector<8x384xf32>
    %c1_171 = arith.constant 1 : index
    %c15_172 = arith.constant 15 : index
    %447 = memref.load %arg3[%c1_171, %c15_172] : memref<4x32xf32, #tpu.memory_space<smem>>
    %448 = vector.broadcast %447 : f32 to vector<8x384xf32>
    %449 = arith.mulf %446, %448 : vector<8x384xf32>
    %450 = arith.addf %444, %449 : vector<8x384xf32>
    %451 = vector.extract_strided_slice %4 {offsets = [2, 0, 0], sizes = [1, 8, 384], strides = [1, 1, 1]} : vector<4x8x384xf32> to vector<1x8x384xf32>
    %452 = vector.shape_cast %451 : vector<1x8x384xf32> to vector<8x384xf32>
    %c2_173 = arith.constant 2 : index
    %c15_174 = arith.constant 15 : index
    %453 = memref.load %arg3[%c2_173, %c15_174] : memref<4x32xf32, #tpu.memory_space<smem>>
    %454 = vector.broadcast %453 : f32 to vector<8x384xf32>
    %455 = arith.mulf %452, %454 : vector<8x384xf32>
    %456 = arith.addf %450, %455 : vector<8x384xf32>
    %457 = vector.extract_strided_slice %4 {offsets = [3, 0, 0], sizes = [1, 8, 384], strides = [1, 1, 1]} : vector<4x8x384xf32> to vector<1x8x384xf32>
    %458 = vector.shape_cast %457 : vector<1x8x384xf32> to vector<8x384xf32>
    %c3_175 = arith.constant 3 : index
    %c15_176 = arith.constant 15 : index
    %459 = memref.load %arg3[%c3_175, %c15_176] : memref<4x32xf32, #tpu.memory_space<smem>>
    %460 = vector.broadcast %459 : f32 to vector<8x384xf32>
    %461 = arith.mulf %458, %460 : vector<8x384xf32>
    %462 = arith.addf %456, %461 : vector<8x384xf32>
    %c15_177 = arith.constant 15 : index
    %463 = memref.load %arg4[%c15_177] : memref<32xf32, #tpu.memory_space<smem>>
    %464 = vector.broadcast %463 : f32 to vector<8x384xf32>
    %465 = arith.addf %462, %464 : vector<8x384xf32>
    %c15_178 = arith.constant 15 : index
    %c0_179 = arith.constant 0 : index
    %c0_180 = arith.constant 0 : index
    %466 = vector.load %arg5[%c15_178, %c0_179, %c0_180] : memref<32x8x384xf32, #tpu.memory_space<vmem>>, vector<1x8x384xf32>
    %467 = vector.shape_cast %466 : vector<1x8x384xf32> to vector<8x384xf32>
    %468 = vector.shape_cast %465 : vector<8x384xf32> to vector<1x8x384xf32>
    tpu.vector_store %arg5[%c15_178, %c0_179, %c0_180], %468 {strides = array<i32>} : memref<32x8x384xf32, #tpu.memory_space<vmem>>, vector<1x8x384xf32>,
    %469 = vector.extract_strided_slice %4 {offsets = [0, 0, 0], sizes = [1, 8, 384], strides = [1, 1, 1]} : vector<4x8x384xf32> to vector<1x8x384xf32>
    %470 = vector.shape_cast %469 : vector<1x8x384xf32> to vector<8x384xf32>
    %c0_181 = arith.constant 0 : index
    %c16 = arith.constant 16 : index
    %471 = memref.load %arg3[%c0_181, %c16] : memref<4x32xf32, #tpu.memory_space<smem>>
    %472 = vector.broadcast %471 : f32 to vector<8x384xf32>
    %473 = arith.mulf %470, %472 : vector<8x384xf32>
    %474 = vector.extract_strided_slice %4 {offsets = [1, 0, 0], sizes = [1, 8, 384], strides = [1, 1, 1]} : vector<4x8x384xf32> to vector<1x8x384xf32>
    %475 = vector.shape_cast %474 : vector<1x8x384xf32> to vector<8x384xf32>
    %c1_182 = arith.constant 1 : index
    %c16_183 = arith.constant 16 : index
    %476 = memref.load %arg3[%c1_182, %c16_183] : memref<4x32xf32, #tpu.memory_space<smem>>
    %477 = vector.broadcast %476 : f32 to vector<8x384xf32>
    %478 = arith.mulf %475, %477 : vector<8x384xf32>
    %479 = arith.addf %473, %478 : vector<8x384xf32>
    %480 = vector.extract_strided_slice %4 {offsets = [2, 0, 0], sizes = [1, 8, 384], strides = [1, 1, 1]} : vector<4x8x384xf32> to vector<1x8x384xf32>
    %481 = vector.shape_cast %480 : vector<1x8x384xf32> to vector<8x384xf32>
    %c2_184 = arith.constant 2 : index
    %c16_185 = arith.constant 16 : index
    %482 = memref.load %arg3[%c2_184, %c16_185] : memref<4x32xf32, #tpu.memory_space<smem>>
    %483 = vector.broadcast %482 : f32 to vector<8x384xf32>
    %484 = arith.mulf %481, %483 : vector<8x384xf32>
    %485 = arith.addf %479, %484 : vector<8x384xf32>
    %486 = vector.extract_strided_slice %4 {offsets = [3, 0, 0], sizes = [1, 8, 384], strides = [1, 1, 1]} : vector<4x8x384xf32> to vector<1x8x384xf32>
    %487 = vector.shape_cast %486 : vector<1x8x384xf32> to vector<8x384xf32>
    %c3_186 = arith.constant 3 : index
    %c16_187 = arith.constant 16 : index
    %488 = memref.load %arg3[%c3_186, %c16_187] : memref<4x32xf32, #tpu.memory_space<smem>>
    %489 = vector.broadcast %488 : f32 to vector<8x384xf32>
    %490 = arith.mulf %487, %489 : vector<8x384xf32>
    %491 = arith.addf %485, %490 : vector<8x384xf32>
    %c16_188 = arith.constant 16 : index
    %492 = memref.load %arg4[%c16_188] : memref<32xf32, #tpu.memory_space<smem>>
    %493 = vector.broadcast %492 : f32 to vector<8x384xf32>
    %494 = arith.addf %491, %493 : vector<8x384xf32>
    %c16_189 = arith.constant 16 : index
    %c0_190 = arith.constant 0 : index
    %c0_191 = arith.constant 0 : index
    %495 = vector.load %arg5[%c16_189, %c0_190, %c0_191] : memref<32x8x384xf32, #tpu.memory_space<vmem>>, vector<1x8x384xf32>
    %496 = vector.shape_cast %495 : vector<1x8x384xf32> to vector<8x384xf32>
    %497 = vector.shape_cast %494 : vector<8x384xf32> to vector<1x8x384xf32>
    tpu.vector_store %arg5[%c16_189, %c0_190, %c0_191], %497 {strides = array<i32>} : memref<32x8x384xf32, #tpu.memory_space<vmem>>, vector<1x8x384xf32>,
    %498 = vector.extract_strided_slice %4 {offsets = [0, 0, 0], sizes = [1, 8, 384], strides = [1, 1, 1]} : vector<4x8x384xf32> to vector<1x8x384xf32>
    %499 = vector.shape_cast %498 : vector<1x8x384xf32> to vector<8x384xf32>
    %c0_192 = arith.constant 0 : index
    %c17 = arith.constant 17 : index
    %500 = memref.load %arg3[%c0_192, %c17] : memref<4x32xf32, #tpu.memory_space<smem>>
    %501 = vector.broadcast %500 : f32 to vector<8x384xf32>
    %502 = arith.mulf %499, %501 : vector<8x384xf32>
    %503 = vector.extract_strided_slice %4 {offsets = [1, 0, 0], sizes = [1, 8, 384], strides = [1, 1, 1]} : vector<4x8x384xf32> to vector<1x8x384xf32>
    %504 = vector.shape_cast %503 : vector<1x8x384xf32> to vector<8x384xf32>
    %c1_193 = arith.constant 1 : index
    %c17_194 = arith.constant 17 : index
    %505 = memref.load %arg3[%c1_193, %c17_194] : memref<4x32xf32, #tpu.memory_space<smem>>
    %506 = vector.broadcast %505 : f32 to vector<8x384xf32>
    %507 = arith.mulf %504, %506 : vector<8x384xf32>
    %508 = arith.addf %502, %507 : vector<8x384xf32>
    %509 = vector.extract_strided_slice %4 {offsets = [2, 0, 0], sizes = [1, 8, 384], strides = [1, 1, 1]} : vector<4x8x384xf32> to vector<1x8x384xf32>
    %510 = vector.shape_cast %509 : vector<1x8x384xf32> to vector<8x384xf32>
    %c2_195 = arith.constant 2 : index
    %c17_196 = arith.constant 17 : index
    %511 = memref.load %arg3[%c2_195, %c17_196] : memref<4x32xf32, #tpu.memory_space<smem>>
    %512 = vector.broadcast %511 : f32 to vector<8x384xf32>
    %513 = arith.mulf %510, %512 : vector<8x384xf32>
    %514 = arith.addf %508, %513 : vector<8x384xf32>
    %515 = vector.extract_strided_slice %4 {offsets = [3, 0, 0], sizes = [1, 8, 384], strides = [1, 1, 1]} : vector<4x8x384xf32> to vector<1x8x384xf32>
    %516 = vector.shape_cast %515 : vector<1x8x384xf32> to vector<8x384xf32>
    %c3_197 = arith.constant 3 : index
    %c17_198 = arith.constant 17 : index
    %517 = memref.load %arg3[%c3_197, %c17_198] : memref<4x32xf32, #tpu.memory_space<smem>>
    %518 = vector.broadcast %517 : f32 to vector<8x384xf32>
    %519 = arith.mulf %516, %518 : vector<8x384xf32>
    %520 = arith.addf %514, %519 : vector<8x384xf32>
    %c17_199 = arith.constant 17 : index
    %521 = memref.load %arg4[%c17_199] : memref<32xf32, #tpu.memory_space<smem>>
    %522 = vector.broadcast %521 : f32 to vector<8x384xf32>
    %523 = arith.addf %520, %522 : vector<8x384xf32>
    %c17_200 = arith.constant 17 : index
    %c0_201 = arith.constant 0 : index
    %c0_202 = arith.constant 0 : index
    %524 = vector.load %arg5[%c17_200, %c0_201, %c0_202] : memref<32x8x384xf32, #tpu.memory_space<vmem>>, vector<1x8x384xf32>
    %525 = vector.shape_cast %524 : vector<1x8x384xf32> to vector<8x384xf32>
    %526 = vector.shape_cast %523 : vector<8x384xf32> to vector<1x8x384xf32>
    tpu.vector_store %arg5[%c17_200, %c0_201, %c0_202], %526 {strides = array<i32>} : memref<32x8x384xf32, #tpu.memory_space<vmem>>, vector<1x8x384xf32>,
    %527 = vector.extract_strided_slice %4 {offsets = [0, 0, 0], sizes = [1, 8, 384], strides = [1, 1, 1]} : vector<4x8x384xf32> to vector<1x8x384xf32>
    %528 = vector.shape_cast %527 : vector<1x8x384xf32> to vector<8x384xf32>
    %c0_203 = arith.constant 0 : index
    %c18 = arith.constant 18 : index
    %529 = memref.load %arg3[%c0_203, %c18] : memref<4x32xf32, #tpu.memory_space<smem>>
    %530 = vector.broadcast %529 : f32 to vector<8x384xf32>
    %531 = arith.mulf %528, %530 : vector<8x384xf32>
    %532 = vector.extract_strided_slice %4 {offsets = [1, 0, 0], sizes = [1, 8, 384], strides = [1, 1, 1]} : vector<4x8x384xf32> to vector<1x8x384xf32>
    %533 = vector.shape_cast %532 : vector<1x8x384xf32> to vector<8x384xf32>
    %c1_204 = arith.constant 1 : index
    %c18_205 = arith.constant 18 : index
    %534 = memref.load %arg3[%c1_204, %c18_205] : memref<4x32xf32, #tpu.memory_space<smem>>
    %535 = vector.broadcast %534 : f32 to vector<8x384xf32>
    %536 = arith.mulf %533, %535 : vector<8x384xf32>
    %537 = arith.addf %531, %536 : vector<8x384xf32>
    %538 = vector.extract_strided_slice %4 {offsets = [2, 0, 0], sizes = [1, 8, 384], strides = [1, 1, 1]} : vector<4x8x384xf32> to vector<1x8x384xf32>
    %539 = vector.shape_cast %538 : vector<1x8x384xf32> to vector<8x384xf32>
    %c2_206 = arith.constant 2 : index
    %c18_207 = arith.constant 18 : index
    %540 = memref.load %arg3[%c2_206, %c18_207] : memref<4x32xf32, #tpu.memory_space<smem>>
    %541 = vector.broadcast %540 : f32 to vector<8x384xf32>
    %542 = arith.mulf %539, %541 : vector<8x384xf32>
    %543 = arith.addf %537, %542 : vector<8x384xf32>
    %544 = vector.extract_strided_slice %4 {offsets = [3, 0, 0], sizes = [1, 8, 384], strides = [1, 1, 1]} : vector<4x8x384xf32> to vector<1x8x384xf32>
    %545 = vector.shape_cast %544 : vector<1x8x384xf32> to vector<8x384xf32>
    %c3_208 = arith.constant 3 : index
    %c18_209 = arith.constant 18 : index
    %546 = memref.load %arg3[%c3_208, %c18_209] : memref<4x32xf32, #tpu.memory_space<smem>>
    %547 = vector.broadcast %546 : f32 to vector<8x384xf32>
    %548 = arith.mulf %545, %547 : vector<8x384xf32>
    %549 = arith.addf %543, %548 : vector<8x384xf32>
    %c18_210 = arith.constant 18 : index
    %550 = memref.load %arg4[%c18_210] : memref<32xf32, #tpu.memory_space<smem>>
    %551 = vector.broadcast %550 : f32 to vector<8x384xf32>
    %552 = arith.addf %549, %551 : vector<8x384xf32>
    %c18_211 = arith.constant 18 : index
    %c0_212 = arith.constant 0 : index
    %c0_213 = arith.constant 0 : index
    %553 = vector.load %arg5[%c18_211, %c0_212, %c0_213] : memref<32x8x384xf32, #tpu.memory_space<vmem>>, vector<1x8x384xf32>
    %554 = vector.shape_cast %553 : vector<1x8x384xf32> to vector<8x384xf32>
    %555 = vector.shape_cast %552 : vector<8x384xf32> to vector<1x8x384xf32>
    tpu.vector_store %arg5[%c18_211, %c0_212, %c0_213], %555 {strides = array<i32>} : memref<32x8x384xf32, #tpu.memory_space<vmem>>, vector<1x8x384xf32>,
    %556 = vector.extract_strided_slice %4 {offsets = [0, 0, 0], sizes = [1, 8, 384], strides = [1, 1, 1]} : vector<4x8x384xf32> to vector<1x8x384xf32>
    %557 = vector.shape_cast %556 : vector<1x8x384xf32> to vector<8x384xf32>
    %c0_214 = arith.constant 0 : index
    %c19 = arith.constant 19 : index
    %558 = memref.load %arg3[%c0_214, %c19] : memref<4x32xf32, #tpu.memory_space<smem>>
    %559 = vector.broadcast %558 : f32 to vector<8x384xf32>
    %560 = arith.mulf %557, %559 : vector<8x384xf32>
    %561 = vector.extract_strided_slice %4 {offsets = [1, 0, 0], sizes = [1, 8, 384], strides = [1, 1, 1]} : vector<4x8x384xf32> to vector<1x8x384xf32>
    %562 = vector.shape_cast %561 : vector<1x8x384xf32> to vector<8x384xf32>
    %c1_215 = arith.constant 1 : index
    %c19_216 = arith.constant 19 : index
    %563 = memref.load %arg3[%c1_215, %c19_216] : memref<4x32xf32, #tpu.memory_space<smem>>
    %564 = vector.broadcast %563 : f32 to vector<8x384xf32>
    %565 = arith.mulf %562, %564 : vector<8x384xf32>
    %566 = arith.addf %560, %565 : vector<8x384xf32>
    %567 = vector.extract_strided_slice %4 {offsets = [2, 0, 0], sizes = [1, 8, 384], strides = [1, 1, 1]} : vector<4x8x384xf32> to vector<1x8x384xf32>
    %568 = vector.shape_cast %567 : vector<1x8x384xf32> to vector<8x384xf32>
    %c2_217 = arith.constant 2 : index
    %c19_218 = arith.constant 19 : index
    %569 = memref.load %arg3[%c2_217, %c19_218] : memref<4x32xf32, #tpu.memory_space<smem>>
    %570 = vector.broadcast %569 : f32 to vector<8x384xf32>
    %571 = arith.mulf %568, %570 : vector<8x384xf32>
    %572 = arith.addf %566, %571 : vector<8x384xf32>
    %573 = vector.extract_strided_slice %4 {offsets = [3, 0, 0], sizes = [1, 8, 384], strides = [1, 1, 1]} : vector<4x8x384xf32> to vector<1x8x384xf32>
    %574 = vector.shape_cast %573 : vector<1x8x384xf32> to vector<8x384xf32>
    %c3_219 = arith.constant 3 : index
    %c19_220 = arith.constant 19 : index
    %575 = memref.load %arg3[%c3_219, %c19_220] : memref<4x32xf32, #tpu.memory_space<smem>>
    %576 = vector.broadcast %575 : f32 to vector<8x384xf32>
    %577 = arith.mulf %574, %576 : vector<8x384xf32>
    %578 = arith.addf %572, %577 : vector<8x384xf32>
    %c19_221 = arith.constant 19 : index
    %579 = memref.load %arg4[%c19_221] : memref<32xf32, #tpu.memory_space<smem>>
    %580 = vector.broadcast %579 : f32 to vector<8x384xf32>
    %581 = arith.addf %578, %580 : vector<8x384xf32>
    %c19_222 = arith.constant 19 : index
    %c0_223 = arith.constant 0 : index
    %c0_224 = arith.constant 0 : index
    %582 = vector.load %arg5[%c19_222, %c0_223, %c0_224] : memref<32x8x384xf32, #tpu.memory_space<vmem>>, vector<1x8x384xf32>
    %583 = vector.shape_cast %582 : vector<1x8x384xf32> to vector<8x384xf32>
    %584 = vector.shape_cast %581 : vector<8x384xf32> to vector<1x8x384xf32>
    tpu.vector_store %arg5[%c19_222, %c0_223, %c0_224], %584 {strides = array<i32>} : memref<32x8x384xf32, #tpu.memory_space<vmem>>, vector<1x8x384xf32>,
    %585 = vector.extract_strided_slice %4 {offsets = [0, 0, 0], sizes = [1, 8, 384], strides = [1, 1, 1]} : vector<4x8x384xf32> to vector<1x8x384xf32>
    %586 = vector.shape_cast %585 : vector<1x8x384xf32> to vector<8x384xf32>
    %c0_225 = arith.constant 0 : index
    %c20 = arith.constant 20 : index
    %587 = memref.load %arg3[%c0_225, %c20] : memref<4x32xf32, #tpu.memory_space<smem>>
    %588 = vector.broadcast %587 : f32 to vector<8x384xf32>
    %589 = arith.mulf %586, %588 : vector<8x384xf32>
    %590 = vector.extract_strided_slice %4 {offsets = [1, 0, 0], sizes = [1, 8, 384], strides = [1, 1, 1]} : vector<4x8x384xf32> to vector<1x8x384xf32>
    %591 = vector.shape_cast %590 : vector<1x8x384xf32> to vector<8x384xf32>
    %c1_226 = arith.constant 1 : index
    %c20_227 = arith.constant 20 : index
    %592 = memref.load %arg3[%c1_226, %c20_227] : memref<4x32xf32, #tpu.memory_space<smem>>
    %593 = vector.broadcast %592 : f32 to vector<8x384xf32>
    %594 = arith.mulf %591, %593 : vector<8x384xf32>
    %595 = arith.addf %589, %594 : vector<8x384xf32>
    %596 = vector.extract_strided_slice %4 {offsets = [2, 0, 0], sizes = [1, 8, 384], strides = [1, 1, 1]} : vector<4x8x384xf32> to vector<1x8x384xf32>
    %597 = vector.shape_cast %596 : vector<1x8x384xf32> to vector<8x384xf32>
    %c2_228 = arith.constant 2 : index
    %c20_229 = arith.constant 20 : index
    %598 = memref.load %arg3[%c2_228, %c20_229] : memref<4x32xf32, #tpu.memory_space<smem>>
    %599 = vector.broadcast %598 : f32 to vector<8x384xf32>
    %600 = arith.mulf %597, %599 : vector<8x384xf32>
    %601 = arith.addf %595, %600 : vector<8x384xf32>
    %602 = vector.extract_strided_slice %4 {offsets = [3, 0, 0], sizes = [1, 8, 384], strides = [1, 1, 1]} : vector<4x8x384xf32> to vector<1x8x384xf32>
    %603 = vector.shape_cast %602 : vector<1x8x384xf32> to vector<8x384xf32>
    %c3_230 = arith.constant 3 : index
    %c20_231 = arith.constant 20 : index
    %604 = memref.load %arg3[%c3_230, %c20_231] : memref<4x32xf32, #tpu.memory_space<smem>>
    %605 = vector.broadcast %604 : f32 to vector<8x384xf32>
    %606 = arith.mulf %603, %605 : vector<8x384xf32>
    %607 = arith.addf %601, %606 : vector<8x384xf32>
    %c20_232 = arith.constant 20 : index
    %608 = memref.load %arg4[%c20_232] : memref<32xf32, #tpu.memory_space<smem>>
    %609 = vector.broadcast %608 : f32 to vector<8x384xf32>
    %610 = arith.addf %607, %609 : vector<8x384xf32>
    %c20_233 = arith.constant 20 : index
    %c0_234 = arith.constant 0 : index
    %c0_235 = arith.constant 0 : index
    %611 = vector.load %arg5[%c20_233, %c0_234, %c0_235] : memref<32x8x384xf32, #tpu.memory_space<vmem>>, vector<1x8x384xf32>
    %612 = vector.shape_cast %611 : vector<1x8x384xf32> to vector<8x384xf32>
    %613 = vector.shape_cast %610 : vector<8x384xf32> to vector<1x8x384xf32>
    tpu.vector_store %arg5[%c20_233, %c0_234, %c0_235], %613 {strides = array<i32>} : memref<32x8x384xf32, #tpu.memory_space<vmem>>, vector<1x8x384xf32>,
    %614 = vector.extract_strided_slice %4 {offsets = [0, 0, 0], sizes = [1, 8, 384], strides = [1, 1, 1]} : vector<4x8x384xf32> to vector<1x8x384xf32>
    %615 = vector.shape_cast %614 : vector<1x8x384xf32> to vector<8x384xf32>
    %c0_236 = arith.constant 0 : index
    %c21 = arith.constant 21 : index
    %616 = memref.load %arg3[%c0_236, %c21] : memref<4x32xf32, #tpu.memory_space<smem>>
    %617 = vector.broadcast %616 : f32 to vector<8x384xf32>
    %618 = arith.mulf %615, %617 : vector<8x384xf32>
    %619 = vector.extract_strided_slice %4 {offsets = [1, 0, 0], sizes = [1, 8, 384], strides = [1, 1, 1]} : vector<4x8x384xf32> to vector<1x8x384xf32>
    %620 = vector.shape_cast %619 : vector<1x8x384xf32> to vector<8x384xf32>
    %c1_237 = arith.constant 1 : index
    %c21_238 = arith.constant 21 : index
    %621 = memref.load %arg3[%c1_237, %c21_238] : memref<4x32xf32, #tpu.memory_space<smem>>
    %622 = vector.broadcast %621 : f32 to vector<8x384xf32>
    %623 = arith.mulf %620, %622 : vector<8x384xf32>
    %624 = arith.addf %618, %623 : vector<8x384xf32>
    %625 = vector.extract_strided_slice %4 {offsets = [2, 0, 0], sizes = [1, 8, 384], strides = [1, 1, 1]} : vector<4x8x384xf32> to vector<1x8x384xf32>
    %626 = vector.shape_cast %625 : vector<1x8x384xf32> to vector<8x384xf32>
    %c2_239 = arith.constant 2 : index
    %c21_240 = arith.constant 21 : index
    %627 = memref.load %arg3[%c2_239, %c21_240] : memref<4x32xf32, #tpu.memory_space<smem>>
    %628 = vector.broadcast %627 : f32 to vector<8x384xf32>
    %629 = arith.mulf %626, %628 : vector<8x384xf32>
    %630 = arith.addf %624, %629 : vector<8x384xf32>
    %631 = vector.extract_strided_slice %4 {offsets = [3, 0, 0], sizes = [1, 8, 384], strides = [1, 1, 1]} : vector<4x8x384xf32> to vector<1x8x384xf32>
    %632 = vector.shape_cast %631 : vector<1x8x384xf32> to vector<8x384xf32>
    %c3_241 = arith.constant 3 : index
    %c21_242 = arith.constant 21 : index
    %633 = memref.load %arg3[%c3_241, %c21_242] : memref<4x32xf32, #tpu.memory_space<smem>>
    %634 = vector.broadcast %633 : f32 to vector<8x384xf32>
    %635 = arith.mulf %632, %634 : vector<8x384xf32>
    %636 = arith.addf %630, %635 : vector<8x384xf32>
    %c21_243 = arith.constant 21 : index
    %637 = memref.load %arg4[%c21_243] : memref<32xf32, #tpu.memory_space<smem>>
    %638 = vector.broadcast %637 : f32 to vector<8x384xf32>
    %639 = arith.addf %636, %638 : vector<8x384xf32>
    %c21_244 = arith.constant 21 : index
    %c0_245 = arith.constant 0 : index
    %c0_246 = arith.constant 0 : index
    %640 = vector.load %arg5[%c21_244, %c0_245, %c0_246] : memref<32x8x384xf32, #tpu.memory_space<vmem>>, vector<1x8x384xf32>
    %641 = vector.shape_cast %640 : vector<1x8x384xf32> to vector<8x384xf32>
    %642 = vector.shape_cast %639 : vector<8x384xf32> to vector<1x8x384xf32>
    tpu.vector_store %arg5[%c21_244, %c0_245, %c0_246], %642 {strides = array<i32>} : memref<32x8x384xf32, #tpu.memory_space<vmem>>, vector<1x8x384xf32>,
    %643 = vector.extract_strided_slice %4 {offsets = [0, 0, 0], sizes = [1, 8, 384], strides = [1, 1, 1]} : vector<4x8x384xf32> to vector<1x8x384xf32>
    %644 = vector.shape_cast %643 : vector<1x8x384xf32> to vector<8x384xf32>
    %c0_247 = arith.constant 0 : index
    %c22 = arith.constant 22 : index
    %645 = memref.load %arg3[%c0_247, %c22] : memref<4x32xf32, #tpu.memory_space<smem>>
    %646 = vector.broadcast %645 : f32 to vector<8x384xf32>
    %647 = arith.mulf %644, %646 : vector<8x384xf32>
    %648 = vector.extract_strided_slice %4 {offsets = [1, 0, 0], sizes = [1, 8, 384], strides = [1, 1, 1]} : vector<4x8x384xf32> to vector<1x8x384xf32>
    %649 = vector.shape_cast %648 : vector<1x8x384xf32> to vector<8x384xf32>
    %c1_248 = arith.constant 1 : index
    %c22_249 = arith.constant 22 : index
    %650 = memref.load %arg3[%c1_248, %c22_249] : memref<4x32xf32, #tpu.memory_space<smem>>
    %651 = vector.broadcast %650 : f32 to vector<8x384xf32>
    %652 = arith.mulf %649, %651 : vector<8x384xf32>
    %653 = arith.addf %647, %652 : vector<8x384xf32>
    %654 = vector.extract_strided_slice %4 {offsets = [2, 0, 0], sizes = [1, 8, 384], strides = [1, 1, 1]} : vector<4x8x384xf32> to vector<1x8x384xf32>
    %655 = vector.shape_cast %654 : vector<1x8x384xf32> to vector<8x384xf32>
    %c2_250 = arith.constant 2 : index
    %c22_251 = arith.constant 22 : index
    %656 = memref.load %arg3[%c2_250, %c22_251] : memref<4x32xf32, #tpu.memory_space<smem>>
    %657 = vector.broadcast %656 : f32 to vector<8x384xf32>
    %658 = arith.mulf %655, %657 : vector<8x384xf32>
    %659 = arith.addf %653, %658 : vector<8x384xf32>
    %660 = vector.extract_strided_slice %4 {offsets = [3, 0, 0], sizes = [1, 8, 384], strides = [1, 1, 1]} : vector<4x8x384xf32> to vector<1x8x384xf32>
    %661 = vector.shape_cast %660 : vector<1x8x384xf32> to vector<8x384xf32>
    %c3_252 = arith.constant 3 : index
    %c22_253 = arith.constant 22 : index
    %662 = memref.load %arg3[%c3_252, %c22_253] : memref<4x32xf32, #tpu.memory_space<smem>>
    %663 = vector.broadcast %662 : f32 to vector<8x384xf32>
    %664 = arith.mulf %661, %663 : vector<8x384xf32>
    %665 = arith.addf %659, %664 : vector<8x384xf32>
    %c22_254 = arith.constant 22 : index
    %666 = memref.load %arg4[%c22_254] : memref<32xf32, #tpu.memory_space<smem>>
    %667 = vector.broadcast %666 : f32 to vector<8x384xf32>
    %668 = arith.addf %665, %667 : vector<8x384xf32>
    %c22_255 = arith.constant 22 : index
    %c0_256 = arith.constant 0 : index
    %c0_257 = arith.constant 0 : index
    %669 = vector.load %arg5[%c22_255, %c0_256, %c0_257] : memref<32x8x384xf32, #tpu.memory_space<vmem>>, vector<1x8x384xf32>
    %670 = vector.shape_cast %669 : vector<1x8x384xf32> to vector<8x384xf32>
    %671 = vector.shape_cast %668 : vector<8x384xf32> to vector<1x8x384xf32>
    tpu.vector_store %arg5[%c22_255, %c0_256, %c0_257], %671 {strides = array<i32>} : memref<32x8x384xf32, #tpu.memory_space<vmem>>, vector<1x8x384xf32>,
    %672 = vector.extract_strided_slice %4 {offsets = [0, 0, 0], sizes = [1, 8, 384], strides = [1, 1, 1]} : vector<4x8x384xf32> to vector<1x8x384xf32>
    %673 = vector.shape_cast %672 : vector<1x8x384xf32> to vector<8x384xf32>
    %c0_258 = arith.constant 0 : index
    %c23 = arith.constant 23 : index
    %674 = memref.load %arg3[%c0_258, %c23] : memref<4x32xf32, #tpu.memory_space<smem>>
    %675 = vector.broadcast %674 : f32 to vector<8x384xf32>
    %676 = arith.mulf %673, %675 : vector<8x384xf32>
    %677 = vector.extract_strided_slice %4 {offsets = [1, 0, 0], sizes = [1, 8, 384], strides = [1, 1, 1]} : vector<4x8x384xf32> to vector<1x8x384xf32>
    %678 = vector.shape_cast %677 : vector<1x8x384xf32> to vector<8x384xf32>
    %c1_259 = arith.constant 1 : index
    %c23_260 = arith.constant 23 : index
    %679 = memref.load %arg3[%c1_259, %c23_260] : memref<4x32xf32, #tpu.memory_space<smem>>
    %680 = vector.broadcast %679 : f32 to vector<8x384xf32>
    %681 = arith.mulf %678, %680 : vector<8x384xf32>
    %682 = arith.addf %676, %681 : vector<8x384xf32>
    %683 = vector.extract_strided_slice %4 {offsets = [2, 0, 0], sizes = [1, 8, 384], strides = [1, 1, 1]} : vector<4x8x384xf32> to vector<1x8x384xf32>
    %684 = vector.shape_cast %683 : vector<1x8x384xf32> to vector<8x384xf32>
    %c2_261 = arith.constant 2 : index
    %c23_262 = arith.constant 23 : index
    %685 = memref.load %arg3[%c2_261, %c23_262] : memref<4x32xf32, #tpu.memory_space<smem>>
    %686 = vector.broadcast %685 : f32 to vector<8x384xf32>
    %687 = arith.mulf %684, %686 : vector<8x384xf32>
    %688 = arith.addf %682, %687 : vector<8x384xf32>
    %689 = vector.extract_strided_slice %4 {offsets = [3, 0, 0], sizes = [1, 8, 384], strides = [1, 1, 1]} : vector<4x8x384xf32> to vector<1x8x384xf32>
    %690 = vector.shape_cast %689 : vector<1x8x384xf32> to vector<8x384xf32>
    %c3_263 = arith.constant 3 : index
    %c23_264 = arith.constant 23 : index
    %691 = memref.load %arg3[%c3_263, %c23_264] : memref<4x32xf32, #tpu.memory_space<smem>>
    %692 = vector.broadcast %691 : f32 to vector<8x384xf32>
    %693 = arith.mulf %690, %692 : vector<8x384xf32>
    %694 = arith.addf %688, %693 : vector<8x384xf32>
    %c23_265 = arith.constant 23 : index
    %695 = memref.load %arg4[%c23_265] : memref<32xf32, #tpu.memory_space<smem>>
    %696 = vector.broadcast %695 : f32 to vector<8x384xf32>
    %697 = arith.addf %694, %696 : vector<8x384xf32>
    %c23_266 = arith.constant 23 : index
    %c0_267 = arith.constant 0 : index
    %c0_268 = arith.constant 0 : index
    %698 = vector.load %arg5[%c23_266, %c0_267, %c0_268] : memref<32x8x384xf32, #tpu.memory_space<vmem>>, vector<1x8x384xf32>
    %699 = vector.shape_cast %698 : vector<1x8x384xf32> to vector<8x384xf32>
    %700 = vector.shape_cast %697 : vector<8x384xf32> to vector<1x8x384xf32>
    tpu.vector_store %arg5[%c23_266, %c0_267, %c0_268], %700 {strides = array<i32>} : memref<32x8x384xf32, #tpu.memory_space<vmem>>, vector<1x8x384xf32>,
    %701 = vector.extract_strided_slice %4 {offsets = [0, 0, 0], sizes = [1, 8, 384], strides = [1, 1, 1]} : vector<4x8x384xf32> to vector<1x8x384xf32>
    %702 = vector.shape_cast %701 : vector<1x8x384xf32> to vector<8x384xf32>
    %c0_269 = arith.constant 0 : index
    %c24 = arith.constant 24 : index
    %703 = memref.load %arg3[%c0_269, %c24] : memref<4x32xf32, #tpu.memory_space<smem>>
    %704 = vector.broadcast %703 : f32 to vector<8x384xf32>
    %705 = arith.mulf %702, %704 : vector<8x384xf32>
    %706 = vector.extract_strided_slice %4 {offsets = [1, 0, 0], sizes = [1, 8, 384], strides = [1, 1, 1]} : vector<4x8x384xf32> to vector<1x8x384xf32>
    %707 = vector.shape_cast %706 : vector<1x8x384xf32> to vector<8x384xf32>
    %c1_270 = arith.constant 1 : index
    %c24_271 = arith.constant 24 : index
    %708 = memref.load %arg3[%c1_270, %c24_271] : memref<4x32xf32, #tpu.memory_space<smem>>
    %709 = vector.broadcast %708 : f32 to vector<8x384xf32>
    %710 = arith.mulf %707, %709 : vector<8x384xf32>
    %711 = arith.addf %705, %710 : vector<8x384xf32>
    %712 = vector.extract_strided_slice %4 {offsets = [2, 0, 0], sizes = [1, 8, 384], strides = [1, 1, 1]} : vector<4x8x384xf32> to vector<1x8x384xf32>
    %713 = vector.shape_cast %712 : vector<1x8x384xf32> to vector<8x384xf32>
    %c2_272 = arith.constant 2 : index
    %c24_273 = arith.constant 24 : index
    %714 = memref.load %arg3[%c2_272, %c24_273] : memref<4x32xf32, #tpu.memory_space<smem>>
    %715 = vector.broadcast %714 : f32 to vector<8x384xf32>
    %716 = arith.mulf %713, %715 : vector<8x384xf32>
    %717 = arith.addf %711, %716 : vector<8x384xf32>
    %718 = vector.extract_strided_slice %4 {offsets = [3, 0, 0], sizes = [1, 8, 384], strides = [1, 1, 1]} : vector<4x8x384xf32> to vector<1x8x384xf32>
    %719 = vector.shape_cast %718 : vector<1x8x384xf32> to vector<8x384xf32>
    %c3_274 = arith.constant 3 : index
    %c24_275 = arith.constant 24 : index
    %720 = memref.load %arg3[%c3_274, %c24_275] : memref<4x32xf32, #tpu.memory_space<smem>>
    %721 = vector.broadcast %720 : f32 to vector<8x384xf32>
    %722 = arith.mulf %719, %721 : vector<8x384xf32>
    %723 = arith.addf %717, %722 : vector<8x384xf32>
    %c24_276 = arith.constant 24 : index
    %724 = memref.load %arg4[%c24_276] : memref<32xf32, #tpu.memory_space<smem>>
    %725 = vector.broadcast %724 : f32 to vector<8x384xf32>
    %726 = arith.addf %723, %725 : vector<8x384xf32>
    %c24_277 = arith.constant 24 : index
    %c0_278 = arith.constant 0 : index
    %c0_279 = arith.constant 0 : index
    %727 = vector.load %arg5[%c24_277, %c0_278, %c0_279] : memref<32x8x384xf32, #tpu.memory_space<vmem>>, vector<1x8x384xf32>
    %728 = vector.shape_cast %727 : vector<1x8x384xf32> to vector<8x384xf32>
    %729 = vector.shape_cast %726 : vector<8x384xf32> to vector<1x8x384xf32>
    tpu.vector_store %arg5[%c24_277, %c0_278, %c0_279], %729 {strides = array<i32>} : memref<32x8x384xf32, #tpu.memory_space<vmem>>, vector<1x8x384xf32>,
    %730 = vector.extract_strided_slice %4 {offsets = [0, 0, 0], sizes = [1, 8, 384], strides = [1, 1, 1]} : vector<4x8x384xf32> to vector<1x8x384xf32>
    %731 = vector.shape_cast %730 : vector<1x8x384xf32> to vector<8x384xf32>
    %c0_280 = arith.constant 0 : index
    %c25 = arith.constant 25 : index
    %732 = memref.load %arg3[%c0_280, %c25] : memref<4x32xf32, #tpu.memory_space<smem>>
    %733 = vector.broadcast %732 : f32 to vector<8x384xf32>
    %734 = arith.mulf %731, %733 : vector<8x384xf32>
    %735 = vector.extract_strided_slice %4 {offsets = [1, 0, 0], sizes = [1, 8, 384], strides = [1, 1, 1]} : vector<4x8x384xf32> to vector<1x8x384xf32>
    %736 = vector.shape_cast %735 : vector<1x8x384xf32> to vector<8x384xf32>
    %c1_281 = arith.constant 1 : index
    %c25_282 = arith.constant 25 : index
    %737 = memref.load %arg3[%c1_281, %c25_282] : memref<4x32xf32, #tpu.memory_space<smem>>
    %738 = vector.broadcast %737 : f32 to vector<8x384xf32>
    %739 = arith.mulf %736, %738 : vector<8x384xf32>
    %740 = arith.addf %734, %739 : vector<8x384xf32>
    %741 = vector.extract_strided_slice %4 {offsets = [2, 0, 0], sizes = [1, 8, 384], strides = [1, 1, 1]} : vector<4x8x384xf32> to vector<1x8x384xf32>
    %742 = vector.shape_cast %741 : vector<1x8x384xf32> to vector<8x384xf32>
    %c2_283 = arith.constant 2 : index
    %c25_284 = arith.constant 25 : index
    %743 = memref.load %arg3[%c2_283, %c25_284] : memref<4x32xf32, #tpu.memory_space<smem>>
    %744 = vector.broadcast %743 : f32 to vector<8x384xf32>
    %745 = arith.mulf %742, %744 : vector<8x384xf32>
    %746 = arith.addf %740, %745 : vector<8x384xf32>
    %747 = vector.extract_strided_slice %4 {offsets = [3, 0, 0], sizes = [1, 8, 384], strides = [1, 1, 1]} : vector<4x8x384xf32> to vector<1x8x384xf32>
    %748 = vector.shape_cast %747 : vector<1x8x384xf32> to vector<8x384xf32>
    %c3_285 = arith.constant 3 : index
    %c25_286 = arith.constant 25 : index
    %749 = memref.load %arg3[%c3_285, %c25_286] : memref<4x32xf32, #tpu.memory_space<smem>>
    %750 = vector.broadcast %749 : f32 to vector<8x384xf32>
    %751 = arith.mulf %748, %750 : vector<8x384xf32>
    %752 = arith.addf %746, %751 : vector<8x384xf32>
    %c25_287 = arith.constant 25 : index
    %753 = memref.load %arg4[%c25_287] : memref<32xf32, #tpu.memory_space<smem>>
    %754 = vector.broadcast %753 : f32 to vector<8x384xf32>
    %755 = arith.addf %752, %754 : vector<8x384xf32>
    %c25_288 = arith.constant 25 : index
    %c0_289 = arith.constant 0 : index
    %c0_290 = arith.constant 0 : index
    %756 = vector.load %arg5[%c25_288, %c0_289, %c0_290] : memref<32x8x384xf32, #tpu.memory_space<vmem>>, vector<1x8x384xf32>
    %757 = vector.shape_cast %756 : vector<1x8x384xf32> to vector<8x384xf32>
    %758 = vector.shape_cast %755 : vector<8x384xf32> to vector<1x8x384xf32>
    tpu.vector_store %arg5[%c25_288, %c0_289, %c0_290], %758 {strides = array<i32>} : memref<32x8x384xf32, #tpu.memory_space<vmem>>, vector<1x8x384xf32>,
    %759 = vector.extract_strided_slice %4 {offsets = [0, 0, 0], sizes = [1, 8, 384], strides = [1, 1, 1]} : vector<4x8x384xf32> to vector<1x8x384xf32>
    %760 = vector.shape_cast %759 : vector<1x8x384xf32> to vector<8x384xf32>
    %c0_291 = arith.constant 0 : index
    %c26 = arith.constant 26 : index
    %761 = memref.load %arg3[%c0_291, %c26] : memref<4x32xf32, #tpu.memory_space<smem>>
    %762 = vector.broadcast %761 : f32 to vector<8x384xf32>
    %763 = arith.mulf %760, %762 : vector<8x384xf32>
    %764 = vector.extract_strided_slice %4 {offsets = [1, 0, 0], sizes = [1, 8, 384], strides = [1, 1, 1]} : vector<4x8x384xf32> to vector<1x8x384xf32>
    %765 = vector.shape_cast %764 : vector<1x8x384xf32> to vector<8x384xf32>
    %c1_292 = arith.constant 1 : index
    %c26_293 = arith.constant 26 : index
    %766 = memref.load %arg3[%c1_292, %c26_293] : memref<4x32xf32, #tpu.memory_space<smem>>
    %767 = vector.broadcast %766 : f32 to vector<8x384xf32>
    %768 = arith.mulf %765, %767 : vector<8x384xf32>
    %769 = arith.addf %763, %768 : vector<8x384xf32>
    %770 = vector.extract_strided_slice %4 {offsets = [2, 0, 0], sizes = [1, 8, 384], strides = [1, 1, 1]} : vector<4x8x384xf32> to vector<1x8x384xf32>
    %771 = vector.shape_cast %770 : vector<1x8x384xf32> to vector<8x384xf32>
    %c2_294 = arith.constant 2 : index
    %c26_295 = arith.constant 26 : index
    %772 = memref.load %arg3[%c2_294, %c26_295] : memref<4x32xf32, #tpu.memory_space<smem>>
    %773 = vector.broadcast %772 : f32 to vector<8x384xf32>
    %774 = arith.mulf %771, %773 : vector<8x384xf32>
    %775 = arith.addf %769, %774 : vector<8x384xf32>
    %776 = vector.extract_strided_slice %4 {offsets = [3, 0, 0], sizes = [1, 8, 384], strides = [1, 1, 1]} : vector<4x8x384xf32> to vector<1x8x384xf32>
    %777 = vector.shape_cast %776 : vector<1x8x384xf32> to vector<8x384xf32>
    %c3_296 = arith.constant 3 : index
    %c26_297 = arith.constant 26 : index
    %778 = memref.load %arg3[%c3_296, %c26_297] : memref<4x32xf32, #tpu.memory_space<smem>>
    %779 = vector.broadcast %778 : f32 to vector<8x384xf32>
    %780 = arith.mulf %777, %779 : vector<8x384xf32>
    %781 = arith.addf %775, %780 : vector<8x384xf32>
    %c26_298 = arith.constant 26 : index
    %782 = memref.load %arg4[%c26_298] : memref<32xf32, #tpu.memory_space<smem>>
    %783 = vector.broadcast %782 : f32 to vector<8x384xf32>
    %784 = arith.addf %781, %783 : vector<8x384xf32>
    %c26_299 = arith.constant 26 : index
    %c0_300 = arith.constant 0 : index
    %c0_301 = arith.constant 0 : index
    %785 = vector.load %arg5[%c26_299, %c0_300, %c0_301] : memref<32x8x384xf32, #tpu.memory_space<vmem>>, vector<1x8x384xf32>
    %786 = vector.shape_cast %785 : vector<1x8x384xf32> to vector<8x384xf32>
    %787 = vector.shape_cast %784 : vector<8x384xf32> to vector<1x8x384xf32>
    tpu.vector_store %arg5[%c26_299, %c0_300, %c0_301], %787 {strides = array<i32>} : memref<32x8x384xf32, #tpu.memory_space<vmem>>, vector<1x8x384xf32>,
    %788 = vector.extract_strided_slice %4 {offsets = [0, 0, 0], sizes = [1, 8, 384], strides = [1, 1, 1]} : vector<4x8x384xf32> to vector<1x8x384xf32>
    %789 = vector.shape_cast %788 : vector<1x8x384xf32> to vector<8x384xf32>
    %c0_302 = arith.constant 0 : index
    %c27 = arith.constant 27 : index
    %790 = memref.load %arg3[%c0_302, %c27] : memref<4x32xf32, #tpu.memory_space<smem>>
    %791 = vector.broadcast %790 : f32 to vector<8x384xf32>
    %792 = arith.mulf %789, %791 : vector<8x384xf32>
    %793 = vector.extract_strided_slice %4 {offsets = [1, 0, 0], sizes = [1, 8, 384], strides = [1, 1, 1]} : vector<4x8x384xf32> to vector<1x8x384xf32>
    %794 = vector.shape_cast %793 : vector<1x8x384xf32> to vector<8x384xf32>
    %c1_303 = arith.constant 1 : index
    %c27_304 = arith.constant 27 : index
    %795 = memref.load %arg3[%c1_303, %c27_304] : memref<4x32xf32, #tpu.memory_space<smem>>
    %796 = vector.broadcast %795 : f32 to vector<8x384xf32>
    %797 = arith.mulf %794, %796 : vector<8x384xf32>
    %798 = arith.addf %792, %797 : vector<8x384xf32>
    %799 = vector.extract_strided_slice %4 {offsets = [2, 0, 0], sizes = [1, 8, 384], strides = [1, 1, 1]} : vector<4x8x384xf32> to vector<1x8x384xf32>
    %800 = vector.shape_cast %799 : vector<1x8x384xf32> to vector<8x384xf32>
    %c2_305 = arith.constant 2 : index
    %c27_306 = arith.constant 27 : index
    %801 = memref.load %arg3[%c2_305, %c27_306] : memref<4x32xf32, #tpu.memory_space<smem>>
    %802 = vector.broadcast %801 : f32 to vector<8x384xf32>
    %803 = arith.mulf %800, %802 : vector<8x384xf32>
    %804 = arith.addf %798, %803 : vector<8x384xf32>
    %805 = vector.extract_strided_slice %4 {offsets = [3, 0, 0], sizes = [1, 8, 384], strides = [1, 1, 1]} : vector<4x8x384xf32> to vector<1x8x384xf32>
    %806 = vector.shape_cast %805 : vector<1x8x384xf32> to vector<8x384xf32>
    %c3_307 = arith.constant 3 : index
    %c27_308 = arith.constant 27 : index
    %807 = memref.load %arg3[%c3_307, %c27_308] : memref<4x32xf32, #tpu.memory_space<smem>>
    %808 = vector.broadcast %807 : f32 to vector<8x384xf32>
    %809 = arith.mulf %806, %808 : vector<8x384xf32>
    %810 = arith.addf %804, %809 : vector<8x384xf32>
    %c27_309 = arith.constant 27 : index
    %811 = memref.load %arg4[%c27_309] : memref<32xf32, #tpu.memory_space<smem>>
    %812 = vector.broadcast %811 : f32 to vector<8x384xf32>
    %813 = arith.addf %810, %812 : vector<8x384xf32>
    %c27_310 = arith.constant 27 : index
    %c0_311 = arith.constant 0 : index
    %c0_312 = arith.constant 0 : index
    %814 = vector.load %arg5[%c27_310, %c0_311, %c0_312] : memref<32x8x384xf32, #tpu.memory_space<vmem>>, vector<1x8x384xf32>
    %815 = vector.shape_cast %814 : vector<1x8x384xf32> to vector<8x384xf32>
    %816 = vector.shape_cast %813 : vector<8x384xf32> to vector<1x8x384xf32>
    tpu.vector_store %arg5[%c27_310, %c0_311, %c0_312], %816 {strides = array<i32>} : memref<32x8x384xf32, #tpu.memory_space<vmem>>, vector<1x8x384xf32>,
    %817 = vector.extract_strided_slice %4 {offsets = [0, 0, 0], sizes = [1, 8, 384], strides = [1, 1, 1]} : vector<4x8x384xf32> to vector<1x8x384xf32>
    %818 = vector.shape_cast %817 : vector<1x8x384xf32> to vector<8x384xf32>
    %c0_313 = arith.constant 0 : index
    %c28 = arith.constant 28 : index
    %819 = memref.load %arg3[%c0_313, %c28] : memref<4x32xf32, #tpu.memory_space<smem>>
    %820 = vector.broadcast %819 : f32 to vector<8x384xf32>
    %821 = arith.mulf %818, %820 : vector<8x384xf32>
    %822 = vector.extract_strided_slice %4 {offsets = [1, 0, 0], sizes = [1, 8, 384], strides = [1, 1, 1]} : vector<4x8x384xf32> to vector<1x8x384xf32>
    %823 = vector.shape_cast %822 : vector<1x8x384xf32> to vector<8x384xf32>
    %c1_314 = arith.constant 1 : index
    %c28_315 = arith.constant 28 : index
    %824 = memref.load %arg3[%c1_314, %c28_315] : memref<4x32xf32, #tpu.memory_space<smem>>
    %825 = vector.broadcast %824 : f32 to vector<8x384xf32>
    %826 = arith.mulf %823, %825 : vector<8x384xf32>
    %827 = arith.addf %821, %826 : vector<8x384xf32>
    %828 = vector.extract_strided_slice %4 {offsets = [2, 0, 0], sizes = [1, 8, 384], strides = [1, 1, 1]} : vector<4x8x384xf32> to vector<1x8x384xf32>
    %829 = vector.shape_cast %828 : vector<1x8x384xf32> to vector<8x384xf32>
    %c2_316 = arith.constant 2 : index
    %c28_317 = arith.constant 28 : index
    %830 = memref.load %arg3[%c2_316, %c28_317] : memref<4x32xf32, #tpu.memory_space<smem>>
    %831 = vector.broadcast %830 : f32 to vector<8x384xf32>
    %832 = arith.mulf %829, %831 : vector<8x384xf32>
    %833 = arith.addf %827, %832 : vector<8x384xf32>
    %834 = vector.extract_strided_slice %4 {offsets = [3, 0, 0], sizes = [1, 8, 384], strides = [1, 1, 1]} : vector<4x8x384xf32> to vector<1x8x384xf32>
    %835 = vector.shape_cast %834 : vector<1x8x384xf32> to vector<8x384xf32>
    %c3_318 = arith.constant 3 : index
    %c28_319 = arith.constant 28 : index
    %836 = memref.load %arg3[%c3_318, %c28_319] : memref<4x32xf32, #tpu.memory_space<smem>>
    %837 = vector.broadcast %836 : f32 to vector<8x384xf32>
    %838 = arith.mulf %835, %837 : vector<8x384xf32>
    %839 = arith.addf %833, %838 : vector<8x384xf32>
    %c28_320 = arith.constant 28 : index
    %840 = memref.load %arg4[%c28_320] : memref<32xf32, #tpu.memory_space<smem>>
    %841 = vector.broadcast %840 : f32 to vector<8x384xf32>
    %842 = arith.addf %839, %841 : vector<8x384xf32>
    %c28_321 = arith.constant 28 : index
    %c0_322 = arith.constant 0 : index
    %c0_323 = arith.constant 0 : index
    %843 = vector.load %arg5[%c28_321, %c0_322, %c0_323] : memref<32x8x384xf32, #tpu.memory_space<vmem>>, vector<1x8x384xf32>
    %844 = vector.shape_cast %843 : vector<1x8x384xf32> to vector<8x384xf32>
    %845 = vector.shape_cast %842 : vector<8x384xf32> to vector<1x8x384xf32>
    tpu.vector_store %arg5[%c28_321, %c0_322, %c0_323], %845 {strides = array<i32>} : memref<32x8x384xf32, #tpu.memory_space<vmem>>, vector<1x8x384xf32>,
    %846 = vector.extract_strided_slice %4 {offsets = [0, 0, 0], sizes = [1, 8, 384], strides = [1, 1, 1]} : vector<4x8x384xf32> to vector<1x8x384xf32>
    %847 = vector.shape_cast %846 : vector<1x8x384xf32> to vector<8x384xf32>
    %c0_324 = arith.constant 0 : index
    %c29 = arith.constant 29 : index
    %848 = memref.load %arg3[%c0_324, %c29] : memref<4x32xf32, #tpu.memory_space<smem>>
    %849 = vector.broadcast %848 : f32 to vector<8x384xf32>
    %850 = arith.mulf %847, %849 : vector<8x384xf32>
    %851 = vector.extract_strided_slice %4 {offsets = [1, 0, 0], sizes = [1, 8, 384], strides = [1, 1, 1]} : vector<4x8x384xf32> to vector<1x8x384xf32>
    %852 = vector.shape_cast %851 : vector<1x8x384xf32> to vector<8x384xf32>
    %c1_325 = arith.constant 1 : index
    %c29_326 = arith.constant 29 : index
    %853 = memref.load %arg3[%c1_325, %c29_326] : memref<4x32xf32, #tpu.memory_space<smem>>
    %854 = vector.broadcast %853 : f32 to vector<8x384xf32>
    %855 = arith.mulf %852, %854 : vector<8x384xf32>
    %856 = arith.addf %850, %855 : vector<8x384xf32>
    %857 = vector.extract_strided_slice %4 {offsets = [2, 0, 0], sizes = [1, 8, 384], strides = [1, 1, 1]} : vector<4x8x384xf32> to vector<1x8x384xf32>
    %858 = vector.shape_cast %857 : vector<1x8x384xf32> to vector<8x384xf32>
    %c2_327 = arith.constant 2 : index
    %c29_328 = arith.constant 29 : index
    %859 = memref.load %arg3[%c2_327, %c29_328] : memref<4x32xf32, #tpu.memory_space<smem>>
    %860 = vector.broadcast %859 : f32 to vector<8x384xf32>
    %861 = arith.mulf %858, %860 : vector<8x384xf32>
    %862 = arith.addf %856, %861 : vector<8x384xf32>
    %863 = vector.extract_strided_slice %4 {offsets = [3, 0, 0], sizes = [1, 8, 384], strides = [1, 1, 1]} : vector<4x8x384xf32> to vector<1x8x384xf32>
    %864 = vector.shape_cast %863 : vector<1x8x384xf32> to vector<8x384xf32>
    %c3_329 = arith.constant 3 : index
    %c29_330 = arith.constant 29 : index
    %865 = memref.load %arg3[%c3_329, %c29_330] : memref<4x32xf32, #tpu.memory_space<smem>>
    %866 = vector.broadcast %865 : f32 to vector<8x384xf32>
    %867 = arith.mulf %864, %866 : vector<8x384xf32>
    %868 = arith.addf %862, %867 : vector<8x384xf32>
    %c29_331 = arith.constant 29 : index
    %869 = memref.load %arg4[%c29_331] : memref<32xf32, #tpu.memory_space<smem>>
    %870 = vector.broadcast %869 : f32 to vector<8x384xf32>
    %871 = arith.addf %868, %870 : vector<8x384xf32>
    %c29_332 = arith.constant 29 : index
    %c0_333 = arith.constant 0 : index
    %c0_334 = arith.constant 0 : index
    %872 = vector.load %arg5[%c29_332, %c0_333, %c0_334] : memref<32x8x384xf32, #tpu.memory_space<vmem>>, vector<1x8x384xf32>
    %873 = vector.shape_cast %872 : vector<1x8x384xf32> to vector<8x384xf32>
    %874 = vector.shape_cast %871 : vector<8x384xf32> to vector<1x8x384xf32>
    tpu.vector_store %arg5[%c29_332, %c0_333, %c0_334], %874 {strides = array<i32>} : memref<32x8x384xf32, #tpu.memory_space<vmem>>, vector<1x8x384xf32>,
    %875 = vector.extract_strided_slice %4 {offsets = [0, 0, 0], sizes = [1, 8, 384], strides = [1, 1, 1]} : vector<4x8x384xf32> to vector<1x8x384xf32>
    %876 = vector.shape_cast %875 : vector<1x8x384xf32> to vector<8x384xf32>
    %c0_335 = arith.constant 0 : index
    %c30 = arith.constant 30 : index
    %877 = memref.load %arg3[%c0_335, %c30] : memref<4x32xf32, #tpu.memory_space<smem>>
    %878 = vector.broadcast %877 : f32 to vector<8x384xf32>
    %879 = arith.mulf %876, %878 : vector<8x384xf32>
    %880 = vector.extract_strided_slice %4 {offsets = [1, 0, 0], sizes = [1, 8, 384], strides = [1, 1, 1]} : vector<4x8x384xf32> to vector<1x8x384xf32>
    %881 = vector.shape_cast %880 : vector<1x8x384xf32> to vector<8x384xf32>
    %c1_336 = arith.constant 1 : index
    %c30_337 = arith.constant 30 : index
    %882 = memref.load %arg3[%c1_336, %c30_337] : memref<4x32xf32, #tpu.memory_space<smem>>
    %883 = vector.broadcast %882 : f32 to vector<8x384xf32>
    %884 = arith.mulf %881, %883 : vector<8x384xf32>
    %885 = arith.addf %879, %884 : vector<8x384xf32>
    %886 = vector.extract_strided_slice %4 {offsets = [2, 0, 0], sizes = [1, 8, 384], strides = [1, 1, 1]} : vector<4x8x384xf32> to vector<1x8x384xf32>
    %887 = vector.shape_cast %886 : vector<1x8x384xf32> to vector<8x384xf32>
    %c2_338 = arith.constant 2 : index
    %c30_339 = arith.constant 30 : index
    %888 = memref.load %arg3[%c2_338, %c30_339] : memref<4x32xf32, #tpu.memory_space<smem>>
    %889 = vector.broadcast %888 : f32 to vector<8x384xf32>
    %890 = arith.mulf %887, %889 : vector<8x384xf32>
    %891 = arith.addf %885, %890 : vector<8x384xf32>
    %892 = vector.extract_strided_slice %4 {offsets = [3, 0, 0], sizes = [1, 8, 384], strides = [1, 1, 1]} : vector<4x8x384xf32> to vector<1x8x384xf32>
    %893 = vector.shape_cast %892 : vector<1x8x384xf32> to vector<8x384xf32>
    %c3_340 = arith.constant 3 : index
    %c30_341 = arith.constant 30 : index
    %894 = memref.load %arg3[%c3_340, %c30_341] : memref<4x32xf32, #tpu.memory_space<smem>>
    %895 = vector.broadcast %894 : f32 to vector<8x384xf32>
    %896 = arith.mulf %893, %895 : vector<8x384xf32>
    %897 = arith.addf %891, %896 : vector<8x384xf32>
    %c30_342 = arith.constant 30 : index
    %898 = memref.load %arg4[%c30_342] : memref<32xf32, #tpu.memory_space<smem>>
    %899 = vector.broadcast %898 : f32 to vector<8x384xf32>
    %900 = arith.addf %897, %899 : vector<8x384xf32>
    %c30_343 = arith.constant 30 : index
    %c0_344 = arith.constant 0 : index
    %c0_345 = arith.constant 0 : index
    %901 = vector.load %arg5[%c30_343, %c0_344, %c0_345] : memref<32x8x384xf32, #tpu.memory_space<vmem>>, vector<1x8x384xf32>
    %902 = vector.shape_cast %901 : vector<1x8x384xf32> to vector<8x384xf32>
    %903 = vector.shape_cast %900 : vector<8x384xf32> to vector<1x8x384xf32>
    tpu.vector_store %arg5[%c30_343, %c0_344, %c0_345], %903 {strides = array<i32>} : memref<32x8x384xf32, #tpu.memory_space<vmem>>, vector<1x8x384xf32>,
    %904 = vector.extract_strided_slice %4 {offsets = [0, 0, 0], sizes = [1, 8, 384], strides = [1, 1, 1]} : vector<4x8x384xf32> to vector<1x8x384xf32>
    %905 = vector.shape_cast %904 : vector<1x8x384xf32> to vector<8x384xf32>
    %c0_346 = arith.constant 0 : index
    %c31 = arith.constant 31 : index
    %906 = memref.load %arg3[%c0_346, %c31] : memref<4x32xf32, #tpu.memory_space<smem>>
    %907 = vector.broadcast %906 : f32 to vector<8x384xf32>
    %908 = arith.mulf %905, %907 : vector<8x384xf32>
    %909 = vector.extract_strided_slice %4 {offsets = [1, 0, 0], sizes = [1, 8, 384], strides = [1, 1, 1]} : vector<4x8x384xf32> to vector<1x8x384xf32>
    %910 = vector.shape_cast %909 : vector<1x8x384xf32> to vector<8x384xf32>
    %c1_347 = arith.constant 1 : index
    %c31_348 = arith.constant 31 : index
    %911 = memref.load %arg3[%c1_347, %c31_348] : memref<4x32xf32, #tpu.memory_space<smem>>
    %912 = vector.broadcast %911 : f32 to vector<8x384xf32>
    %913 = arith.mulf %910, %912 : vector<8x384xf32>
    %914 = arith.addf %908, %913 : vector<8x384xf32>
    %915 = vector.extract_strided_slice %4 {offsets = [2, 0, 0], sizes = [1, 8, 384], strides = [1, 1, 1]} : vector<4x8x384xf32> to vector<1x8x384xf32>
    %916 = vector.shape_cast %915 : vector<1x8x384xf32> to vector<8x384xf32>
    %c2_349 = arith.constant 2 : index
    %c31_350 = arith.constant 31 : index
    %917 = memref.load %arg3[%c2_349, %c31_350] : memref<4x32xf32, #tpu.memory_space<smem>>
    %918 = vector.broadcast %917 : f32 to vector<8x384xf32>
    %919 = arith.mulf %916, %918 : vector<8x384xf32>
    %920 = arith.addf %914, %919 : vector<8x384xf32>
    %921 = vector.extract_strided_slice %4 {offsets = [3, 0, 0], sizes = [1, 8, 384], strides = [1, 1, 1]} : vector<4x8x384xf32> to vector<1x8x384xf32>
    %922 = vector.shape_cast %921 : vector<1x8x384xf32> to vector<8x384xf32>
    %c3_351 = arith.constant 3 : index
    %c31_352 = arith.constant 31 : index
    %923 = memref.load %arg3[%c3_351, %c31_352] : memref<4x32xf32, #tpu.memory_space<smem>>
    %924 = vector.broadcast %923 : f32 to vector<8x384xf32>
    %925 = arith.mulf %922, %924 : vector<8x384xf32>
    %926 = arith.addf %920, %925 : vector<8x384xf32>
    %c31_353 = arith.constant 31 : index
    %927 = memref.load %arg4[%c31_353] : memref<32xf32, #tpu.memory_space<smem>>
    %928 = vector.broadcast %927 : f32 to vector<8x384xf32>
    %929 = arith.addf %926, %928 : vector<8x384xf32>
    %c31_354 = arith.constant 31 : index
    %c0_355 = arith.constant 0 : index
    %c0_356 = arith.constant 0 : index
    %930 = vector.load %arg5[%c31_354, %c0_355, %c0_356] : memref<32x8x384xf32, #tpu.memory_space<vmem>>, vector<1x8x384xf32>
    %931 = vector.shape_cast %930 : vector<1x8x384xf32> to vector<8x384xf32>
    %932 = vector.shape_cast %929 : vector<8x384xf32> to vector<1x8x384xf32>
    tpu.vector_store %arg5[%c31_354, %c0_355, %c0_356], %932 {strides = array<i32>} : memref<32x8x384xf32, #tpu.memory_space<vmem>>, vector<1x8x384xf32>,
    return
  }
  func.func @transform_0(%arg0: i32) -> (i32, i32, i32) {
    %c0_i32 = arith.constant 0 : i32
    %c0_i32_0 = arith.constant 0 : i32
    %c0_i32_1 = arith.constant 0 : i32
    return %c0_i32, %arg0, %c0_i32_0 : i32, i32, i32
  }
  func.func @transform_1(%arg0: i32) -> (i32, i32) {
    %c0_i32 = arith.constant 0 : i32
    %c0_i32_0 = arith.constant 0 : i32
    %c0_i32_1 = arith.constant 0 : i32
    return %c0_i32, %c0_i32_0 : i32, i32
  }
  func.func @transform_2(%arg0: i32) -> (i32, i32) {
    %c0_i32 = arith.constant 0 : i32
    %c0_i32_0 = arith.constant 0 : i32
    %c0_i32_1 = arith.constant 0 : i32
    return %c0_i32, %c0_i32_0 : i32, i32
  }
  func.func @transform_3(%arg0: i32) -> i32 {
    %c0_i32 = arith.constant 0 : i32
    %c0_i32_0 = arith.constant 0 : i32
    return %c0_i32 : i32
  }
  func.func @transform_4(%arg0: i32) -> (i32, i32, i32) {
    %c0_i32 = arith.constant 0 : i32
    %c0_i32_0 = arith.constant 0 : i32
    %c0_i32_1 = arith.constant 0 : i32
    return %c0_i32, %arg0, %c0_i32_0 : i32, i32, i32
  }
}

</mosaic_0001>

<llo_original>
// kernel: tpu_custom_call.1
$region0: #{tpu_custom_call.1}
  #allocation0 [shape = 'u32[]', space=smem, size = 0x4, offset = 0x4, fixed_abs, tag = 'smem constant byte address 0x4 - core index']
  #allocation1 [shape = 'u32[144,128]{1,0:T(1,128)}', space=vmem, size = 0x12000, scoped, tag = 'internal scratch']
  %s0 = inlined_call_operand.hbm [shape: f32[4,16,384], index: 0, kind: input, shape index: {}]
  %s1 = inlined_call_operand.hbm [shape: f32[384,384], index: 1, kind: input, shape index: {}]
  %s2 = inlined_call_operand.hbm [shape: f32[4,32], index: 2, kind: input, shape index: {}]
  %s3 = inlined_call_operand.vmem [shape: f32[32], index: 3, kind: input, shape index: {}]
  %s4 = inlined_call_operand.hbm [shape: f32[32,16,384], index: 4, kind: output, shape index: {}]
  %s5 = sld [smem:[#allocation0]]
  $region65: #{tpu_custom_call.1} parent=0
    _
  %s7 = ssub.s32 1, %s5
  %s8 = scalar_select 0, %s7, %s5
  $region1: #{tpu_custom_call.1} parent=0
    #allocation2 [shape = 'u8[98304]{0}', space=vmem, size = 0x18000, scoped, tag = 'input window, operand 0']
    #allocation3 [shape = 's32[2]{0}', space=sflag, size = 0x8, scoped, tag = 'scoped memory for tpu_custom_call.1']
    #allocation4 [shape = 's32[2]{0}', space=sflag, size = 0x8, scoped, tag = 'scoped memory for tpu_custom_call.1']
    #allocation5 [shape = 's32[2]{0}', space=sflag, size = 0x8, scoped, tag = 'scoped memory for tpu_custom_call.1']
    #allocation6 [shape = 's32[2]{0}', space=sflag, size = 0x8, scoped, tag = 'scoped memory for tpu_custom_call.1']
    #allocation7 [shape = 'u8[589824]{0}', space=vmem, size = 0x90000, scoped, tag = 'input window, operand 1, single buffered']
    #allocation8 [shape = 's32[1]{0}', space=sflag, size = 0x4, scoped, tag = 'scoped memory for tpu_custom_call.1']
    #allocation9 [shape = 'u8[2048]{0}', space=smem, size = 0x800, scoped, tag = 'input window, operand 2, single buffered']
    #allocation10 [shape = 'u8[512]{0}', space=smem, size = 0x200, scoped, tag = 'input window, operand 3, single buffered']
    #allocation11 [shape = 'u8[786432]{0}', space=vmem, size = 0xc0000, scoped, tag = 'output window, operand 0']
    %9 = vsyncpa [#allocation3], 0
    %s10 = scalar_lea.sflag [#allocation3], 1
    %11 = vsyncpa %s10, 0
    %12 = vsyncpa [#allocation8], 0
    %13 = vsyncpa [#allocation5], 0
    %14 = vsyncpa [#allocation6], 0
    %15 = vsyncpa [#allocation4], 0
    %s16 = scalar_lea.sflag [#allocation4], 1
    %17 = vsyncpa %s16, 0
    loop: start=0, step=1, limit=4
    $region2: #{tpu_custom_call.1} parent=1 // loop_pre_header
      _
    $region3: #{tpu_custom_call.1} parent=1 // loop_header
      %s19 = sphi 0, %s23
      %p20 = scmp.ge.s32.totalorder %s19, 4
      %s29 = sphi 0, %s31
      %s32 = sphi 0, %s29
      %s33 = sphi 0, %s32
      %s49 = sphi 0, %s33
      %s53 = sphi 0, %s53
      %s55 = sphi 0, %s53
      %s56 = sphi 0, %s55
      %s70 = sphi 0, %s56
      %s74 = sphi 0, %s74
      %s76 = sphi 0, %s74
      %s77 = sphi 0, %s76
      %s91 = sphi 0, %s77
      %s95 = sphi 0, %s95
      %s97 = sphi 0, %s95
      %s98 = sphi 0, %s97
      %s112 = sphi 0, %s98
      %s118 = sphi 0, %s120
      %s121 = sphi 0, %s118
      %s122 = sphi 0, %s121
      %s138 = sphi 0, %s122
    $region4: #{tpu_custom_call.1} parent=1 // loop_header_branch
      %22 = sbr.rel (%p20) target = $region8
    $region5: #{tpu_custom_call.1} parent=1 // loop_body
      %s24 = ssub.s32 %s19, 1
      %s25 = ssub.s32 %s19, 2
      %s26 = sadd.s32 %s19, 1
      %s27 = ssub.s32 %s19, %s26
      %p28 = scmp.eq.s32.totalorder %s27, 0
      %s30 = sadd.s32 %s29, 1
      %s31 = scalar_select %p28, %s29, %s30
      %p34 = pneg %p28
      %p35 = scmp.eq.s32.totalorder %s19, 1
      %p36 = por %p34, %p35
      %p37 = scmp.ne.s32.totalorder %s29, %s32
      %p38 = scmp.eq.s32.totalorder %s19, 0
      %p39 = por %p37, %p38
      %p40 = scmp.ne.s32.totalorder %s29, %s32
      %p41 = scmp.eq.s32.totalorder %s24, 1
      %p42 = por %p40, %p41
      %p43 = scmp.ne.s32.totalorder %s32, %s33
      %p44 = scmp.eq.s32.totalorder %s24, 0
      %p45 = por %p43, %p44
      %p46 = scmp.ne.s32.totalorder %s32, %s33
      %p47 = scmp.eq.s32.totalorder %s25, 1
      %p48 = por %p46, %p47
      %p50 = scmp.ne.s32.totalorder %s33, %s49
      %p51 = scmp.eq.s32.totalorder %s25, 0
      %p52 = por %p50, %p51
      %s54 = sadd.s32 %s53, 1
      %p57 = scmp.eq.s32.totalorder %s19, 1
      %p58 = scmp.ne.s32.totalorder %s53, %s55
      %p59 = scmp.eq.s32.totalorder %s19, 0
      %p60 = por %p58, %p59
      %p61 = scmp.ne.s32.totalorder %s53, %s55
      %p62 = scmp.eq.s32.totalorder %s24, 1
      %p63 = por %p61, %p62
      %p64 = scmp.ne.s32.totalorder %s55, %s56
      %p65 = scmp.eq.s32.totalorder %s24, 0
      %p66 = por %p64, %p65
      %p67 = scmp.ne.s32.totalorder %s55, %s56
      %p68 = scmp.eq.s32.totalorder %s25, 1
      %p69 = por %p67, %p68
      %p71 = scmp.ne.s32.totalorder %s56, %s70
      %p72 = scmp.eq.s32.totalorder %s25, 0
      %p73 = por %p71, %p72
      %s75 = sadd.s32 %s74, 1
      %p78 = scmp.eq.s32.totalorder %s19, 1
      %p79 = scmp.ne.s32.totalorder %s74, %s76
      %p80 = scmp.eq.s32.totalorder %s19, 0
      %p81 = por %p79, %p80
      %p82 = scmp.ne.s32.totalorder %s74, %s76
      %p83 = scmp.eq.s32.totalorder %s24, 1
      %p84 = por %p82, %p83
      %p85 = scmp.ne.s32.totalorder %s76, %s77
      %p86 = scmp.eq.s32.totalorder %s24, 0
      %p87 = por %p85, %p86
      %p88 = scmp.ne.s32.totalorder %s76, %s77
      %p89 = scmp.eq.s32.totalorder %s25, 1
      %p90 = por %p88, %p89
      %p92 = scmp.ne.s32.totalorder %s77, %s91
      %p93 = scmp.eq.s32.totalorder %s25, 0
      %p94 = por %p92, %p93
      %s96 = sadd.s32 %s95, 1
      %p99 = scmp.eq.s32.totalorder %s19, 1
      %p100 = scmp.ne.s32.totalorder %s95, %s97
      %p101 = scmp.eq.s32.totalorder %s19, 0
      %p102 = por %p100, %p101
      %p103 = scmp.ne.s32.totalorder %s95, %s97
      %p104 = scmp.eq.s32.totalorder %s24, 1
      %p105 = por %p103, %p104
      %p106 = scmp.ne.s32.totalorder %s97, %s98
      %p107 = scmp.eq.s32.totalorder %s24, 0
      %p108 = por %p106, %p107
      %p109 = scmp.ne.s32.totalorder %s97, %s98
      %p110 = scmp.eq.s32.totalorder %s25, 1
      %p111 = por %p109, %p110
      %p113 = scmp.ne.s32.totalorder %s98, %s112
      %p114 = scmp.eq.s32.totalorder %s25, 0
      %p115 = por %p113, %p114
      %s116 = ssub.s32 %s19, %s26
      %p117 = scmp.eq.s32.totalorder %s116, 0
      %s119 = sadd.s32 %s118, 1
      %s120 = scalar_select %p117, %s118, %s119
      %p123 = pneg %p117
      %p124 = scmp.eq.s32.totalorder %s19, 1
      %p125 = por %p123, %p124
      %p126 = scmp.ne.s32.totalorder %s118, %s121
      %p127 = scmp.eq.s32.totalorder %s19, 0
      %p128 = por %p126, %p127
      %p129 = scmp.ne.s32.totalorder %s118, %s121
      %p130 = scmp.eq.s32.totalorder %s24, 1
      %p131 = por %p129, %p130
      %p132 = scmp.ne.s32.totalorder %s121, %s122
      %p133 = scmp.eq.s32.totalorder %s24, 0
      %p134 = por %p132, %p133
      %p135 = scmp.ne.s32.totalorder %s121, %s122
      %p136 = scmp.eq.s32.totalorder %s25, 1
      %p137 = por %p135, %p136
      %p139 = scmp.ne.s32.totalorder %s122, %s138
      %p140 = scmp.eq.s32.totalorder %s25, 0
      %p141 = por %p139, %p140
      %p142 = scmp.le.s32.totalorder 1, %s19
      %p143 = scmp.lt.s32.totalorder %s19, 3
      %p144 = pnand %p142, %p143
      %p145 = pneg %p144
      // Predicated region
      $region9: #{tpu_custom_call.1} parent=5 // pred_check
        _
      $region10: #{tpu_custom_call.1} parent=5 // pred_check_branch
        %147 = sbr.rel (%p144) target = $region12
      $region11: #{tpu_custom_call.1} parent=5 // pred_region
        %s148 = ssub.s32 %s19, 1
        // Predicated region
        $region13: #{tpu_custom_call.1} parent=11 // pred_check
          %p149 = pneg %p66
        $region14: #{tpu_custom_call.1} parent=11 // pred_check_branch
          %151 = sbr.rel (%p149) target = $region16
        $region15: #{tpu_custom_call.1} parent=11 // pred_region
          %s153 = ssub.s32 18432, 18432
          %154 = vsyncadd [#allocation8], %s153
          %s155 = sshll.u32 [#allocation7], 4
          %s156 = int_to_ptr.vmem [resolvable:$true] %s155
          %161 = dma.hbm_to_vmem [thread:$0]  %s1, 18432, %s156, [#allocation8], 384, 384, 24
        $region16: #{tpu_custom_call.1} parent=11 // pred_fallthru
          _
        // Predicated region
        $region17: #{tpu_custom_call.1} parent=11 // pred_check
          %p162 = pneg %p87
        $region18: #{tpu_custom_call.1} parent=11 // pred_check_branch
          %164 = sbr.rel (%p162) target = $region20
        $region19: #{tpu_custom_call.1} parent=11 // pred_region
          %s166 = ssub.s32 64, 64
          %167 = vsyncadd [#allocation5], %s166
          %170 = dma.hbm_to_smem %s2, 64, [#allocation9], [#allocation5]
        $region20: #{tpu_custom_call.1} parent=11 // pred_fallthru
          _
        // Predicated region
        $region21: #{tpu_custom_call.1} parent=11 // pred_check
          %p171 = pneg %p108
        $region22: #{tpu_custom_call.1} parent=11 // pred_check_branch
          %173 = sbr.rel (%p171) target = $region24
        $region23: #{tpu_custom_call.1} parent=11 // pred_region
          %s175 = ssub.s32 16, 16
          %176 = vsyncadd [#allocation6], %s175
          %s178 = sshll.u32 %s3, 4
          %s179 = int_to_ptr.vmem [resolvable:$true] %s178
          %181 = dma.vmem_to_smem %s179, 16, [#allocation10], [#allocation6]
        $region24: #{tpu_custom_call.1} parent=11 // pred_fallthru
          _
      $region12: #{tpu_custom_call.1} parent=5 // pred_fallthru
        _
      %p182 = scmp.lt.s32.totalorder %s19, 2
      // Predicated region
      $region25: #{tpu_custom_call.1} parent=5 // pred_check
        %p183 = pneg %p182
      $region26: #{tpu_custom_call.1} parent=5 // pred_check_branch
        %185 = sbr.rel (%p183) target = $region28
      $region27: #{tpu_custom_call.1} parent=5 // pred_region
        // Predicated region
        $region29: #{tpu_custom_call.1} parent=27 // pred_check
          %p186 = pneg %p39
        $region30: #{tpu_custom_call.1} parent=27 // pred_check_branch
          %188 = sbr.rel (%p186) target = $region32
        $region31: #{tpu_custom_call.1} parent=27 // pred_region
          %s189 = sand.u32 %s29, 1
          %s190 = scalar_lea.sflag [#allocation3], %s189
          %s191 = sand.u32 %s29, 1
          %s192 = smul.addr %s191, 96
          %s193 = scalar_lea.vmem [#allocation2], %s192
          %s195 = ssub.s32 1536, 1536
          %196 = vsyncadd %s190, %s195
          %s197 = smul.addr %s19, 3
          %s198 = smul.addr %s197, 128
          %s199 = scalar_lea.hbm %s0, %s198
          %s200 = sshll.u32 %s193, 4
          %s201 = int_to_ptr.vmem [resolvable:$true] %s200
          %206 = dma.hbm_to_vmem [thread:$0]  %s199, 1536, %s201, %s190, 768, 384, 24
        $region32: #{tpu_custom_call.1} parent=27 // pred_fallthru
          _
      $region28: #{tpu_custom_call.1} parent=5 // pred_fallthru
        _
      %p207 = scmp.le.s32.totalorder 1, %s19
      %p208 = scmp.lt.s32.totalorder %s19, 3
      %p209 = pnand %p207, %p208
      %p210 = pneg %p209
      // Predicated region
      $region33: #{tpu_custom_call.1} parent=5 // pred_check
        _
      $region34: #{tpu_custom_call.1} parent=5 // pred_check_branch
        %212 = sbr.rel (%p209) target = $region36
      $region35: #{tpu_custom_call.1} parent=5 // pred_region
        %s213 = ssub.s32 %s19, 1
        %s214 = sand.u32 %s32, 1
        %s215 = scalar_lea.sflag [#allocation3], %s214
        %s216 = sand.u32 %s32, 1
        %s217 = smul.addr %s216, 96
        %s218 = scalar_lea.vmem [#allocation2], %s217
        // Predicated region
        $region37: #{tpu_custom_call.1} parent=35 // pred_check
          %p219 = pneg %p45
        $region38: #{tpu_custom_call.1} parent=35 // pred_check_branch
          %221 = sbr.rel (%p219) target = $region40
        $region39: #{tpu_custom_call.1} parent=35 // pred_region
          %222 = dma.done %s215, 1536
        $region40: #{tpu_custom_call.1} parent=35 // pred_fallthru
          _
        // Predicated region
        $region41: #{tpu_custom_call.1} parent=35 // pred_check
          %p223 = pneg %p66
        $region42: #{tpu_custom_call.1} parent=35 // pred_check_branch
          %225 = sbr.rel (%p223) target = $region44
        $region43: #{tpu_custom_call.1} parent=35 // pred_region
          %226 = dma.done [#allocation8], 18432
        $region44: #{tpu_custom_call.1} parent=35 // pred_fallthru
          _
        // Predicated region
        $region45: #{tpu_custom_call.1} parent=35 // pred_check
          %p227 = pneg %p87
        $region46: #{tpu_custom_call.1} parent=35 // pred_check_branch
          %229 = sbr.rel (%p227) target = $region48
        $region47: #{tpu_custom_call.1} parent=35 // pred_region
          %230 = dma.done [#allocation5], 64
        $region48: #{tpu_custom_call.1} parent=35 // pred_fallthru
          _
        // Predicated region
        $region49: #{tpu_custom_call.1} parent=35 // pred_check
          %p231 = pneg %p108
        $region50: #{tpu_custom_call.1} parent=35 // pred_check_branch
          %233 = sbr.rel (%p231) target = $region52
        $region51: #{tpu_custom_call.1} parent=35 // pred_region
          %234 = dma.done [#allocation6], 16
        $region52: #{tpu_custom_call.1} parent=35 // pred_fallthru
          _
        %235 = sfence
        %s236 = sand.u32 %s32, 1
        %s237 = scalar_lea.sflag [#allocation3], %s236
        %s238 = sand.u32 %s32, 1
        %s239 = smul.addr %s238, 96
        %s240 = scalar_lea.vmem [#allocation2], %s239
        %p241 = pneg %p45
        %p242 = pneg %p42
        %p243 = pneg %p66
        %p244 = pneg %p63
        %p245 = pneg %p87
        %p246 = pneg %p84
        %p247 = pneg %p108
        %p248 = pneg %p105
        %p249 = pneg %p134
        %p250 = pneg %p131
        %s251 = sand.u32 %s121, 1
        %s252 = scalar_lea.sflag [#allocation4], %s251
        %s253 = sand.u32 %s121, 1
        %s254 = smul.addr %s253, 768
        %s255 = scalar_lea.vmem [#allocation11], %s254
        %v256 = vld [vmem:[%s218] sm:$0xff]
        %v257 = vld [vmem:[%s218 + $0x8] sm:$0xff]
        %v258 = vld [vmem:[%s218 + $0x10] sm:$0xff]
        %v259 = vld [vmem:[%s218 + $0x18] sm:$0xff]
        %v260 = vld [vmem:[%s218 + $0x20] sm:$0xff]
        %v261 = vld [vmem:[%s218 + $0x28] sm:$0xff]
        %v262 = vld [vmem:[%s218 + $0x30] sm:$0xff]
        %v263 = vld [vmem:[%s218 + $0x38] sm:$0xff]
        %v264 = vld [vmem:[%s218 + $0x40] sm:$0xff]
        %v265 = vld [vmem:[%s218 + $0x48] sm:$0xff]
        %v266 = vld [vmem:[%s218 + $0x50] sm:$0xff]
        %v267 = vld [vmem:[%s218 + $0x58] sm:$0xff]
        %v268 = vld [vmem:[#allocation7] sm:$0xff]
        %v269 = vld [vmem:[#allocation7 + $0x8] sm:$0xff]
        %v270 = vld [vmem:[#allocation7 + $0x10] sm:$0xff]
        %v271 = vld [vmem:[#allocation7 + $0x18] sm:$0xff]
        %v272 = vld [vmem:[#allocation7 + $0x20] sm:$0xff]
        %v273 = vld [vmem:[#allocation7 + $0x28] sm:$0xff]
        %v274 = vld [vmem:[#allocation7 + $0x30] sm:$0xff]
        %v275 = vld [vmem:[#allocation7 + $0x38] sm:$0xff]
        %v276 = vld [vmem:[#allocation7 + $0x40] sm:$0xff]
        %v277 = vld [vmem:[#allocation7 + $0x48] sm:$0xff]
        %v278 = vld [vmem:[#allocation7 + $0x50] sm:$0xff]
        %v279 = vld [vmem:[#allocation7 + $0x58] sm:$0xff]
        %v280 = vld [vmem:[#allocation7 + $0x60] sm:$0xff]
        %v281 = vld [vmem:[#allocation7 + $0x68] sm:$0xff]
        %v282 = vld [vmem:[#allocation7 + $0x70] sm:$0xff]
        %v283 = vld [vmem:[#allocation7 + $0x78] sm:$0xff]
        %v284 = vld [vmem:[#allocation7 + $0x80] sm:$0xff]
        %v285 = vld [vmem:[#allocation7 + $0x88] sm:$0xff]
        %v286 = vld [vmem:[#allocation7 + $0x90] sm:$0xff]
        %v287 = vld [vmem:[#allocation7 + $0x98] sm:$0xff]
        %v288 = vld [vmem:[#allocation7 + $0xa0] sm:$0xff]
        %v289 = vld [vmem:[#allocation7 + $0xa8] sm:$0xff]
        %v290 = vld [vmem:[#allocation7 + $0xb0] sm:$0xff]
        %v291 = vld [vmem:[#allocation7 + $0xb8] sm:$0xff]
        %v292 = vld [vmem:[#allocation7 + $0xc0] sm:$0xff]
        %v293 = vld [vmem:[#allocation7 + $0xc8] sm:$0xff]
        %v294 = vld [vmem:[#allocation7 + $0xd0] sm:$0xff]
        %v295 = vld [vmem:[#allocation7 + $0xd8] sm:$0xff]
        %v296 = vld [vmem:[#allocation7 + $0xe0] sm:$0xff]
        %v297 = vld [vmem:[#allocation7 + $0xe8] sm:$0xff]
        %v298 = vld [vmem:[#allocation7 + $0xf0] sm:$0xff]
        %v299 = vld [vmem:[#allocation7 + $0xf8] sm:$0xff]
        %v300 = vld [vmem:[#allocation7 + $0x100] sm:$0xff]
        %v301 = vld [vmem:[#allocation7 + $0x108] sm:$0xff]
        %v302 = vld [vmem:[#allocation7 + $0x110] sm:$0xff]
        %v303 = vld [vmem:[#allocation7 + $0x118] sm:$0xff]
        %v304 = vld [vmem:[#allocation7 + $0x120] sm:$0xff]
        %v305 = vld [vmem:[#allocation7 + $0x128] sm:$0xff]
        %v306 = vld [vmem:[#allocation7 + $0x130] sm:$0xff]
        %v307 = vld [vmem:[#allocation7 + $0x138] sm:$0xff]
        %v308 = vld [vmem:[#allocation7 + $0x140] sm:$0xff]
        %v309 = vld [vmem:[#allocation7 + $0x148] sm:$0xff]
        %v310 = vld [vmem:[#allocation7 + $0x150] sm:$0xff]
        %v311 = vld [vmem:[#allocation7 + $0x158] sm:$0xff]
        %v312 = vld [vmem:[#allocation7 + $0x160] sm:$0xff]
        %v313 = vld [vmem:[#allocation7 + $0x168] sm:$0xff]
        %v314 = vld [vmem:[#allocation7 + $0x170] sm:$0xff]
        %v315 = vld [vmem:[#allocation7 + $0x178] sm:$0xff]
        %v316 = vld [vmem:[#allocation7 + $0x180] sm:$0xff]
        %v317 = vld [vmem:[#allocation7 + $0x188] sm:$0xff]
        %v318 = vld [vmem:[#allocation7 + $0x190] sm:$0xff]
        %v319 = vld [vmem:[#allocation7 + $0x198] sm:$0xff]
        %v320 = vld [vmem:[#allocation7 + $0x1a0] sm:$0xff]
        %v321 = vld [vmem:[#allocation7 + $0x1a8] sm:$0xff]
        %v322 = vld [vmem:[#allocation7 + $0x1b0] sm:$0xff]
        %v323 = vld [vmem:[#allocation7 + $0x1b8] sm:$0xff]
        %v324 = vld [vmem:[#allocation7 + $0x1c0] sm:$0xff]
        %v325 = vld [vmem:[#allocation7 + $0x1c8] sm:$0xff]
        %v326 = vld [vmem:[#allocation7 + $0x1d0] sm:$0xff]
        %v327 = vld [vmem:[#allocation7 + $0x1d8] sm:$0xff]
        %v328 = vld [vmem:[#allocation7 + $0x1e0] sm:$0xff]
        %v329 = vld [vmem:[#allocation7 + $0x1e8] sm:$0xff]
        %v330 = vld [vmem:[#allocation7 + $0x1f0] sm:$0xff]
        %v331 = vld [vmem:[#allocation7 + $0x1f8] sm:$0xff]
        %v332 = vld [vmem:[#allocation7 + $0x200] sm:$0xff]
        %v333 = vld [vmem:[#allocation7 + $0x208] sm:$0xff]
        %v334 = vld [vmem:[#allocation7 + $0x210] sm:$0xff]
        %v335 = vld [vmem:[#allocation7 + $0x218] sm:$0xff]
        %v336 = vld [vmem:[#allocation7 + $0x220] sm:$0xff]
        %v337 = vld [vmem:[#allocation7 + $0x228] sm:$0xff]
        %v338 = vld [vmem:[#allocation7 + $0x230] sm:$0xff]
        %v339 = vld [vmem:[#allocation7 + $0x238] sm:$0xff]
        %v340 = vld [vmem:[#allocation7 + $0x240] sm:$0xff]
        %v341 = vld [vmem:[#allocation7 + $0x248] sm:$0xff]
        %v342 = vld [vmem:[#allocation7 + $0x250] sm:$0xff]
        %v343 = vld [vmem:[#allocation7 + $0x258] sm:$0xff]
        %v344 = vld [vmem:[#allocation7 + $0x260] sm:$0xff]
        %v345 = vld [vmem:[#allocation7 + $0x268] sm:$0xff]
        %v346 = vld [vmem:[#allocation7 + $0x270] sm:$0xff]
        %v347 = vld [vmem:[#allocation7 + $0x278] sm:$0xff]
        %v348 = vld [vmem:[#allocation7 + $0x280] sm:$0xff]
        %v349 = vld [vmem:[#allocation7 + $0x288] sm:$0xff]
        %v350 = vld [vmem:[#allocation7 + $0x290] sm:$0xff]
        %v351 = vld [vmem:[#allocation7 + $0x298] sm:$0xff]
        %v352 = vld [vmem:[#allocation7 + $0x2a0] sm:$0xff]
        %v353 = vld [vmem:[#allocation7 + $0x2a8] sm:$0xff]
        %v354 = vld [vmem:[#allocation7 + $0x2b0] sm:$0xff]
        %v355 = vld [vmem:[#allocation7 + $0x2b8] sm:$0xff]
        %v356 = vld [vmem:[#allocation7 + $0x2c0] sm:$0xff]
        %v357 = vld [vmem:[#allocation7 + $0x2c8] sm:$0xff]
        %v358 = vld [vmem:[#allocation7 + $0x2d0] sm:$0xff]
        %v359 = vld [vmem:[#allocation7 + $0x2d8] sm:$0xff]
        %v360 = vld [vmem:[#allocation7 + $0x2e0] sm:$0xff]
        %v361 = vld [vmem:[#allocation7 + $0x2e8] sm:$0xff]
        %v362 = vld [vmem:[#allocation7 + $0x2f0] sm:$0xff]
        %v363 = vld [vmem:[#allocation7 + $0x2f8] sm:$0xff]
        %v364 = vld [vmem:[#allocation7 + $0x300] sm:$0xff]
        %v365 = vld [vmem:[#allocation7 + $0x308] sm:$0xff]
        %v366 = vld [vmem:[#allocation7 + $0x310] sm:$0xff]
        %v367 = vld [vmem:[#allocation7 + $0x318] sm:$0xff]
        %v368 = vld [vmem:[#allocation7 + $0x320] sm:$0xff]
        %v369 = vld [vmem:[#allocation7 + $0x328] sm:$0xff]
        %v370 = vld [vmem:[#allocation7 + $0x330] sm:$0xff]
        %v371 = vld [vmem:[#allocation7 + $0x338] sm:$0xff]
        %v372 = vld [vmem:[#allocation7 + $0x340] sm:$0xff]
        %v373 = vld [vmem:[#allocation7 + $0x348] sm:$0xff]
        %v374 = vld [vmem:[#allocation7 + $0x350] sm:$0xff]
        %v375 = vld [vmem:[#allocation7 + $0x358] sm:$0xff]
        %v376 = vld [vmem:[#allocation7 + $0x360] sm:$0xff]
        %v377 = vld [vmem:[#allocation7 + $0x368] sm:$0xff]
        %v378 = vld [vmem:[#allocation7 + $0x370] sm:$0xff]
        %v379 = vld [vmem:[#allocation7 + $0x378] sm:$0xff]
        %v380 = vld [vmem:[#allocation7 + $0x380] sm:$0xff]
        %v381 = vld [vmem:[#allocation7 + $0x388] sm:$0xff]
        %v382 = vld [vmem:[#allocation7 + $0x390] sm:$0xff]
        %v383 = vld [vmem:[#allocation7 + $0x398] sm:$0xff]
        %v384 = vld [vmem:[#allocation7 + $0x3a0] sm:$0xff]
        %v385 = vld [vmem:[#allocation7 + $0x3a8] sm:$0xff]
        %v386 = vld [vmem:[#allocation7 + $0x3b0] sm:$0xff]
        %v387 = vld [vmem:[#allocation7 + $0x3b8] sm:$0xff]
        %v388 = vld [vmem:[#allocation7 + $0x3c0] sm:$0xff]
        %v389 = vld [vmem:[#allocation7 + $0x3c8] sm:$0xff]
        %v390 = vld [vmem:[#allocation7 + $0x3d0] sm:$0xff]
        %v391 = vld [vmem:[#allocation7 + $0x3d8] sm:$0xff]
        %v392 = vld [vmem:[#allocation7 + $0x3e0] sm:$0xff]
        %v393 = vld [vmem:[#allocation7 + $0x3e8] sm:$0xff]
        %v394 = vld [vmem:[#allocation7 + $0x3f0] sm:$0xff]
        %v395 = vld [vmem:[#allocation7 + $0x3f8] sm:$0xff]
        %v396 = vld [vmem:[#allocation7 + $0x400] sm:$0xff]
        %v397 = vld [vmem:[#allocation7 + $0x408] sm:$0xff]
        %v398 = vld [vmem:[#allocation7 + $0x410] sm:$0xff]
        %v399 = vld [vmem:[#allocation7 + $0x418] sm:$0xff]
        %v400 = vld [vmem:[#allocation7 + $0x420] sm:$0xff]
        %v401 = vld [vmem:[#allocation7 + $0x428] sm:$0xff]
        %v402 = vld [vmem:[#allocation7 + $0x430] sm:$0xff]
        %v403 = vld [vmem:[#allocation7 + $0x438] sm:$0xff]
        %v404 = vld [vmem:[#allocation7 + $0x440] sm:$0xff]
        %v405 = vld [vmem:[#allocation7 + $0x448] sm:$0xff]
        %v406 = vld [vmem:[#allocation7 + $0x450] sm:$0xff]
        %v407 = vld [vmem:[#allocation7 + $0x458] sm:$0xff]
        %v408 = vld [vmem:[#allocation7 + $0x460] sm:$0xff]
        %v409 = vld [vmem:[#allocation7 + $0x468] sm:$0xff]
        %v410 = vld [vmem:[#allocation7 + $0x470] sm:$0xff]
        %v411 = vld [vmem:[#allocation7 + $0x478] sm:$0xff]
        %412 = vmatprep.subr.mxu0 %v314
        %413 = vmatpush1.msra.mxu0 %v313
        %414 = vmatprep.subr.mxu0 %v311
        %415 = vmatpush1.msra.mxu0 %v310
        %416 = vmatprep.subr.mxu0 %v308
        %417 = vmatpush1.msra.mxu0 %v307
        %418 = vmatprep.subr.mxu0 %v305
        %419 = vmatpush1.msra.mxu0 %v304
        %420 = vmatprep.subr.mxu0 %v302
        %421 = vmatpush1.msra.mxu0 %v301
        %422 = vmatprep.subr.mxu0 %v299
        %423 = vmatpush1.msra.mxu0 %v298
        %424 = vmatprep.subr.mxu0 %v296
        %425 = vmatpush1.msra.mxu0 %v295
        %426 = vmatprep.subr.mxu0 %v293
        %427 = vmatpush1.msra.mxu0 %v292
        %428 = vmatprep.subr.mxu0 %v290
        %429 = vmatpush1.msra.mxu0 %v289
        %430 = vmatprep.subr.mxu0 %v287
        %431 = vmatpush1.msra.mxu0 %v286
        %432 = vmatprep.subr.mxu0 %v284
        %433 = vmatpush1.msra.mxu0 %v283
        %434 = vmatprep.subr.mxu0 %v281
        %435 = vmatpush1.msra.mxu0 %v280
        %436 = vmatprep.subr.mxu0 %v278
        %437 = vmatpush1.msra.mxu0 %v277
        %438 = vmatprep.subr.mxu0 %v275
        %439 = vmatpush1.msra.mxu0 %v274
        %440 = vmatprep.subr.mxu0 %v272
        %441 = vmatpush1.msra.mxu0 %v271
        %442 = vmatprep.subr.mxu0 %v269
        %443 = vmatpush1.msra.mxu0 %v268
        %444 = vmatprep.subr.mxu0 %v362
        %445 = vmatpush2.msra.mxu0 %v361
        %446 = vmatprep.subr.mxu0 %v359
        %447 = vmatpush2.msra.mxu0 %v358
        %448 = vmatprep.subr.mxu0 %v356
        %449 = vmatpush2.msra.mxu0 %v355
        %450 = vmatprep.subr.mxu0 %v353
        %451 = vmatpush2.msra.mxu0 %v352
        %452 = vmatprep.subr.mxu0 %v350
        %453 = vmatpush2.msra.mxu0 %v349
        %454 = vmatprep.subr.mxu0 %v347
        %455 = vmatpush2.msra.mxu0 %v346
        %456 = vmatprep.subr.mxu0 %v344
        %457 = vmatpush2.msra.mxu0 %v343
        %458 = vmatprep.subr.mxu0 %v341
        %459 = vmatpush2.msra.mxu0 %v340
        %460 = vmatprep.subr.mxu0 %v338
        %461 = vmatpush2.msra.mxu0 %v337
        %462 = vmatprep.subr.mxu0 %v335
        %463 = vmatpush2.msra.mxu0 %v334
        %464 = vmatprep.subr.mxu0 %v332
        %465 = vmatpush2.msra.mxu0 %v331
        %466 = vmatprep.subr.mxu0 %v329
        %467 = vmatpush2.msra.mxu0 %v328
        %468 = vmatprep.subr.mxu0 %v326
        %469 = vmatpush2.msra.mxu0 %v325
        %470 = vmatprep.subr.mxu0 %v323
        %471 = vmatpush2.msra.mxu0 %v322
        %472 = vmatprep.subr.mxu0 %v320
        %473 = vmatpush2.msra.mxu0 %v319
        %474 = vmatprep.subr.mxu0 %v317
        %475 = vmatpush2.msra.mxu0 %v316
        %476 = vmatprep.mubr.f32.mxu0 %v257
        %477 = vmatmul.mubr.f32.gmra.mxu0 %v256
        %v478 = vpop.f32.mrf.mxu0
        %v479 = vadd.f32 0.0, %v478
        %v480 = vpop.f32.mrf.mxu0
        %v481 = vadd.f32 0.0, %v480
        %482 = vmatprep.mubr.f32.mxu0 %v260
        %483 = vmatmul.mubr.f32.gmra.mxu0 %v259
        %v484 = vpop.f32.mrf.mxu0
        %v485 = vadd.f32 0.0, %v484
        %v486 = vpop.f32.mrf.mxu0
        %v487 = vadd.f32 0.0, %v486
        %488 = vmatprep.mubr.f32.mxu0 %v263
        %489 = vmatmul.mubr.f32.gmra.mxu0 %v262
        %v490 = vpop.f32.mrf.mxu0
        %v491 = vadd.f32 0.0, %v490
        %v492 = vpop.f32.mrf.mxu0
        %v493 = vadd.f32 0.0, %v492
        %494 = vmatprep.mubr.f32.mxu0 %v266
        %495 = vmatmul.mubr.f32.gmra.mxu0 %v265
        %v496 = vpop.f32.mrf.mxu0
        %v497 = vadd.f32 0.0, %v496
        %v498 = vpop.f32.mrf.mxu0
        %v499 = vadd.f32 0.0, %v498
        %500 = vdwg.mxu0
        %501 = vmatprep.subr.mxu0 %v410
        %502 = vmatpush1.msra.mxu0 %v409
        %503 = vmatprep.subr.mxu0 %v407
        %504 = vmatpush1.msra.mxu0 %v406
        %505 = vmatprep.subr.mxu0 %v404
        %506 = vmatpush1.msra.mxu0 %v403
        %507 = vmatprep.subr.mxu0 %v401
        %508 = vmatpush1.msra.mxu0 %v400
        %509 = vmatprep.subr.mxu0 %v398
        %510 = vmatpush1.msra.mxu0 %v397
        %511 = vmatprep.subr.mxu0 %v395
        %512 = vmatpush1.msra.mxu0 %v394
        %513 = vmatprep.subr.mxu0 %v392
        %514 = vmatpush1.msra.mxu0 %v391
        %515 = vmatprep.subr.mxu0 %v389
        %516 = vmatpush1.msra.mxu0 %v388
        %517 = vmatprep.subr.mxu0 %v386
        %518 = vmatpush1.msra.mxu0 %v385
        %519 = vmatprep.subr.mxu0 %v383
        %520 = vmatpush1.msra.mxu0 %v382
        %521 = vmatprep.subr.mxu0 %v380
        %522 = vmatpush1.msra.mxu0 %v379
        %523 = vmatprep.subr.mxu0 %v377
        %524 = vmatpush1.msra.mxu0 %v376
        %525 = vmatprep.subr.mxu0 %v374
        %526 = vmatpush1.msra.mxu0 %v373
        %527 = vmatprep.subr.mxu0 %v371
        %528 = vmatpush1.msra.mxu0 %v370
        %529 = vmatprep.subr.mxu0 %v368
        %530 = vmatpush1.msra.mxu0 %v367
        %531 = vmatprep.subr.mxu0 %v365
        %532 = vmatpush1.msra.mxu0 %v364
        %533 = vmatprep.subr.mxu0 0.0
        %534 = vmatpush2.msra.mxu0 0.0
        %535 = vmatprep.subr.mxu0 0.0
        %536 = vmatpush2.msra.mxu0 0.0
        %537 = vmatprep.subr.mxu0 0.0
        %538 = vmatpush2.msra.mxu0 0.0
        %539 = vmatprep.subr.mxu0 0.0
        %540 = vmatpush2.msra.mxu0 0.0
        %541 = vmatprep.subr.mxu0 0.0
        %542 = vmatpush2.msra.mxu0 0.0
        %543 = vmatprep.subr.mxu0 0.0
        %544 = vmatpush2.msra.mxu0 0.0
        %545 = vmatprep.subr.mxu0 0.0
        %546 = vmatpush2.msra.mxu0 0.0
        %547 = vmatprep.subr.mxu0 0.0
        %548 = vmatpush2.msra.mxu0 0.0
        %549 = vmatprep.subr.mxu0 0.0
        %550 = vmatpush2.msra.mxu0 0.0
        %551 = vmatprep.subr.mxu0 0.0
        %552 = vmatpush2.msra.mxu0 0.0
        %553 = vmatprep.subr.mxu0 0.0
        %554 = vmatpush2.msra.mxu0 0.0
        %555 = vmatprep.subr.mxu0 0.0
        %556 = vmatpush2.msra.mxu0 0.0
        %557 = vmatprep.subr.mxu0 0.0
        %558 = vmatpush2.msra.mxu0 0.0
        %559 = vmatprep.subr.mxu0 0.0
        %560 = vmatpush2.msra.mxu0 0.0
        %561 = vmatprep.subr.mxu0 0.0
        %562 = vmatpush2.msra.mxu0 0.0
        %563 = vmatprep.subr.mxu0 0.0
        %564 = vmatpush2.msra.mxu0 0.0
        %565 = vmatprep.mubr.f32.mxu0 0.0
        %566 = vmatmul.mubr.f32.gmra.mxu0 %v258
        %v567 = vpop.f32.mrf.mxu0
        %v568 = vadd.f32 %v479, %v567
        %v569 = vpop.f32.mrf.mxu0
        %v570 = vadd.f32 %v481, %v569
        %571 = vmatprep.mubr.f32.mxu0 0.0
        %572 = vmatmul.mubr.f32.gmra.mxu0 %v261
        %v573 = vpop.f32.mrf.mxu0
        %v574 = vadd.f32 %v485, %v573
        %v575 = vpop.f32.mrf.mxu0
        %v576 = vadd.f32 %v487, %v575
        %577 = vmatprep.mubr.f32.mxu0 0.0
        %578 = vmatmul.mubr.f32.gmra.mxu0 %v264
        %v579 = vpop.f32.mrf.mxu0
        %v580 = vadd.f32 %v491, %v579
        %v581 = vpop.f32.mrf.mxu0
        %v582 = vadd.f32 %v493, %v581
        %583 = vmatprep.mubr.f32.mxu0 0.0
        %584 = vmatmul.mubr.f32.gmra.mxu0 %v267
        %v585 = vpop.f32.mrf.mxu0
        %v586 = vadd.f32 %v497, %v585
        %v587 = vpop.f32.mrf.mxu0
        %v588 = vadd.f32 %v499, %v587
        %589 = vdwg.mxu0
        %590 = vmatprep.subr.mxu0 0.0
        %591 = vmatpush1.msra.mxu0 %v315
        %592 = vmatprep.subr.mxu0 0.0
        %593 = vmatpush1.msra.mxu0 %v312
        %594 = vmatprep.subr.mxu0 0.0
        %595 = vmatpush1.msra.mxu0 %v309
        %596 = vmatprep.subr.mxu0 0.0
        %597 = vmatpush1.msra.mxu0 %v306
        %598 = vmatprep.subr.mxu0 0.0
        %599 = vmatpush1.msra.mxu0 %v303
        %600 = vmatprep.subr.mxu0 0.0
        %601 = vmatpush1.msra.mxu0 %v300
        %602 = vmatprep.subr.mxu0 0.0
        %603 = vmatpush1.msra.mxu0 %v297
        %604 = vmatprep.subr.mxu0 0.0
        %605 = vmatpush1.msra.mxu0 %v294
        %606 = vmatprep.subr.mxu0 0.0
        %607 = vmatpush1.msra.mxu0 %v291
        %608 = vmatprep.subr.mxu0 0.0
        %609 = vmatpush1.msra.mxu0 %v288
        %610 = vmatprep.subr.mxu0 0.0
        %611 = vmatpush1.msra.mxu0 %v285
        %612 = vmatprep.subr.mxu0 0.0
        %613 = vmatpush1.msra.mxu0 %v282
        %614 = vmatprep.subr.mxu0 0.0
        %615 = vmatpush1.msra.mxu0 %v279
        %616 = vmatprep.subr.mxu0 0.0
        %617 = vmatpush1.msra.mxu0 %v276
        %618 = vmatprep.subr.mxu0 0.0
        %619 = vmatpush1.msra.mxu0 %v273
        %620 = vmatprep.subr.mxu0 0.0
        %621 = vmatpush1.msra.mxu0 %v270
        %622 = vmatprep.subr.mxu0 0.0
        %623 = vmatpush2.msra.mxu0 %v363
        %624 = vmatprep.subr.mxu0 0.0
        %625 = vmatpush2.msra.mxu0 %v360
        %626 = vmatprep.subr.mxu0 0.0
        %627 = vmatpush2.msra.mxu0 %v357
        %628 = vmatprep.subr.mxu0 0.0
        %629 = vmatpush2.msra.mxu0 %v354
        %630 = vmatprep.subr.mxu0 0.0
        %631 = vmatpush2.msra.mxu0 %v351
        %632 = vmatprep.subr.mxu0 0.0
        %633 = vmatpush2.msra.mxu0 %v348
        %634 = vmatprep.subr.mxu0 0.0
        %635 = vmatpush2.msra.mxu0 %v345
        %636 = vmatprep.subr.mxu0 0.0
        %637 = vmatpush2.msra.mxu0 %v342
        %638 = vmatprep.subr.mxu0 0.0
        %639 = vmatpush2.msra.mxu0 %v339
        %640 = vmatprep.subr.mxu0 0.0
        %641 = vmatpush2.msra.mxu0 %v336
        %642 = vmatprep.subr.mxu0 0.0
        %643 = vmatpush2.msra.mxu0 %v333
        %644 = vmatprep.subr.mxu0 0.0
        %645 = vmatpush2.msra.mxu0 %v330
        %646 = vmatprep.subr.mxu0 0.0
        %647 = vmatpush2.msra.mxu0 %v327
        %648 = vmatprep.subr.mxu0 0.0
        %649 = vmatpush2.msra.mxu0 %v324
        %650 = vmatprep.subr.mxu0 0.0
        %651 = vmatpush2.msra.mxu0 %v321
        %652 = vmatprep.subr.mxu0 0.0
        %653 = vmatpush2.msra.mxu0 %v318
        %654 = vmatprep.mubr.f32.mxu0 %v257
        %655 = vmatmul.mubr.f32.gmra.mxu0 %v256
        %v656 = vpop.f32.mrf.mxu0
        %v657 = vadd.f32 0.0, %v656
        %v658 = vpop.f32.mrf.mxu0
        %659 = vmatprep.mubr.f32.mxu0 %v260
        %660 = vmatmul.mubr.f32.gmra.mxu0 %v259
        %v661 = vpop.f32.mrf.mxu0
        %v662 = vadd.f32 0.0, %v661
        %v663 = vpop.f32.mrf.mxu0
        %664 = vmatprep.mubr.f32.mxu0 %v263
        %665 = vmatmul.mubr.f32.gmra.mxu0 %v262
        %v666 = vpop.f32.mrf.mxu0
        %v667 = vadd.f32 0.0, %v666
        %v668 = vpop.f32.mrf.mxu0
        %669 = vmatprep.mubr.f32.mxu0 %v266
        %670 = vmatmul.mubr.f32.gmra.mxu0 %v265
        %v671 = vpop.f32.mrf.mxu0
        %v672 = vadd.f32 0.0, %v671
        %v673 = vpop.f32.mrf.mxu0
        %674 = vdwg.mxu0
        %675 = vmatprep.subr.mxu0 0.0
        %676 = vmatpush1.msra.mxu0 %v411
        %677 = vmatprep.subr.mxu0 0.0
        %678 = vmatpush1.msra.mxu0 %v408
        %679 = vmatprep.subr.mxu0 0.0
        %680 = vmatpush1.msra.mxu0 %v405
        %681 = vmatprep.subr.mxu0 0.0
        %682 = vmatpush1.msra.mxu0 %v402
        %683 = vmatprep.subr.mxu0 0.0
        %684 = vmatpush1.msra.mxu0 %v399
        %685 = vmatprep.subr.mxu0 0.0
        %686 = vmatpush1.msra.mxu0 %v396
        %687 = vmatprep.subr.mxu0 0.0
        %688 = vmatpush1.msra.mxu0 %v393
        %689 = vmatprep.subr.mxu0 0.0
        %690 = vmatpush1.msra.mxu0 %v390
        %691 = vmatprep.subr.mxu0 0.0
        %692 = vmatpush1.msra.mxu0 %v387
        %693 = vmatprep.subr.mxu0 0.0
        %694 = vmatpush1.msra.mxu0 %v384
        %695 = vmatprep.subr.mxu0 0.0
        %696 = vmatpush1.msra.mxu0 %v381
        %697 = vmatprep.subr.mxu0 0.0
        %698 = vmatpush1.msra.mxu0 %v378
        %699 = vmatprep.subr.mxu0 0.0
        %700 = vmatpush1.msra.mxu0 %v375
        %701 = vmatprep.subr.mxu0 0.0
        %702 = vmatpush1.msra.mxu0 %v372
        %703 = vmatprep.subr.mxu0 0.0
        %704 = vmatpush1.msra.mxu0 %v369
        %705 = vmatprep.subr.mxu0 0.0
        %706 = vmatpush1.msra.mxu0 %v366
        %707 = vmatprep.subr.mxu0 0.0
        %708 = vmatpush2.msra.mxu0 0.0
        %709 = vmatprep.subr.mxu0 0.0
        %710 = vmatpush2.msra.mxu0 0.0
        %711 = vmatprep.subr.mxu0 0.0
        %712 = vmatpush2.msra.mxu0 0.0
        %713 = vmatprep.subr.mxu0 0.0
        %714 = vmatpush2.msra.mxu0 0.0
        %715 = vmatprep.subr.mxu0 0.0
        %716 = vmatpush2.msra.mxu0 0.0
        %717 = vmatprep.subr.mxu0 0.0
        %718 = vmatpush2.msra.mxu0 0.0
        %719 = vmatprep.subr.mxu0 0.0
        %720 = vmatpush2.msra.mxu0 0.0
        %721 = vmatprep.subr.mxu0 0.0
        %722 = vmatpush2.msra.mxu0 0.0
        %723 = vmatprep.subr.mxu0 0.0
        %724 = vmatpush2.msra.mxu0 0.0
        %725 = vmatprep.subr.mxu0 0.0
        %726 = vmatpush2.msra.mxu0 0.0
        %727 = vmatprep.subr.mxu0 0.0
        %728 = vmatpush2.msra.mxu0 0.0
        %729 = vmatprep.subr.mxu0 0.0
        %730 = vmatpush2.msra.mxu0 0.0
        %731 = vmatprep.subr.mxu0 0.0
        %732 = vmatpush2.msra.mxu0 0.0
        %733 = vmatprep.subr.mxu0 0.0
        %734 = vmatpush2.msra.mxu0 0.0
        %735 = vmatprep.subr.mxu0 0.0
        %736 = vmatpush2.msra.mxu0 0.0
        %737 = vmatprep.subr.mxu0 0.0
        %738 = vmatpush2.msra.mxu0 0.0
        %739 = vmatprep.mubr.f32.mxu0 0.0
        %740 = vmatmul.mubr.f32.gmra.mxu0 %v258
        %v741 = vpop.f32.mrf.mxu0
        %v742 = vadd.f32 %v657, %v741
        %v743 = vpop.f32.mrf.mxu0
        %744 = vmatprep.mubr.f32.mxu0 0.0
        %745 = vmatmul.mubr.f32.gmra.mxu0 %v261
        %v746 = vpop.f32.mrf.mxu0
        %v747 = vadd.f32 %v662, %v746
        %v748 = vpop.f32.mrf.mxu0
        %749 = vmatprep.mubr.f32.mxu0 0.0
        %750 = vmatmul.mubr.f32.gmra.mxu0 %v264
        %v751 = vpop.f32.mrf.mxu0
        %v752 = vadd.f32 %v667, %v751
        %v753 = vpop.f32.mrf.mxu0
        %754 = vmatprep.mubr.f32.mxu0 0.0
        %755 = vmatmul.mubr.f32.gmra.mxu0 %v267
        %v756 = vpop.f32.mrf.mxu0
        %v757 = vadd.f32 %v672, %v756
        %v758 = vpop.f32.mrf.mxu0
        %759 = vdwg.mxu0
        %s760 = sld [smem:[#allocation9]]
        %v761 = vstv %s760
        %v762 = vmul.f32 %v568, %v761
        %v763 = vmul.f32 %v570, %v761
        %v764 = vmul.f32 %v742, %v761
        %s765 = sld [smem:[#allocation9 + $0x80]]
        %v766 = vstv %s765
        %v767 = vmul.f32 %v574, %v766
        %v768 = vmul.f32 %v576, %v766
        %v769 = vmul.f32 %v747, %v766
        %v770 = vadd.f32 %v762, %v767
        %v771 = vadd.f32 %v763, %v768
        %v772 = vadd.f32 %v764, %v769
        %s773 = sld [smem:[#allocation9 + $0x100]]
        %v774 = vstv %s773
        %v775 = vmul.f32 %v580, %v774
        %v776 = vmul.f32 %v582, %v774
        %v777 = vmul.f32 %v752, %v774
        %v778 = vadd.f32 %v770, %v775
        %v779 = vadd.f32 %v771, %v776
        %v780 = vadd.f32 %v772, %v777
        %s781 = sld [smem:[#allocation9 + $0x180]]
        %v782 = vstv %s781
        %v783 = vmul.f32 %v586, %v782
        %v784 = vmul.f32 %v588, %v782
        %v785 = vmul.f32 %v757, %v782
        %v786 = vadd.f32 %v778, %v783
        %v787 = vadd.f32 %v779, %v784
        %v788 = vadd.f32 %v780, %v785
        %s789 = sld [smem:[#allocation10]]
        %v790 = vstv %s789
        %v791 = vadd.f32 %v786, %v790
        %v792 = vadd.f32 %v787, %v790
        %v793 = vadd.f32 %v788, %v790
        %794 = vst [vmem:[%s255] sm:$0xff] %v791
        %795 = vst [vmem:[%s255 + $0x8] sm:$0xff] %v792
        %796 = vst [vmem:[%s255 + $0x10] sm:$0xff] %v793
        %s797 = sld [smem:[#allocation9 + $0x1]]
        %v798 = vstv %s797
        %v799 = vmul.f32 %v568, %v798
        %v800 = vmul.f32 %v570, %v798
        %v801 = vmul.f32 %v742, %v798
        %s802 = sld [smem:[#allocation9 + $0x81]]
        %v803 = vstv %s802
        %v804 = vmul.f32 %v574, %v803
        %v805 = vmul.f32 %v576, %v803
        %v806 = vmul.f32 %v747, %v803
        %v807 = vadd.f32 %v799, %v804
        %v808 = vadd.f32 %v800, %v805
        %v809 = vadd.f32 %v801, %v806
        %s810 = sld [smem:[#allocation9 + $0x101]]
        %v811 = vstv %s810
        %v812 = vmul.f32 %v580, %v811
        %v813 = vmul.f32 %v582, %v811
        %v814 = vmul.f32 %v752, %v811
        %v815 = vadd.f32 %v807, %v812
        %v816 = vadd.f32 %v808, %v813
        %v817 = vadd.f32 %v809, %v814
        %s818 = sld [smem:[#allocation9 + $0x181]]
        %v819 = vstv %s818
        %v820 = vmul.f32 %v586, %v819
        %v821 = vmul.f32 %v588, %v819
        %v822 = vmul.f32 %v757, %v819
        %v823 = vadd.f32 %v815, %v820
        %v824 = vadd.f32 %v816, %v821
        %v825 = vadd.f32 %v817, %v822
        %s826 = sld [smem:[#allocation10 + $0x1]]
        %v827 = vstv %s826
        %v828 = vadd.f32 %v823, %v827
        %v829 = vadd.f32 %v824, %v827
        %v830 = vadd.f32 %v825, %v827
        %s831 = scalar_lea.vmem %s255, 24 [#allocation11]
        %832 = vst [vmem:[%s831] sm:$0xff] %v828
        %833 = vst [vmem:[%s831 + $0x8] sm:$0xff] %v829
        %834 = vst [vmem:[%s831 + $0x10] sm:$0xff] %v830
        %s835 = sld [smem:[#allocation9 + $0x2]]
        %v836 = vstv %s835
        %v837 = vmul.f32 %v568, %v836
        %v838 = vmul.f32 %v570, %v836
        %v839 = vmul.f32 %v742, %v836
        %s840 = sld [smem:[#allocation9 + $0x82]]
        %v841 = vstv %s840
        %v842 = vmul.f32 %v574, %v841
        %v843 = vmul.f32 %v576, %v841
        %v844 = vmul.f32 %v747, %v841
        %v845 = vadd.f32 %v837, %v842
        %v846 = vadd.f32 %v838, %v843
        %v847 = vadd.f32 %v839, %v844
        %s848 = sld [smem:[#allocation9 + $0x102]]
        %v849 = vstv %s848
        %v850 = vmul.f32 %v580, %v849
        %v851 = vmul.f32 %v582, %v849
        %v852 = vmul.f32 %v752, %v849
        %v853 = vadd.f32 %v845, %v850
        %v854 = vadd.f32 %v846, %v851
        %v855 = vadd.f32 %v847, %v852
        %s856 = sld [smem:[#allocation9 + $0x182]]
        %v857 = vstv %s856
        %v858 = vmul.f32 %v586, %v857
        %v859 = vmul.f32 %v588, %v857
        %v860 = vmul.f32 %v757, %v857
        %v861 = vadd.f32 %v853, %v858
        %v862 = vadd.f32 %v854, %v859
        %v863 = vadd.f32 %v855, %v860
        %s864 = sld [smem:[#allocation10 + $0x2]]
        %v865 = vstv %s864
        %v866 = vadd.f32 %v861, %v865
        %v867 = vadd.f32 %v862, %v865
        %v868 = vadd.f32 %v863, %v865
        %s869 = scalar_lea.vmem %s255, 48 [#allocation11]
        %870 = vst [vmem:[%s869] sm:$0xff] %v866
        %871 = vst [vmem:[%s869 + $0x8] sm:$0xff] %v867
        %872 = vst [vmem:[%s869 + $0x10] sm:$0xff] %v868
        %s873 = sld [smem:[#allocation9 + $0x3]]
        %v874 = vstv %s873
        %v875 = vmul.f32 %v568, %v874
        %v876 = vmul.f32 %v570, %v874
        %v877 = vmul.f32 %v742, %v874
        %s878 = sld [smem:[#allocation9 + $0x83]]
        %v879 = vstv %s878
        %v880 = vmul.f32 %v574, %v879
        %v881 = vmul.f32 %v576, %v879
        %v882 = vmul.f32 %v747, %v879
        %v883 = vadd.f32 %v875, %v880
        %v884 = vadd.f32 %v876, %v881
        %v885 = vadd.f32 %v877, %v882
        %s886 = sld [smem:[#allocation9 + $0x103]]
        %v887 = vstv %s886
        %v888 = vmul.f32 %v580, %v887
        %v889 = vmul.f32 %v582, %v887
        %v890 = vmul.f32 %v752, %v887
        %v891 = vadd.f32 %v883, %v888
        %v892 = vadd.f32 %v884, %v889
        %v893 = vadd.f32 %v885, %v890
        %s894 = sld [smem:[#allocation9 + $0x183]]
        %v895 = vstv %s894
        %v896 = vmul.f32 %v586, %v895
        %v897 = vmul.f32 %v588, %v895
        %v898 = vmul.f32 %v757, %v895
        %v899 = vadd.f32 %v891, %v896
        %v900 = vadd.f32 %v892, %v897
        %v901 = vadd.f32 %v893, %v898
        %s902 = sld [smem:[#allocation10 + $0x3]]
        %v903 = vstv %s902
        %v904 = vadd.f32 %v899, %v903
        %v905 = vadd.f32 %v900, %v903
        %v906 = vadd.f32 %v901, %v903
        %s907 = scalar_lea.vmem %s255, 72 [#allocation11]
        %908 = vst [vmem:[%s907] sm:$0xff] %v904
        %909 = vst [vmem:[%s907 + $0x8] sm:$0xff] %v905
        %910 = vst [vmem:[%s907 + $0x10] sm:$0xff] %v906
        %s911 = sld [smem:[#allocation9 + $0x4]]
        %v912 = vstv %s911
        %v913 = vmul.f32 %v568, %v912
        %v914 = vmul.f32 %v570, %v912
        %v915 = vmul.f32 %v742, %v912
        %s916 = sld [smem:[#allocation9 + $0x84]]
        %v917 = vstv %s916
        %v918 = vmul.f32 %v574, %v917
        %v919 = vmul.f32 %v576, %v917
        %v920 = vmul.f32 %v747, %v917
        %v921 = vadd.f32 %v913, %v918
        %v922 = vadd.f32 %v914, %v919
        %v923 = vadd.f32 %v915, %v920
        %s924 = sld [smem:[#allocation9 + $0x104]]
        %v925 = vstv %s924
        %v926 = vmul.f32 %v580, %v925
        %v927 = vmul.f32 %v582, %v925
        %v928 = vmul.f32 %v752, %v925
        %v929 = vadd.f32 %v921, %v926
        %v930 = vadd.f32 %v922, %v927
        %v931 = vadd.f32 %v923, %v928
        %s932 = sld [smem:[#allocation9 + $0x184]]
        %v933 = vstv %s932
        %v934 = vmul.f32 %v586, %v933
        %v935 = vmul.f32 %v588, %v933
        %v936 = vmul.f32 %v757, %v933
        %v937 = vadd.f32 %v929, %v934
        %v938 = vadd.f32 %v930, %v935
        %v939 = vadd.f32 %v931, %v936
        %s940 = sld [smem:[#allocation10 + $0x4]]
        %v941 = vstv %s940
        %v942 = vadd.f32 %v937, %v941
        %v943 = vadd.f32 %v938, %v941
        %v944 = vadd.f32 %v939, %v941
        %s945 = scalar_lea.vmem %s255, 96 [#allocation11]
        %946 = vst [vmem:[%s945] sm:$0xff] %v942
        %947 = vst [vmem:[%s945 + $0x8] sm:$0xff] %v943
        %948 = vst [vmem:[%s945 + $0x10] sm:$0xff] %v944
        %s949 = sld [smem:[#allocation9 + $0x5]]
        %v950 = vstv %s949
        %v951 = vmul.f32 %v568, %v950
        %v952 = vmul.f32 %v570, %v950
        %v953 = vmul.f32 %v742, %v950
        %s954 = sld [smem:[#allocation9 + $0x85]]
        %v955 = vstv %s954
        %v956 = vmul.f32 %v574, %v955
        %v957 = vmul.f32 %v576, %v955
        %v958 = vmul.f32 %v747, %v955
        %v959 = vadd.f32 %v951, %v956
        %v960 = vadd.f32 %v952, %v957
        %v961 = vadd.f32 %v953, %v958
        %s962 = sld [smem:[#allocation9 + $0x105]]
        %v963 = vstv %s962
        %v964 = vmul.f32 %v580, %v963
        %v965 = vmul.f32 %v582, %v963
        %v966 = vmul.f32 %v752, %v963
        %v967 = vadd.f32 %v959, %v964
        %v968 = vadd.f32 %v960, %v965
        %v969 = vadd.f32 %v961, %v966
        %s970 = sld [smem:[#allocation9 + $0x185]]
        %v971 = vstv %s970
        %v972 = vmul.f32 %v586, %v971
        %v973 = vmul.f32 %v588, %v971
        %v974 = vmul.f32 %v757, %v971
        %v975 = vadd.f32 %v967, %v972
        %v976 = vadd.f32 %v968, %v973
        %v977 = vadd.f32 %v969, %v974
        %s978 = sld [smem:[#allocation10 + $0x5]]
        %v979 = vstv %s978
        %v980 = vadd.f32 %v975, %v979
        %v981 = vadd.f32 %v976, %v979
        %v982 = vadd.f32 %v977, %v979
        %s983 = scalar_lea.vmem %s255, 120 [#allocation11]
        %984 = vst [vmem:[%s983] sm:$0xff] %v980
        %985 = vst [vmem:[%s983 + $0x8] sm:$0xff] %v981
        %986 = vst [vmem:[%s983 + $0x10] sm:$0xff] %v982
        %s987 = sld [smem:[#allocation9 + $0x6]]
        %v988 = vstv %s987
        %v989 = vmul.f32 %v568, %v988
        %v990 = vmul.f32 %v570, %v988
        %v991 = vmul.f32 %v742, %v988
        %s992 = sld [smem:[#allocation9 + $0x86]]
        %v993 = vstv %s992
        %v994 = vmul.f32 %v574, %v993
        %v995 = vmul.f32 %v576, %v993
        %v996 = vmul.f32 %v747, %v993
        %v997 = vadd.f32 %v989, %v994
        %v998 = vadd.f32 %v990, %v995
        %v999 = vadd.f32 %v991, %v996
        %s1000 = sld [smem:[#allocation9 + $0x106]]
        %v1001 = vstv %s1000
        %v1002 = vmul.f32 %v580, %v1001
        %v1003 = vmul.f32 %v582, %v1001
        %v1004 = vmul.f32 %v752, %v1001
        %v1005 = vadd.f32 %v997, %v1002
        %v1006 = vadd.f32 %v998, %v1003
        %v1007 = vadd.f32 %v999, %v1004
        %s1008 = sld [smem:[#allocation9 + $0x186]]
        %v1009 = vstv %s1008
        %v1010 = vmul.f32 %v586, %v1009
        %v1011 = vmul.f32 %v588, %v1009
        %v1012 = vmul.f32 %v757, %v1009
        %v1013 = vadd.f32 %v1005, %v1010
        %v1014 = vadd.f32 %v1006, %v1011
        %v1015 = vadd.f32 %v1007, %v1012
        %s1016 = sld [smem:[#allocation10 + $0x6]]
        %v1017 = vstv %s1016
        %v1018 = vadd.f32 %v1013, %v1017
        %v1019 = vadd.f32 %v1014, %v1017
        %v1020 = vadd.f32 %v1015, %v1017
        %s1021 = scalar_lea.vmem %s255, 144 [#allocation11]
        %1022 = vst [vmem:[%s1021] sm:$0xff] %v1018
        %1023 = vst [vmem:[%s1021 + $0x8] sm:$0xff] %v1019
        %1024 = vst [vmem:[%s1021 + $0x10] sm:$0xff] %v1020
        %s1025 = sld [smem:[#allocation9 + $0x7]]
        %v1026 = vstv %s1025
        %v1027 = vmul.f32 %v568, %v1026
        %v1028 = vmul.f32 %v570, %v1026
        %v1029 = vmul.f32 %v742, %v1026
        %s1030 = sld [smem:[#allocation9 + $0x87]]
        %v1031 = vstv %s1030
        %v1032 = vmul.f32 %v574, %v1031
        %v1033 = vmul.f32 %v576, %v1031
        %v1034 = vmul.f32 %v747, %v1031
        %v1035 = vadd.f32 %v1027, %v1032
        %v1036 = vadd.f32 %v1028, %v1033
        %v1037 = vadd.f32 %v1029, %v1034
        %s1038 = sld [smem:[#allocation9 + $0x107]]
        %v1039 = vstv %s1038
        %v1040 = vmul.f32 %v580, %v1039
        %v1041 = vmul.f32 %v582, %v1039
        %v1042 = vmul.f32 %v752, %v1039
        %v1043 = vadd.f32 %v1035, %v1040
        %v1044 = vadd.f32 %v1036, %v1041
        %v1045 = vadd.f32 %v1037, %v1042
        %s1046 = sld [smem:[#allocation9 + $0x187]]
        %v1047 = vstv %s1046
        %v1048 = vmul.f32 %v586, %v1047
        %v1049 = vmul.f32 %v588, %v1047
        %v1050 = vmul.f32 %v757, %v1047
        %v1051 = vadd.f32 %v1043, %v1048
        %v1052 = vadd.f32 %v1044, %v1049
        %v1053 = vadd.f32 %v1045, %v1050
        %s1054 = sld [smem:[#allocation10 + $0x7]]
        %v1055 = vstv %s1054
        %v1056 = vadd.f32 %v1051, %v1055
        %v1057 = vadd.f32 %v1052, %v1055
        %v1058 = vadd.f32 %v1053, %v1055
        %s1059 = scalar_lea.vmem %s255, 168 [#allocation11]
        %1060 = vst [vmem:[%s1059] sm:$0xff] %v1056
        %1061 = vst [vmem:[%s1059 + $0x8] sm:$0xff] %v1057
        %1062 = vst [vmem:[%s1059 + $0x10] sm:$0xff] %v1058
        %s1063 = sld [smem:[#allocation9 + $0x8]]
        %v1064 = vstv %s1063
        %v1065 = vmul.f32 %v568, %v1064
        %v1066 = vmul.f32 %v570, %v1064
        %v1067 = vmul.f32 %v742, %v1064
        %s1068 = sld [smem:[#allocation9 + $0x88]]
        %v1069 = vstv %s1068
        %v1070 = vmul.f32 %v574, %v1069
        %v1071 = vmul.f32 %v576, %v1069
        %v1072 = vmul.f32 %v747, %v1069
        %v1073 = vadd.f32 %v1065, %v1070
        %v1074 = vadd.f32 %v1066, %v1071
        %v1075 = vadd.f32 %v1067, %v1072
        %s1076 = sld [smem:[#allocation9 + $0x108]]
        %v1077 = vstv %s1076
        %v1078 = vmul.f32 %v580, %v1077
        %v1079 = vmul.f32 %v582, %v1077
        %v1080 = vmul.f32 %v752, %v1077
        %v1081 = vadd.f32 %v1073, %v1078
        %v1082 = vadd.f32 %v1074, %v1079
        %v1083 = vadd.f32 %v1075, %v1080
        %s1084 = sld [smem:[#allocation9 + $0x188]]
        %v1085 = vstv %s1084
        %v1086 = vmul.f32 %v586, %v1085
        %v1087 = vmul.f32 %v588, %v1085
        %v1088 = vmul.f32 %v757, %v1085
        %v1089 = vadd.f32 %v1081, %v1086
        %v1090 = vadd.f32 %v1082, %v1087
        %v1091 = vadd.f32 %v1083, %v1088
        %s1092 = sld [smem:[#allocation10 + $0x8]]
        %v1093 = vstv %s1092
        %v1094 = vadd.f32 %v1089, %v1093
        %v1095 = vadd.f32 %v1090, %v1093
        %v1096 = vadd.f32 %v1091, %v1093
        %s1097 = scalar_lea.vmem %s255, 192 [#allocation11]
        %1098 = vst [vmem:[%s1097] sm:$0xff] %v1094
        %1099 = vst [vmem:[%s1097 + $0x8] sm:$0xff] %v1095
        %1100 = vst [vmem:[%s1097 + $0x10] sm:$0xff] %v1096
        %s1101 = sld [smem:[#allocation9 + $0x9]]
        %v1102 = vstv %s1101
        %v1103 = vmul.f32 %v568, %v1102
        %v1104 = vmul.f32 %v570, %v1102
        %v1105 = vmul.f32 %v742, %v1102
        %s1106 = sld [smem:[#allocation9 + $0x89]]
        %v1107 = vstv %s1106
        %v1108 = vmul.f32 %v574, %v1107
        %v1109 = vmul.f32 %v576, %v1107
        %v1110 = vmul.f32 %v747, %v1107
        %v1111 = vadd.f32 %v1103, %v1108
        %v1112 = vadd.f32 %v1104, %v1109
        %v1113 = vadd.f32 %v1105, %v1110
        %s1114 = sld [smem:[#allocation9 + $0x109]]
        %v1115 = vstv %s1114
        %v1116 = vmul.f32 %v580, %v1115
        %v1117 = vmul.f32 %v582, %v1115
        %v1118 = vmul.f32 %v752, %v1115
        %v1119 = vadd.f32 %v1111, %v1116
        %v1120 = vadd.f32 %v1112, %v1117
        %v1121 = vadd.f32 %v1113, %v1118
        %s1122 = sld [smem:[#allocation9 + $0x189]]
        %v1123 = vstv %s1122
        %v1124 = vmul.f32 %v586, %v1123
        %v1125 = vmul.f32 %v588, %v1123
        %v1126 = vmul.f32 %v757, %v1123
        %v1127 = vadd.f32 %v1119, %v1124
        %v1128 = vadd.f32 %v1120, %v1125
        %v1129 = vadd.f32 %v1121, %v1126
        %s1130 = sld [smem:[#allocation10 + $0x9]]
        %v1131 = vstv %s1130
        %v1132 = vadd.f32 %v1127, %v1131
        %v1133 = vadd.f32 %v1128, %v1131
        %v1134 = vadd.f32 %v1129, %v1131
        %s1135 = scalar_lea.vmem %s255, 216 [#allocation11]
        %1136 = vst [vmem:[%s1135] sm:$0xff] %v1132
        %1137 = vst [vmem:[%s1135 + $0x8] sm:$0xff] %v1133
        %1138 = vst [vmem:[%s1135 + $0x10] sm:$0xff] %v1134
        %s1139 = sld [smem:[#allocation9 + $0xa]]
        %v1140 = vstv %s1139
        %v1141 = vmul.f32 %v568, %v1140
        %v1142 = vmul.f32 %v570, %v1140
        %v1143 = vmul.f32 %v742, %v1140
        %s1144 = sld [smem:[#allocation9 + $0x8a]]
        %v1145 = vstv %s1144
        %v1146 = vmul.f32 %v574, %v1145
        %v1147 = vmul.f32 %v576, %v1145
        %v1148 = vmul.f32 %v747, %v1145
        %v1149 = vadd.f32 %v1141, %v1146
        %v1150 = vadd.f32 %v1142, %v1147
        %v1151 = vadd.f32 %v1143, %v1148
        %s1152 = sld [smem:[#allocation9 + $0x10a]]
        %v1153 = vstv %s1152
        %v1154 = vmul.f32 %v580, %v1153
        %v1155 = vmul.f32 %v582, %v1153
        %v1156 = vmul.f32 %v752, %v1153
        %v1157 = vadd.f32 %v1149, %v1154
        %v1158 = vadd.f32 %v1150, %v1155
        %v1159 = vadd.f32 %v1151, %v1156
        %s1160 = sld [smem:[#allocation9 + $0x18a]]
        %v1161 = vstv %s1160
        %v1162 = vmul.f32 %v586, %v1161
        %v1163 = vmul.f32 %v588, %v1161
        %v1164 = vmul.f32 %v757, %v1161
        %v1165 = vadd.f32 %v1157, %v1162
        %v1166 = vadd.f32 %v1158, %v1163
        %v1167 = vadd.f32 %v1159, %v1164
        %s1168 = sld [smem:[#allocation10 + $0xa]]
        %v1169 = vstv %s1168
        %v1170 = vadd.f32 %v1165, %v1169
        %v1171 = vadd.f32 %v1166, %v1169
        %v1172 = vadd.f32 %v1167, %v1169
        %s1173 = scalar_lea.vmem %s255, 240 [#allocation11]
        %1174 = vst [vmem:[%s1173] sm:$0xff] %v1170
        %1175 = vst [vmem:[%s1173 + $0x8] sm:$0xff] %v1171
        %1176 = vst [vmem:[%s1173 + $0x10] sm:$0xff] %v1172
        %s1177 = sld [smem:[#allocation9 + $0xb]]
        %v1178 = vstv %s1177
        %v1179 = vmul.f32 %v568, %v1178
        %v1180 = vmul.f32 %v570, %v1178
        %v1181 = vmul.f32 %v742, %v1178
        %s1182 = sld [smem:[#allocation9 + $0x8b]]
        %v1183 = vstv %s1182
        %v1184 = vmul.f32 %v574, %v1183
        %v1185 = vmul.f32 %v576, %v1183
        %v1186 = vmul.f32 %v747, %v1183
        %v1187 = vadd.f32 %v1179, %v1184
        %v1188 = vadd.f32 %v1180, %v1185
        %v1189 = vadd.f32 %v1181, %v1186
        %s1190 = sld [smem:[#allocation9 + $0x10b]]
        %v1191 = vstv %s1190
        %v1192 = vmul.f32 %v580, %v1191
        %v1193 = vmul.f32 %v582, %v1191
        %v1194 = vmul.f32 %v752, %v1191
        %v1195 = vadd.f32 %v1187, %v1192
        %v1196 = vadd.f32 %v1188, %v1193
        %v1197 = vadd.f32 %v1189, %v1194
        %s1198 = sld [smem:[#allocation9 + $0x18b]]
        %v1199 = vstv %s1198
        %v1200 = vmul.f32 %v586, %v1199
        %v1201 = vmul.f32 %v588, %v1199
        %v1202 = vmul.f32 %v757, %v1199
        %v1203 = vadd.f32 %v1195, %v1200
        %v1204 = vadd.f32 %v1196, %v1201
        %v1205 = vadd.f32 %v1197, %v1202
        %s1206 = sld [smem:[#allocation10 + $0xb]]
        %v1207 = vstv %s1206
        %v1208 = vadd.f32 %v1203, %v1207
        %v1209 = vadd.f32 %v1204, %v1207
        %v1210 = vadd.f32 %v1205, %v1207
        %s1211 = scalar_lea.vmem %s255, 264 [#allocation11]
        %1212 = vst [vmem:[%s1211] sm:$0xff] %v1208
        %1213 = vst [vmem:[%s1211 + $0x8] sm:$0xff] %v1209
        %1214 = vst [vmem:[%s1211 + $0x10] sm:$0xff] %v1210
        %s1215 = sld [smem:[#allocation9 + $0xc]]
        %v1216 = vstv %s1215
        %v1217 = vmul.f32 %v568, %v1216
        %v1218 = vmul.f32 %v570, %v1216
        %v1219 = vmul.f32 %v742, %v1216
        %s1220 = sld [smem:[#allocation9 + $0x8c]]
        %v1221 = vstv %s1220
        %v1222 = vmul.f32 %v574, %v1221
        %v1223 = vmul.f32 %v576, %v1221
        %v1224 = vmul.f32 %v747, %v1221
        %v1225 = vadd.f32 %v1217, %v1222
        %v1226 = vadd.f32 %v1218, %v1223
        %v1227 = vadd.f32 %v1219, %v1224
        %s1228 = sld [smem:[#allocation9 + $0x10c]]
        %v1229 = vstv %s1228
        %v1230 = vmul.f32 %v580, %v1229
        %v1231 = vmul.f32 %v582, %v1229
        %v1232 = vmul.f32 %v752, %v1229
        %v1233 = vadd.f32 %v1225, %v1230
        %v1234 = vadd.f32 %v1226, %v1231
        %v1235 = vadd.f32 %v1227, %v1232
        %s1236 = sld [smem:[#allocation9 + $0x18c]]
        %v1237 = vstv %s1236
        %v1238 = vmul.f32 %v586, %v1237
        %v1239 = vmul.f32 %v588, %v1237
        %v1240 = vmul.f32 %v757, %v1237
        %v1241 = vadd.f32 %v1233, %v1238
        %v1242 = vadd.f32 %v1234, %v1239
        %v1243 = vadd.f32 %v1235, %v1240
        %s1244 = sld [smem:[#allocation10 + $0xc]]
        %v1245 = vstv %s1244
        %v1246 = vadd.f32 %v1241, %v1245
        %v1247 = vadd.f32 %v1242, %v1245
        %v1248 = vadd.f32 %v1243, %v1245
        %s1249 = scalar_lea.vmem %s255, 288 [#allocation11]
        %1250 = vst [vmem:[%s1249] sm:$0xff] %v1246
        %1251 = vst [vmem:[%s1249 + $0x8] sm:$0xff] %v1247
        %1252 = vst [vmem:[%s1249 + $0x10] sm:$0xff] %v1248
        %s1253 = sld [smem:[#allocation9 + $0xd]]
        %v1254 = vstv %s1253
        %v1255 = vmul.f32 %v568, %v1254
        %v1256 = vmul.f32 %v570, %v1254
        %v1257 = vmul.f32 %v742, %v1254
        %s1258 = sld [smem:[#allocation9 + $0x8d]]
        %v1259 = vstv %s1258
        %v1260 = vmul.f32 %v574, %v1259
        %v1261 = vmul.f32 %v576, %v1259
        %v1262 = vmul.f32 %v747, %v1259
        %v1263 = vadd.f32 %v1255, %v1260
        %v1264 = vadd.f32 %v1256, %v1261
        %v1265 = vadd.f32 %v1257, %v1262
        %s1266 = sld [smem:[#allocation9 + $0x10d]]
        %v1267 = vstv %s1266
        %v1268 = vmul.f32 %v580, %v1267
        %v1269 = vmul.f32 %v582, %v1267
        %v1270 = vmul.f32 %v752, %v1267
        %v1271 = vadd.f32 %v1263, %v1268
        %v1272 = vadd.f32 %v1264, %v1269
        %v1273 = vadd.f32 %v1265, %v1270
        %s1274 = sld [smem:[#allocation9 + $0x18d]]
        %v1275 = vstv %s1274
        %v1276 = vmul.f32 %v586, %v1275
        %v1277 = vmul.f32 %v588, %v1275
        %v1278 = vmul.f32 %v757, %v1275
        %v1279 = vadd.f32 %v1271, %v1276
        %v1280 = vadd.f32 %v1272, %v1277
        %v1281 = vadd.f32 %v1273, %v1278
        %s1282 = sld [smem:[#allocation10 + $0xd]]
        %v1283 = vstv %s1282
        %v1284 = vadd.f32 %v1279, %v1283
        %v1285 = vadd.f32 %v1280, %v1283
        %v1286 = vadd.f32 %v1281, %v1283
        %s1287 = scalar_lea.vmem %s255, 312 [#allocation11]
        %1288 = vst [vmem:[%s1287] sm:$0xff] %v1284
        %1289 = vst [vmem:[%s1287 + $0x8] sm:$0xff] %v1285
        %1290 = vst [vmem:[%s1287 + $0x10] sm:$0xff] %v1286
        %s1291 = sld [smem:[#allocation9 + $0xe]]
        %v1292 = vstv %s1291
        %v1293 = vmul.f32 %v568, %v1292
        %v1294 = vmul.f32 %v570, %v1292
        %v1295 = vmul.f32 %v742, %v1292
        %s1296 = sld [smem:[#allocation9 + $0x8e]]
        %v1297 = vstv %s1296
        %v1298 = vmul.f32 %v574, %v1297
        %v1299 = vmul.f32 %v576, %v1297
        %v1300 = vmul.f32 %v747, %v1297
        %v1301 = vadd.f32 %v1293, %v1298
        %v1302 = vadd.f32 %v1294, %v1299
        %v1303 = vadd.f32 %v1295, %v1300
        %s1304 = sld [smem:[#allocation9 + $0x10e]]
        %v1305 = vstv %s1304
        %v1306 = vmul.f32 %v580, %v1305
        %v1307 = vmul.f32 %v582, %v1305
        %v1308 = vmul.f32 %v752, %v1305
        %v1309 = vadd.f32 %v1301, %v1306
        %v1310 = vadd.f32 %v1302, %v1307
        %v1311 = vadd.f32 %v1303, %v1308
        %s1312 = sld [smem:[#allocation9 + $0x18e]]
        %v1313 = vstv %s1312
        %v1314 = vmul.f32 %v586, %v1313
        %v1315 = vmul.f32 %v588, %v1313
        %v1316 = vmul.f32 %v757, %v1313
        %v1317 = vadd.f32 %v1309, %v1314
        %v1318 = vadd.f32 %v1310, %v1315
        %v1319 = vadd.f32 %v1311, %v1316
        %s1320 = sld [smem:[#allocation10 + $0xe]]
        %v1321 = vstv %s1320
        %v1322 = vadd.f32 %v1317, %v1321
        %v1323 = vadd.f32 %v1318, %v1321
        %v1324 = vadd.f32 %v1319, %v1321
        %s1325 = scalar_lea.vmem %s255, 336 [#allocation11]
        %1326 = vst [vmem:[%s1325] sm:$0xff] %v1322
        %1327 = vst [vmem:[%s1325 + $0x8] sm:$0xff] %v1323
        %1328 = vst [vmem:[%s1325 + $0x10] sm:$0xff] %v1324
        %s1329 = sld [smem:[#allocation9 + $0xf]]
        %v1330 = vstv %s1329
        %v1331 = vmul.f32 %v568, %v1330
        %v1332 = vmul.f32 %v570, %v1330
        %v1333 = vmul.f32 %v742, %v1330
        %s1334 = sld [smem:[#allocation9 + $0x8f]]
        %v1335 = vstv %s1334
        %v1336 = vmul.f32 %v574, %v1335
        %v1337 = vmul.f32 %v576, %v1335
        %v1338 = vmul.f32 %v747, %v1335
        %v1339 = vadd.f32 %v1331, %v1336
        %v1340 = vadd.f32 %v1332, %v1337
        %v1341 = vadd.f32 %v1333, %v1338
        %s1342 = sld [smem:[#allocation9 + $0x10f]]
        %v1343 = vstv %s1342
        %v1344 = vmul.f32 %v580, %v1343
        %v1345 = vmul.f32 %v582, %v1343
        %v1346 = vmul.f32 %v752, %v1343
        %v1347 = vadd.f32 %v1339, %v1344
        %v1348 = vadd.f32 %v1340, %v1345
        %v1349 = vadd.f32 %v1341, %v1346
        %s1350 = sld [smem:[#allocation9 + $0x18f]]
        %v1351 = vstv %s1350
        %v1352 = vmul.f32 %v586, %v1351
        %v1353 = vmul.f32 %v588, %v1351
        %v1354 = vmul.f32 %v757, %v1351
        %v1355 = vadd.f32 %v1347, %v1352
        %v1356 = vadd.f32 %v1348, %v1353
        %v1357 = vadd.f32 %v1349, %v1354
        %s1358 = sld [smem:[#allocation10 + $0xf]]
        %v1359 = vstv %s1358
        %v1360 = vadd.f32 %v1355, %v1359
        %v1361 = vadd.f32 %v1356, %v1359
        %v1362 = vadd.f32 %v1357, %v1359
        %s1363 = scalar_lea.vmem %s255, 360 [#allocation11]
        %1364 = vst [vmem:[%s1363] sm:$0xff] %v1360
        %1365 = vst [vmem:[%s1363 + $0x8] sm:$0xff] %v1361
        %1366 = vst [vmem:[%s1363 + $0x10] sm:$0xff] %v1362
        %s1367 = sld [smem:[#allocation9 + $0x10]]
        %v1368 = vstv %s1367
        %v1369 = vmul.f32 %v568, %v1368
        %v1370 = vmul.f32 %v570, %v1368
        %v1371 = vmul.f32 %v742, %v1368
        %s1372 = sld [smem:[#allocation9 + $0x90]]
        %v1373 = vstv %s1372
        %v1374 = vmul.f32 %v574, %v1373
        %v1375 = vmul.f32 %v576, %v1373
        %v1376 = vmul.f32 %v747, %v1373
        %v1377 = vadd.f32 %v1369, %v1374
        %v1378 = vadd.f32 %v1370, %v1375
        %v1379 = vadd.f32 %v1371, %v1376
        %s1380 = sld [smem:[#allocation9 + $0x110]]
        %v1381 = vstv %s1380
        %v1382 = vmul.f32 %v580, %v1381
        %v1383 = vmul.f32 %v582, %v1381
        %v1384 = vmul.f32 %v752, %v1381
        %v1385 = vadd.f32 %v1377, %v1382
        %v1386 = vadd.f32 %v1378, %v1383
        %v1387 = vadd.f32 %v1379, %v1384
        %s1388 = sld [smem:[#allocation9 + $0x190]]
        %v1389 = vstv %s1388
        %v1390 = vmul.f32 %v586, %v1389
        %v1391 = vmul.f32 %v588, %v1389
        %v1392 = vmul.f32 %v757, %v1389
        %v1393 = vadd.f32 %v1385, %v1390
        %v1394 = vadd.f32 %v1386, %v1391
        %v1395 = vadd.f32 %v1387, %v1392
        %s1396 = sld [smem:[#allocation10 + $0x10]]
        %v1397 = vstv %s1396
        %v1398 = vadd.f32 %v1393, %v1397
        %v1399 = vadd.f32 %v1394, %v1397
        %v1400 = vadd.f32 %v1395, %v1397
        %s1401 = scalar_lea.vmem %s255, 384 [#allocation11]
        %1402 = vst [vmem:[%s1401] sm:$0xff] %v1398
        %1403 = vst [vmem:[%s1401 + $0x8] sm:$0xff] %v1399
        %1404 = vst [vmem:[%s1401 + $0x10] sm:$0xff] %v1400
        %s1405 = sld [smem:[#allocation9 + $0x11]]
        %v1406 = vstv %s1405
        %v1407 = vmul.f32 %v568, %v1406
        %v1408 = vmul.f32 %v570, %v1406
        %v1409 = vmul.f32 %v742, %v1406
        %s1410 = sld [smem:[#allocation9 + $0x91]]
        %v1411 = vstv %s1410
        %v1412 = vmul.f32 %v574, %v1411
        %v1413 = vmul.f32 %v576, %v1411
        %v1414 = vmul.f32 %v747, %v1411
        %v1415 = vadd.f32 %v1407, %v1412
        %v1416 = vadd.f32 %v1408, %v1413
        %v1417 = vadd.f32 %v1409, %v1414
        %s1418 = sld [smem:[#allocation9 + $0x111]]
        %v1419 = vstv %s1418
        %v1420 = vmul.f32 %v580, %v1419
        %v1421 = vmul.f32 %v582, %v1419
        %v1422 = vmul.f32 %v752, %v1419
        %v1423 = vadd.f32 %v1415, %v1420
        %v1424 = vadd.f32 %v1416, %v1421
        %v1425 = vadd.f32 %v1417, %v1422
        %s1426 = sld [smem:[#allocation9 + $0x191]]
        %v1427 = vstv %s1426
        %v1428 = vmul.f32 %v586, %v1427
        %v1429 = vmul.f32 %v588, %v1427
        %v1430 = vmul.f32 %v757, %v1427
        %v1431 = vadd.f32 %v1423, %v1428
        %v1432 = vadd.f32 %v1424, %v1429
        %v1433 = vadd.f32 %v1425, %v1430
        %s1434 = sld [smem:[#allocation10 + $0x11]]
        %v1435 = vstv %s1434
        %v1436 = vadd.f32 %v1431, %v1435
        %v1437 = vadd.f32 %v1432, %v1435
        %v1438 = vadd.f32 %v1433, %v1435
        %s1439 = scalar_lea.vmem %s255, 408 [#allocation11]
        %1440 = vst [vmem:[%s1439] sm:$0xff] %v1436
        %1441 = vst [vmem:[%s1439 + $0x8] sm:$0xff] %v1437
        %1442 = vst [vmem:[%s1439 + $0x10] sm:$0xff] %v1438
        %s1443 = sld [smem:[#allocation9 + $0x12]]
        %v1444 = vstv %s1443
        %v1445 = vmul.f32 %v568, %v1444
        %v1446 = vmul.f32 %v570, %v1444
        %v1447 = vmul.f32 %v742, %v1444
        %s1448 = sld [smem:[#allocation9 + $0x92]]
        %v1449 = vstv %s1448
        %v1450 = vmul.f32 %v574, %v1449
        %v1451 = vmul.f32 %v576, %v1449
        %v1452 = vmul.f32 %v747, %v1449
        %v1453 = vadd.f32 %v1445, %v1450
        %v1454 = vadd.f32 %v1446, %v1451
        %v1455 = vadd.f32 %v1447, %v1452
        %s1456 = sld [smem:[#allocation9 + $0x112]]
        %v1457 = vstv %s1456
        %v1458 = vmul.f32 %v580, %v1457
        %v1459 = vmul.f32 %v582, %v1457
        %v1460 = vmul.f32 %v752, %v1457
        %v1461 = vadd.f32 %v1453, %v1458
        %v1462 = vadd.f32 %v1454, %v1459
        %v1463 = vadd.f32 %v1455, %v1460
        %s1464 = sld [smem:[#allocation9 + $0x192]]
        %v1465 = vstv %s1464
        %v1466 = vmul.f32 %v586, %v1465
        %v1467 = vmul.f32 %v588, %v1465
        %v1468 = vmul.f32 %v757, %v1465
        %v1469 = vadd.f32 %v1461, %v1466
        %v1470 = vadd.f32 %v1462, %v1467
        %v1471 = vadd.f32 %v1463, %v1468
        %s1472 = sld [smem:[#allocation10 + $0x12]]
        %v1473 = vstv %s1472
        %v1474 = vadd.f32 %v1469, %v1473
        %v1475 = vadd.f32 %v1470, %v1473
        %v1476 = vadd.f32 %v1471, %v1473
        %s1477 = scalar_lea.vmem %s255, 432 [#allocation11]
        %1478 = vst [vmem:[%s1477] sm:$0xff] %v1474
        %1479 = vst [vmem:[%s1477 + $0x8] sm:$0xff] %v1475
        %1480 = vst [vmem:[%s1477 + $0x10] sm:$0xff] %v1476
        %s1481 = sld [smem:[#allocation9 + $0x13]]
        %v1482 = vstv %s1481
        %v1483 = vmul.f32 %v568, %v1482
        %v1484 = vmul.f32 %v570, %v1482
        %v1485 = vmul.f32 %v742, %v1482
        %s1486 = sld [smem:[#allocation9 + $0x93]]
        %v1487 = vstv %s1486
        %v1488 = vmul.f32 %v574, %v1487
        %v1489 = vmul.f32 %v576, %v1487
        %v1490 = vmul.f32 %v747, %v1487
        %v1491 = vadd.f32 %v1483, %v1488
        %v1492 = vadd.f32 %v1484, %v1489
        %v1493 = vadd.f32 %v1485, %v1490
        %s1494 = sld [smem:[#allocation9 + $0x113]]
        %v1495 = vstv %s1494
        %v1496 = vmul.f32 %v580, %v1495
        %v1497 = vmul.f32 %v582, %v1495
        %v1498 = vmul.f32 %v752, %v1495
        %v1499 = vadd.f32 %v1491, %v1496
        %v1500 = vadd.f32 %v1492, %v1497
        %v1501 = vadd.f32 %v1493, %v1498
        %s1502 = sld [smem:[#allocation9 + $0x193]]
        %v1503 = vstv %s1502
        %v1504 = vmul.f32 %v586, %v1503
        %v1505 = vmul.f32 %v588, %v1503
        %v1506 = vmul.f32 %v757, %v1503
        %v1507 = vadd.f32 %v1499, %v1504
        %v1508 = vadd.f32 %v1500, %v1505
        %v1509 = vadd.f32 %v1501, %v1506
        %s1510 = sld [smem:[#allocation10 + $0x13]]
        %v1511 = vstv %s1510
        %v1512 = vadd.f32 %v1507, %v1511
        %v1513 = vadd.f32 %v1508, %v1511
        %v1514 = vadd.f32 %v1509, %v1511
        %s1515 = scalar_lea.vmem %s255, 456 [#allocation11]
        %1516 = vst [vmem:[%s1515] sm:$0xff] %v1512
        %1517 = vst [vmem:[%s1515 + $0x8] sm:$0xff] %v1513
        %1518 = vst [vmem:[%s1515 + $0x10] sm:$0xff] %v1514
        %s1519 = sld [smem:[#allocation9 + $0x14]]
        %v1520 = vstv %s1519
        %v1521 = vmul.f32 %v568, %v1520
        %v1522 = vmul.f32 %v570, %v1520
        %v1523 = vmul.f32 %v742, %v1520
        %s1524 = sld [smem:[#allocation9 + $0x94]]
        %v1525 = vstv %s1524
        %v1526 = vmul.f32 %v574, %v1525
        %v1527 = vmul.f32 %v576, %v1525
        %v1528 = vmul.f32 %v747, %v1525
        %v1529 = vadd.f32 %v1521, %v1526
        %v1530 = vadd.f32 %v1522, %v1527
        %v1531 = vadd.f32 %v1523, %v1528
        %s1532 = sld [smem:[#allocation9 + $0x114]]
        %v1533 = vstv %s1532
        %v1534 = vmul.f32 %v580, %v1533
        %v1535 = vmul.f32 %v582, %v1533
        %v1536 = vmul.f32 %v752, %v1533
        %v1537 = vadd.f32 %v1529, %v1534
        %v1538 = vadd.f32 %v1530, %v1535
        %v1539 = vadd.f32 %v1531, %v1536
        %s1540 = sld [smem:[#allocation9 + $0x194]]
        %v1541 = vstv %s1540
        %v1542 = vmul.f32 %v586, %v1541
        %v1543 = vmul.f32 %v588, %v1541
        %v1544 = vmul.f32 %v757, %v1541
        %v1545 = vadd.f32 %v1537, %v1542
        %v1546 = vadd.f32 %v1538, %v1543
        %v1547 = vadd.f32 %v1539, %v1544
        %s1548 = sld [smem:[#allocation10 + $0x14]]
        %v1549 = vstv %s1548
        %v1550 = vadd.f32 %v1545, %v1549
        %v1551 = vadd.f32 %v1546, %v1549
        %v1552 = vadd.f32 %v1547, %v1549
        %s1553 = scalar_lea.vmem %s255, 480 [#allocation11]
        %1554 = vst [vmem:[%s1553] sm:$0xff] %v1550
        %1555 = vst [vmem:[%s1553 + $0x8] sm:$0xff] %v1551
        %1556 = vst [vmem:[%s1553 + $0x10] sm:$0xff] %v1552
        %s1557 = sld [smem:[#allocation9 + $0x15]]
        %v1558 = vstv %s1557
        %v1559 = vmul.f32 %v568, %v1558
        %v1560 = vmul.f32 %v570, %v1558
        %v1561 = vmul.f32 %v742, %v1558
        %s1562 = sld [smem:[#allocation9 + $0x95]]
        %v1563 = vstv %s1562
        %v1564 = vmul.f32 %v574, %v1563
        %v1565 = vmul.f32 %v576, %v1563
        %v1566 = vmul.f32 %v747, %v1563
        %v1567 = vadd.f32 %v1559, %v1564
        %v1568 = vadd.f32 %v1560, %v1565
        %v1569 = vadd.f32 %v1561, %v1566
        %s1570 = sld [smem:[#allocation9 + $0x115]]
        %v1571 = vstv %s1570
        %v1572 = vmul.f32 %v580, %v1571
        %v1573 = vmul.f32 %v582, %v1571
        %v1574 = vmul.f32 %v752, %v1571
        %v1575 = vadd.f32 %v1567, %v1572
        %v1576 = vadd.f32 %v1568, %v1573
        %v1577 = vadd.f32 %v1569, %v1574
        %s1578 = sld [smem:[#allocation9 + $0x195]]
        %v1579 = vstv %s1578
        %v1580 = vmul.f32 %v586, %v1579
        %v1581 = vmul.f32 %v588, %v1579
        %v1582 = vmul.f32 %v757, %v1579
        %v1583 = vadd.f32 %v1575, %v1580
        %v1584 = vadd.f32 %v1576, %v1581
        %v1585 = vadd.f32 %v1577, %v1582
        %s1586 = sld [smem:[#allocation10 + $0x15]]
        %v1587 = vstv %s1586
        %v1588 = vadd.f32 %v1583, %v1587
        %v1589 = vadd.f32 %v1584, %v1587
        %v1590 = vadd.f32 %v1585, %v1587
        %s1591 = scalar_lea.vmem %s255, 504 [#allocation11]
        %1592 = vst [vmem:[%s1591] sm:$0xff] %v1588
        %1593 = vst [vmem:[%s1591 + $0x8] sm:$0xff] %v1589
        %1594 = vst [vmem:[%s1591 + $0x10] sm:$0xff] %v1590
        %s1595 = sld [smem:[#allocation9 + $0x16]]
        %v1596 = vstv %s1595
        %v1597 = vmul.f32 %v568, %v1596
        %v1598 = vmul.f32 %v570, %v1596
        %v1599 = vmul.f32 %v742, %v1596
        %s1600 = sld [smem:[#allocation9 + $0x96]]
        %v1601 = vstv %s1600
        %v1602 = vmul.f32 %v574, %v1601
        %v1603 = vmul.f32 %v576, %v1601
        %v1604 = vmul.f32 %v747, %v1601
        %v1605 = vadd.f32 %v1597, %v1602
        %v1606 = vadd.f32 %v1598, %v1603
        %v1607 = vadd.f32 %v1599, %v1604
        %s1608 = sld [smem:[#allocation9 + $0x116]]
        %v1609 = vstv %s1608
        %v1610 = vmul.f32 %v580, %v1609
        %v1611 = vmul.f32 %v582, %v1609
        %v1612 = vmul.f32 %v752, %v1609
        %v1613 = vadd.f32 %v1605, %v1610
        %v1614 = vadd.f32 %v1606, %v1611
        %v1615 = vadd.f32 %v1607, %v1612
        %s1616 = sld [smem:[#allocation9 + $0x196]]
        %v1617 = vstv %s1616
        %v1618 = vmul.f32 %v586, %v1617
        %v1619 = vmul.f32 %v588, %v1617
        %v1620 = vmul.f32 %v757, %v1617
        %v1621 = vadd.f32 %v1613, %v1618
        %v1622 = vadd.f32 %v1614, %v1619
        %v1623 = vadd.f32 %v1615, %v1620
        %s1624 = sld [smem:[#allocation10 + $0x16]]
        %v1625 = vstv %s1624
        %v1626 = vadd.f32 %v1621, %v1625
        %v1627 = vadd.f32 %v1622, %v1625
        %v1628 = vadd.f32 %v1623, %v1625
        %s1629 = scalar_lea.vmem %s255, 528 [#allocation11]
        %1630 = vst [vmem:[%s1629] sm:$0xff] %v1626
        %1631 = vst [vmem:[%s1629 + $0x8] sm:$0xff] %v1627
        %1632 = vst [vmem:[%s1629 + $0x10] sm:$0xff] %v1628
        %s1633 = sld [smem:[#allocation9 + $0x17]]
        %v1634 = vstv %s1633
        %v1635 = vmul.f32 %v568, %v1634
        %v1636 = vmul.f32 %v570, %v1634
        %v1637 = vmul.f32 %v742, %v1634
        %s1638 = sld [smem:[#allocation9 + $0x97]]
        %v1639 = vstv %s1638
        %v1640 = vmul.f32 %v574, %v1639
        %v1641 = vmul.f32 %v576, %v1639
        %v1642 = vmul.f32 %v747, %v1639
        %v1643 = vadd.f32 %v1635, %v1640
        %v1644 = vadd.f32 %v1636, %v1641
        %v1645 = vadd.f32 %v1637, %v1642
        %s1646 = sld [smem:[#allocation9 + $0x117]]
        %v1647 = vstv %s1646
        %v1648 = vmul.f32 %v580, %v1647
        %v1649 = vmul.f32 %v582, %v1647
        %v1650 = vmul.f32 %v752, %v1647
        %v1651 = vadd.f32 %v1643, %v1648
        %v1652 = vadd.f32 %v1644, %v1649
        %v1653 = vadd.f32 %v1645, %v1650
        %s1654 = sld [smem:[#allocation9 + $0x197]]
        %v1655 = vstv %s1654
        %v1656 = vmul.f32 %v586, %v1655
        %v1657 = vmul.f32 %v588, %v1655
        %v1658 = vmul.f32 %v757, %v1655
        %v1659 = vadd.f32 %v1651, %v1656
        %v1660 = vadd.f32 %v1652, %v1657
        %v1661 = vadd.f32 %v1653, %v1658
        %s1662 = sld [smem:[#allocation10 + $0x17]]
        %v1663 = vstv %s1662
        %v1664 = vadd.f32 %v1659, %v1663
        %v1665 = vadd.f32 %v1660, %v1663
        %v1666 = vadd.f32 %v1661, %v1663
        %s1667 = scalar_lea.vmem %s255, 552 [#allocation11]
        %1668 = vst [vmem:[%s1667] sm:$0xff] %v1664
        %1669 = vst [vmem:[%s1667 + $0x8] sm:$0xff] %v1665
        %1670 = vst [vmem:[%s1667 + $0x10] sm:$0xff] %v1666
        %s1671 = sld [smem:[#allocation9 + $0x18]]
        %v1672 = vstv %s1671
        %v1673 = vmul.f32 %v568, %v1672
        %v1674 = vmul.f32 %v570, %v1672
        %v1675 = vmul.f32 %v742, %v1672
        %s1676 = sld [smem:[#allocation9 + $0x98]]
        %v1677 = vstv %s1676
        %v1678 = vmul.f32 %v574, %v1677
        %v1679 = vmul.f32 %v576, %v1677
        %v1680 = vmul.f32 %v747, %v1677
        %v1681 = vadd.f32 %v1673, %v1678
        %v1682 = vadd.f32 %v1674, %v1679
        %v1683 = vadd.f32 %v1675, %v1680
        %s1684 = sld [smem:[#allocation9 + $0x118]]
        %v1685 = vstv %s1684
        %v1686 = vmul.f32 %v580, %v1685
        %v1687 = vmul.f32 %v582, %v1685
        %v1688 = vmul.f32 %v752, %v1685
        %v1689 = vadd.f32 %v1681, %v1686
        %v1690 = vadd.f32 %v1682, %v1687
        %v1691 = vadd.f32 %v1683, %v1688
        %s1692 = sld [smem:[#allocation9 + $0x198]]
        %v1693 = vstv %s1692
        %v1694 = vmul.f32 %v586, %v1693
        %v1695 = vmul.f32 %v588, %v1693
        %v1696 = vmul.f32 %v757, %v1693
        %v1697 = vadd.f32 %v1689, %v1694
        %v1698 = vadd.f32 %v1690, %v1695
        %v1699 = vadd.f32 %v1691, %v1696
        %s1700 = sld [smem:[#allocation10 + $0x18]]
        %v1701 = vstv %s1700
        %v1702 = vadd.f32 %v1697, %v1701
        %v1703 = vadd.f32 %v1698, %v1701
        %v1704 = vadd.f32 %v1699, %v1701
        %s1705 = scalar_lea.vmem %s255, 576 [#allocation11]
        %1706 = vst [vmem:[%s1705] sm:$0xff] %v1702
        %1707 = vst [vmem:[%s1705 + $0x8] sm:$0xff] %v1703
        %1708 = vst [vmem:[%s1705 + $0x10] sm:$0xff] %v1704
        %s1709 = sld [smem:[#allocation9 + $0x19]]
        %v1710 = vstv %s1709
        %v1711 = vmul.f32 %v568, %v1710
        %v1712 = vmul.f32 %v570, %v1710
        %v1713 = vmul.f32 %v742, %v1710
        %s1714 = sld [smem:[#allocation9 + $0x99]]
        %v1715 = vstv %s1714
        %v1716 = vmul.f32 %v574, %v1715
        %v1717 = vmul.f32 %v576, %v1715
        %v1718 = vmul.f32 %v747, %v1715
        %v1719 = vadd.f32 %v1711, %v1716
        %v1720 = vadd.f32 %v1712, %v1717
        %v1721 = vadd.f32 %v1713, %v1718
        %s1722 = sld [smem:[#allocation9 + $0x119]]
        %v1723 = vstv %s1722
        %v1724 = vmul.f32 %v580, %v1723
        %v1725 = vmul.f32 %v582, %v1723
        %v1726 = vmul.f32 %v752, %v1723
        %v1727 = vadd.f32 %v1719, %v1724
        %v1728 = vadd.f32 %v1720, %v1725
        %v1729 = vadd.f32 %v1721, %v1726
        %s1730 = sld [smem:[#allocation9 + $0x199]]
        %v1731 = vstv %s1730
        %v1732 = vmul.f32 %v586, %v1731
        %v1733 = vmul.f32 %v588, %v1731
        %v1734 = vmul.f32 %v757, %v1731
        %v1735 = vadd.f32 %v1727, %v1732
        %v1736 = vadd.f32 %v1728, %v1733
        %v1737 = vadd.f32 %v1729, %v1734
        %s1738 = sld [smem:[#allocation10 + $0x19]]
        %v1739 = vstv %s1738
        %v1740 = vadd.f32 %v1735, %v1739
        %v1741 = vadd.f32 %v1736, %v1739
        %v1742 = vadd.f32 %v1737, %v1739
        %s1743 = scalar_lea.vmem %s255, 600 [#allocation11]
        %1744 = vst [vmem:[%s1743] sm:$0xff] %v1740
        %1745 = vst [vmem:[%s1743 + $0x8] sm:$0xff] %v1741
        %1746 = vst [vmem:[%s1743 + $0x10] sm:$0xff] %v1742
        %s1747 = sld [smem:[#allocation9 + $0x1a]]
        %v1748 = vstv %s1747
        %v1749 = vmul.f32 %v568, %v1748
        %v1750 = vmul.f32 %v570, %v1748
        %v1751 = vmul.f32 %v742, %v1748
        %s1752 = sld [smem:[#allocation9 + $0x9a]]
        %v1753 = vstv %s1752
        %v1754 = vmul.f32 %v574, %v1753
        %v1755 = vmul.f32 %v576, %v1753
        %v1756 = vmul.f32 %v747, %v1753
        %v1757 = vadd.f32 %v1749, %v1754
        %v1758 = vadd.f32 %v1750, %v1755
        %v1759 = vadd.f32 %v1751, %v1756
        %s1760 = sld [smem:[#allocation9 + $0x11a]]
        %v1761 = vstv %s1760
        %v1762 = vmul.f32 %v580, %v1761
        %v1763 = vmul.f32 %v582, %v1761
        %v1764 = vmul.f32 %v752, %v1761
        %v1765 = vadd.f32 %v1757, %v1762
        %v1766 = vadd.f32 %v1758, %v1763
        %v1767 = vadd.f32 %v1759, %v1764
        %s1768 = sld [smem:[#allocation9 + $0x19a]]
        %v1769 = vstv %s1768
        %v1770 = vmul.f32 %v586, %v1769
        %v1771 = vmul.f32 %v588, %v1769
        %v1772 = vmul.f32 %v757, %v1769
        %v1773 = vadd.f32 %v1765, %v1770
        %v1774 = vadd.f32 %v1766, %v1771
        %v1775 = vadd.f32 %v1767, %v1772
        %s1776 = sld [smem:[#allocation10 + $0x1a]]
        %v1777 = vstv %s1776
        %v1778 = vadd.f32 %v1773, %v1777
        %v1779 = vadd.f32 %v1774, %v1777
        %v1780 = vadd.f32 %v1775, %v1777
        %s1781 = scalar_lea.vmem %s255, 624 [#allocation11]
        %1782 = vst [vmem:[%s1781] sm:$0xff] %v1778
        %1783 = vst [vmem:[%s1781 + $0x8] sm:$0xff] %v1779
        %1784 = vst [vmem:[%s1781 + $0x10] sm:$0xff] %v1780
        %s1785 = sld [smem:[#allocation9 + $0x1b]]
        %v1786 = vstv %s1785
        %v1787 = vmul.f32 %v568, %v1786
        %v1788 = vmul.f32 %v570, %v1786
        %v1789 = vmul.f32 %v742, %v1786
        %s1790 = sld [smem:[#allocation9 + $0x9b]]
        %v1791 = vstv %s1790
        %v1792 = vmul.f32 %v574, %v1791
        %v1793 = vmul.f32 %v576, %v1791
        %v1794 = vmul.f32 %v747, %v1791
        %v1795 = vadd.f32 %v1787, %v1792
        %v1796 = vadd.f32 %v1788, %v1793
        %v1797 = vadd.f32 %v1789, %v1794
        %s1798 = sld [smem:[#allocation9 + $0x11b]]
        %v1799 = vstv %s1798
        %v1800 = vmul.f32 %v580, %v1799
        %v1801 = vmul.f32 %v582, %v1799
        %v1802 = vmul.f32 %v752, %v1799
        %v1803 = vadd.f32 %v1795, %v1800
        %v1804 = vadd.f32 %v1796, %v1801
        %v1805 = vadd.f32 %v1797, %v1802
        %s1806 = sld [smem:[#allocation9 + $0x19b]]
        %v1807 = vstv %s1806
        %v1808 = vmul.f32 %v586, %v1807
        %v1809 = vmul.f32 %v588, %v1807
        %v1810 = vmul.f32 %v757, %v1807
        %v1811 = vadd.f32 %v1803, %v1808
        %v1812 = vadd.f32 %v1804, %v1809
        %v1813 = vadd.f32 %v1805, %v1810
        %s1814 = sld [smem:[#allocation10 + $0x1b]]
        %v1815 = vstv %s1814
        %v1816 = vadd.f32 %v1811, %v1815
        %v1817 = vadd.f32 %v1812, %v1815
        %v1818 = vadd.f32 %v1813, %v1815
        %s1819 = scalar_lea.vmem %s255, 648 [#allocation11]
        %1820 = vst [vmem:[%s1819] sm:$0xff] %v1816
        %1821 = vst [vmem:[%s1819 + $0x8] sm:$0xff] %v1817
        %1822 = vst [vmem:[%s1819 + $0x10] sm:$0xff] %v1818
        %s1823 = sld [smem:[#allocation9 + $0x1c]]
        %v1824 = vstv %s1823
        %v1825 = vmul.f32 %v568, %v1824
        %v1826 = vmul.f32 %v570, %v1824
        %v1827 = vmul.f32 %v742, %v1824
        %s1828 = sld [smem:[#allocation9 + $0x9c]]
        %v1829 = vstv %s1828
        %v1830 = vmul.f32 %v574, %v1829
        %v1831 = vmul.f32 %v576, %v1829
        %v1832 = vmul.f32 %v747, %v1829
        %v1833 = vadd.f32 %v1825, %v1830
        %v1834 = vadd.f32 %v1826, %v1831
        %v1835 = vadd.f32 %v1827, %v1832
        %s1836 = sld [smem:[#allocation9 + $0x11c]]
        %v1837 = vstv %s1836
        %v1838 = vmul.f32 %v580, %v1837
        %v1839 = vmul.f32 %v582, %v1837
        %v1840 = vmul.f32 %v752, %v1837
        %v1841 = vadd.f32 %v1833, %v1838
        %v1842 = vadd.f32 %v1834, %v1839
        %v1843 = vadd.f32 %v1835, %v1840
        %s1844 = sld [smem:[#allocation9 + $0x19c]]
        %v1845 = vstv %s1844
        %v1846 = vmul.f32 %v586, %v1845
        %v1847 = vmul.f32 %v588, %v1845
        %v1848 = vmul.f32 %v757, %v1845
        %v1849 = vadd.f32 %v1841, %v1846
        %v1850 = vadd.f32 %v1842, %v1847
        %v1851 = vadd.f32 %v1843, %v1848
        %s1852 = sld [smem:[#allocation10 + $0x1c]]
        %v1853 = vstv %s1852
        %v1854 = vadd.f32 %v1849, %v1853
        %v1855 = vadd.f32 %v1850, %v1853
        %v1856 = vadd.f32 %v1851, %v1853
        %s1857 = scalar_lea.vmem %s255, 672 [#allocation11]
        %1858 = vst [vmem:[%s1857] sm:$0xff] %v1854
        %1859 = vst [vmem:[%s1857 + $0x8] sm:$0xff] %v1855
        %1860 = vst [vmem:[%s1857 + $0x10] sm:$0xff] %v1856
        %s1861 = sld [smem:[#allocation9 + $0x1d]]
        %v1862 = vstv %s1861
        %v1863 = vmul.f32 %v568, %v1862
        %v1864 = vmul.f32 %v570, %v1862
        %v1865 = vmul.f32 %v742, %v1862
        %s1866 = sld [smem:[#allocation9 + $0x9d]]
        %v1867 = vstv %s1866
        %v1868 = vmul.f32 %v574, %v1867
        %v1869 = vmul.f32 %v576, %v1867
        %v1870 = vmul.f32 %v747, %v1867
        %v1871 = vadd.f32 %v1863, %v1868
        %v1872 = vadd.f32 %v1864, %v1869
        %v1873 = vadd.f32 %v1865, %v1870
        %s1874 = sld [smem:[#allocation9 + $0x11d]]
        %v1875 = vstv %s1874
        %v1876 = vmul.f32 %v580, %v1875
        %v1877 = vmul.f32 %v582, %v1875
        %v1878 = vmul.f32 %v752, %v1875
        %v1879 = vadd.f32 %v1871, %v1876
        %v1880 = vadd.f32 %v1872, %v1877
        %v1881 = vadd.f32 %v1873, %v1878
        %s1882 = sld [smem:[#allocation9 + $0x19d]]
        %v1883 = vstv %s1882
        %v1884 = vmul.f32 %v586, %v1883
        %v1885 = vmul.f32 %v588, %v1883
        %v1886 = vmul.f32 %v757, %v1883
        %v1887 = vadd.f32 %v1879, %v1884
        %v1888 = vadd.f32 %v1880, %v1885
        %v1889 = vadd.f32 %v1881, %v1886
        %s1890 = sld [smem:[#allocation10 + $0x1d]]
        %v1891 = vstv %s1890
        %v1892 = vadd.f32 %v1887, %v1891
        %v1893 = vadd.f32 %v1888, %v1891
        %v1894 = vadd.f32 %v1889, %v1891
        %s1895 = scalar_lea.vmem %s255, 696 [#allocation11]
        %1896 = vst [vmem:[%s1895] sm:$0xff] %v1892
        %1897 = vst [vmem:[%s1895 + $0x8] sm:$0xff] %v1893
        %1898 = vst [vmem:[%s1895 + $0x10] sm:$0xff] %v1894
        %s1899 = sld [smem:[#allocation9 + $0x1e]]
        %v1900 = vstv %s1899
        %v1901 = vmul.f32 %v568, %v1900
        %v1902 = vmul.f32 %v570, %v1900
        %v1903 = vmul.f32 %v742, %v1900
        %s1904 = sld [smem:[#allocation9 + $0x9e]]
        %v1905 = vstv %s1904
        %v1906 = vmul.f32 %v574, %v1905
        %v1907 = vmul.f32 %v576, %v1905
        %v1908 = vmul.f32 %v747, %v1905
        %v1909 = vadd.f32 %v1901, %v1906
        %v1910 = vadd.f32 %v1902, %v1907
        %v1911 = vadd.f32 %v1903, %v1908
        %s1912 = sld [smem:[#allocation9 + $0x11e]]
        %v1913 = vstv %s1912
        %v1914 = vmul.f32 %v580, %v1913
        %v1915 = vmul.f32 %v582, %v1913
        %v1916 = vmul.f32 %v752, %v1913
        %v1917 = vadd.f32 %v1909, %v1914
        %v1918 = vadd.f32 %v1910, %v1915
        %v1919 = vadd.f32 %v1911, %v1916
        %s1920 = sld [smem:[#allocation9 + $0x19e]]
        %v1921 = vstv %s1920
        %v1922 = vmul.f32 %v586, %v1921
        %v1923 = vmul.f32 %v588, %v1921
        %v1924 = vmul.f32 %v757, %v1921
        %v1925 = vadd.f32 %v1917, %v1922
        %v1926 = vadd.f32 %v1918, %v1923
        %v1927 = vadd.f32 %v1919, %v1924
        %s1928 = sld [smem:[#allocation10 + $0x1e]]
        %v1929 = vstv %s1928
        %v1930 = vadd.f32 %v1925, %v1929
        %v1931 = vadd.f32 %v1926, %v1929
        %v1932 = vadd.f32 %v1927, %v1929
        %s1933 = scalar_lea.vmem %s255, 720 [#allocation11]
        %1934 = vst [vmem:[%s1933] sm:$0xff] %v1930
        %1935 = vst [vmem:[%s1933 + $0x8] sm:$0xff] %v1931
        %1936 = vst [vmem:[%s1933 + $0x10] sm:$0xff] %v1932
        %s1937 = sld [smem:[#allocation9 + $0x1f]]
        %v1938 = vstv %s1937
        %v1939 = vmul.f32 %v568, %v1938
        %v1940 = vmul.f32 %v570, %v1938
        %v1941 = vmul.f32 %v742, %v1938
        %s1942 = sld [smem:[#allocation9 + $0x9f]]
        %v1943 = vstv %s1942
        %v1944 = vmul.f32 %v574, %v1943
        %v1945 = vmul.f32 %v576, %v1943
        %v1946 = vmul.f32 %v747, %v1943
        %v1947 = vadd.f32 %v1939, %v1944
        %v1948 = vadd.f32 %v1940, %v1945
        %v1949 = vadd.f32 %v1941, %v1946
        %s1950 = sld [smem:[#allocation9 + $0x11f]]
        %v1951 = vstv %s1950
        %v1952 = vmul.f32 %v580, %v1951
        %v1953 = vmul.f32 %v582, %v1951
        %v1954 = vmul.f32 %v752, %v1951
        %v1955 = vadd.f32 %v1947, %v1952
        %v1956 = vadd.f32 %v1948, %v1953
        %v1957 = vadd.f32 %v1949, %v1954
        %s1958 = sld [smem:[#allocation9 + $0x19f]]
        %v1959 = vstv %s1958
        %v1960 = vmul.f32 %v586, %v1959
        %v1961 = vmul.f32 %v588, %v1959
        %v1962 = vmul.f32 %v757, %v1959
        %v1963 = vadd.f32 %v1955, %v1960
        %v1964 = vadd.f32 %v1956, %v1961
        %v1965 = vadd.f32 %v1957, %v1962
        %s1966 = sld [smem:[#allocation10 + $0x1f]]
        %v1967 = vstv %s1966
        %v1968 = vadd.f32 %v1963, %v1967
        %v1969 = vadd.f32 %v1964, %v1967
        %v1970 = vadd.f32 %v1965, %v1967
        %s1971 = scalar_lea.vmem %s255, 744 [#allocation11]
        %1972 = vst [vmem:[%s1971] sm:$0xff] %v1968
        %1973 = vst [vmem:[%s1971 + $0x8] sm:$0xff] %v1969
        %1974 = vst [vmem:[%s1971 + $0x10] sm:$0xff] %v1970
        %s1975 = sand.u32 %s121, 1
        %s1976 = scalar_lea.sflag [#allocation4], %s1975
        %s1977 = sand.u32 %s121, 1
        %s1978 = smul.addr %s1977, 768
        %s1979 = scalar_lea.vmem [#allocation11], %s1978
        // Predicated region
        $region53: #{tpu_custom_call.1} parent=35 // pred_check
          %p1980 = pneg %p131
        $region54: #{tpu_custom_call.1} parent=35 // pred_check_branch
          %1982 = sbr.rel (%p1980) target = $region56
        $region55: #{tpu_custom_call.1} parent=35 // pred_region
          %s1984 = ssub.s32 12288, 12288
          %1985 = vsyncadd %s1976, %s1984
          %s1986 = smul.addr %s24, 3
          %s1987 = smul.addr %s1986, 128
          %s1988 = scalar_lea.hbm %s4, %s1987
          %s1989 = sshll.u32 %s1979, 4
          %s1990 = int_to_ptr.vmem [resolvable:$true] %s1989
          %1995 = dma.vmem_to_hbm [thread:$0]  %s1990, 12288, %s1988, %s1976, 384, 768, 24
        $region56: #{tpu_custom_call.1} parent=35 // pred_fallthru
          _
      $region36: #{tpu_custom_call.1} parent=5 // pred_fallthru
        _
      %p1996 = scmp.le.s32.totalorder 2, %s19
      // Predicated region
      $region57: #{tpu_custom_call.1} parent=5 // pred_check
        %p1997 = pneg %p1996
      $region58: #{tpu_custom_call.1} parent=5 // pred_check_branch
        %1999 = sbr.rel (%p1997) target = $region60
      $region59: #{tpu_custom_call.1} parent=5 // pred_region
        %s2000 = ssub.s32 %s19, 2
        // Predicated region
        $region61: #{tpu_custom_call.1} parent=59 // pred_check
          %p2001 = pneg %p137
        $region62: #{tpu_custom_call.1} parent=59 // pred_check_branch
          %2003 = sbr.rel (%p2001) target = $region64
        $region63: #{tpu_custom_call.1} parent=59 // pred_region
          %s2004 = sand.u32 %s122, 1
          %s2005 = scalar_lea.sflag [#allocation4], %s2004
          %s2006 = sand.u32 %s122, 1
          %s2007 = smul.addr %s2006, 768
          %s2008 = scalar_lea.vmem [#allocation11], %s2007
          %2009 = dma.done %s2005, 12288
        $region64: #{tpu_custom_call.1} parent=59 // pred_fallthru
          _
      $region60: #{tpu_custom_call.1} parent=5 // pred_fallthru
        _
    $region6: #{tpu_custom_call.1} parent=1 // loop_footer
      %s23 = sadd.s32 1, %s19
    $region7: #{tpu_custom_call.1} parent=1 // loop_footer_branch
      %18 = sbr.rel target = $region3
    $region8: #{tpu_custom_call.1} parent=1 // loop_exit
      _
    %2010 = vsyncpa [#allocation3], 1
    %s2011 = scalar_lea.sflag [#allocation3], 1
    %2012 = vsyncpa %s2011, 1
    %2013 = vsyncpa [#allocation8], 1
    %2014 = vsyncpa [#allocation4], 1
    %s2015 = scalar_lea.sflag [#allocation4], 1
    %2016 = vsyncpa %s2015, 1
    %2017 = vsyncpa [#allocation5], 1
    %s2018 = scalar_lea.sflag [#allocation5], 1
    %2019 = vsyncpa %s2018, 1
    %2020 = vsyncpa [#allocation6], 1
    %s2021 = scalar_lea.sflag [#allocation6], 1
    %2022 = vsyncpa %s2021, 1

</llo_original>
